<compile_context>
chip_gen: v7x
topology: tpu7x:2x2x1
jax: 0.10.0
libtpu: 0.0.40
codegen_flags: <defaults>
</compile_context>

<pallas_src>
from functools import partial

import jax
import jax.numpy as jnp
from jax.experimental import pallas as pl
from jax.experimental.pallas import tpu as pltpu

T = 3        # number of GNN iterations
R = 0.05     # squared-distance threshold
NF = 128     # MLP_f output width

# Masked-max neighbour chunk: bounds the (B, M, J_CHUNK, 128) f32 intermediate
# (the VMEM governor of the kernel).  64 keeps it <= BM * 32 KiB, sized for
# v7x's 64 MiB physical VMEM; can be raised to 128 on v5e/v6e for large M.
J_CHUNK = 64

# Scoped-VMEM request: 48 MiB leaves double-buffer headroom under v7x's 64 MiB
# physical VMEM while being far above v5e's 16 MiB / v6e's 32 MiB defaults.
VMEM_LIMIT_BYTES = 48 * 1024 * 1024

# Row target for the per-point matmuls (BM = block_batch * M rows). ~256 fills
# the 256-wide MXU row dim on v6e/v7x without blowing VMEM on v7x.
TARGET_ROWS = 256

# Flip to jnp.bfloat16 for the bf16-native MXU path on v6e/v7x (accumulation
# stays f32 via preferred_element_type; VPU work stays f32 either way, which
# matters on v5e).  Default f32 keeps the kernel bit-faithful to the f32
# PyTorch reference used for validation below.
MATMUL_DTYPE = jnp.float32

# Widths of the packed biases, in order: bf1, bf2, bf3, bg1, bg2, bg3.
BIAS_WIDTHS = (64, 128, 128, 64, 32, 3)


# ----------------------------------------------------------------------------
# Pallas kernel: one grid step processes B batch elements, running all T
# iterations (per-point MLPs + masked max aggregation) entirely in VMEM.
# ----------------------------------------------------------------------------
def pointgnn_kernel(B, M,
                    x_ref, wf1_ref, wf2_ref, wf3_ref,
                    wg1_ref, wg2_ref, wg3_ref, bias_ref,
                    out_ref):
    f32 = jnp.float32
    BM = B * M

    def relu(v):
        return jnp.maximum(v, 0.0)

    def mm(a, w):
        return jnp.dot(a.astype(MATMUL_DTYPE), w.astype(MATMUL_DTYPE),
                       preferred_element_type=f32)

    x = x_ref[...]                                   # (B, M, 3)
    state = x.reshape(BM, 3)                         # one layout for the T-loop

    # ---- adjacency: exact ||x_j - x_i||^2, hoisted out of the T-loop -------
    # Pure VPU work (no under-filled K=3 MXU pushes) and bit-identical to the
    # reference difference form (no Gram-matrix cancellation near the cutoff).
    diff = x[:, None, :, :] - x[:, :, None, :]       # (B, M, M, 3)
    dist = jnp.sum(diff * diff, axis=-1)             # (B, M, M)
    adj = dist < R                                   # bool, reused by all iters
    adj_e = adj[:, :, :, None]                       # hoisted trailing expand

    biases = bias_ref[...]                           # (T, 6, 128), one tile

    for t in range(T):
        # The original MLP_h (delta / xi_delta) branch provably never affects
        # the output (the `xi` half of every edge feature is identically 0),
        # so it is omitted and its parameters are never DMA'd.

        # -- MLP_f collapsed to per-point.  The K=3 first layer runs on the
        #    VPU as 3 broadcast-FMAs (an MXU push would use 3/128 of the
        #    contraction width); wf1 was pre-sliced to its live rows 3:6. -----
        w1 = wf1_ref[t]                                           # (3, 64)
        f = relu(state[:, 0:1] * w1[0:1, :]
                 + state[:, 1:2] * w1[1:2, :]
                 + state[:, 2:3] * w1[2:3, :]
                 + biases[t, 0:1, :BIAS_WIDTHS[0]])               # (BM, 64)
        f = relu(mm(f, wf2_ref[t]) + biases[t, 1:2, :BIAS_WIDTHS[1]])   # (BM,128)
        f = relu(mm(f, wf3_ref[t]) + biases[t, 2:3, :BIAS_WIDTHS[2]])   # (BM,128)
        f3 = f.reshape(B, M, NF)

        # -- masked max over neighbours j (chunked to bound VMEM):
        #    agg[b, i] = max_j (adj[b, i, j] ? f3[b, j] : 0)
        #    f3 >= 0 (trailing ReLU), so this is bit-identical to the original
        #    masked-assign + max.  Bool select instead of convert + multiply. --
        agg = jnp.zeros((B, M, NF), f32)
        for j0 in range(0, M, J_CHUNK):
            j1 = min(j0 + J_CHUNK, M)
            cand = jnp.where(adj_e[:, :, j0:j1, :],
                             f3[:, None, j0:j1, :], 0.0)          # (B,M,Jc,128)
            agg = jnp.maximum(agg, jnp.max(cand, axis=2))
        agg = agg.reshape(BM, NF)

        # -- MLP_g : 128 -> 64 -> 32 -> 3 (all ReLU) + residual ---------------
        g = relu(mm(agg, wg1_ref[t]) + biases[t, 3:4, :BIAS_WIDTHS[3]])  # (BM,64)
        g = relu(mm(g, wg2_ref[t]) + biases[t, 4:5, :BIAS_WIDTHS[4]])    # (BM,32)
        g = relu(mm(g, wg3_ref[t]) + biases[t, 5:6, :BIAS_WIDTHS[5]])    # (BM,3)
        state = g + state

    out_ref[...] = state.reshape(B, M, 3)


# ----------------------------------------------------------------------------
# Wrapper
# ----------------------------------------------------------------------------
def _default_block_batch(N, M):
    # Target ~TARGET_ROWS per-point rows per block (MXU fill on v6e/v7x) while
    # keeping at least 2 grid steps so the "parallel" grid axis can shard
    # across v7x's two TensorCores.
    cap = max(1, TARGET_ROWS // max(M, 1))
    if N >= 2:
        cap = min(cap, N // 2)
    cap = max(1, min(cap, N))
    for b in range(cap, 0, -1):
        if N % b == 0:
            return b
    return 1


def pointgnn_forward(x, params, block_batch=None):
    (wh1, bh1, wh2, bh2, wh3, bh3,
     wf1, bf1, wf2, bf2, wf3, bf3,
     wg1, bg1, wg2, bg2, wg3, bg3) = params
    N, M, C = x.shape
    assert C == 3

    if block_batch is None:
        block_batch = _default_block_batch(N, M)
    B = block_batch
    assert N % B == 0

    # MLP_h never affects the output -> its params are not sent to the kernel.
    # Only input rows 3:6 of wf1 can contribute (first 3 edge channels are 0);
    # slice host-side so the kernel receives a (T, 3, 64) operand.
    wf1s = wf1[:, 3:6, :]

    # Pack the six tiny (T, 1, dout) biases into one lane-padded (T, 6, 128)
    # operand: one DMA + one resident VMEM tile instead of six padded,
    # double-buffered ones (VMEM-headroom win, matters most under v7x's budget).
    bias_pack = jnp.concatenate(
        [jnp.pad(b, ((0, 0), (0, 0), (0, 128 - b.shape[-1])))
         for b in (bf1, bf2, bf3, bg1, bg2, bg3)], axis=1)

    weights = [wf1s, wf2, wf3, wg1, wg2, wg3, bias_pack]

    in_specs = [pl.BlockSpec((B, M, 3), lambda n: (n, 0, 0))]
    for p in weights:
        # Full-array blocks with a constant index_map stay VMEM-resident
        # across grid steps (no per-step re-DMA).
        in_specs.append(pl.BlockSpec(p.shape, lambda n, nd=p.ndim: (0,) * nd))
    out_spec = pl.BlockSpec((B, M, 3), lambda n: (n, 0, 0))

    return pl.pallas_call(
        partial(pointgnn_kernel, B, M),
        out_shape=jax.ShapeDtypeStruct((N, M, 3), jnp.float32),
        grid_spec=pltpu.PrefetchScalarGridSpec(
            num_scalar_prefetch=0,
            grid=(N // B,),
            in_specs=in_specs,
            out_specs=out_spec,
        ),
        compiler_params=pltpu.CompilerParams(
            dimension_semantics=("parallel",),      # batch blocks independent
            vmem_limit_bytes=VMEM_LIMIT_BYTES),
    )(x, *weights)


# ----------------------------------------------------------------------------
# Deterministic parameter construction (shapes from the module's __init__).
# ----------------------------------------------------------------------------
def make_params(key):
    dims_h = [(3, 64), (64, 128), (128, 3)]
    dims_f = [(6, 64), (64, 128), (128, 128)]
    dims_g = [(128, 64), (64, 32), (32, 3)]
    params = []
    k = key
    for dims in (dims_h, dims_f, dims_g):
        for din, dout in dims:
            k, kw, kb = jax.random.split(k, 3)
            w = jax.random.normal(kw, (T, din, dout), jnp.float32) / jnp.sqrt(
                jnp.float32(din))
            b = jax.random.normal(kb, (T, 1, dout), jnp.float32) * 0.1
            params += [w, b]
    return params


# ----------------------------------------------------------------------------
# Pure-JAX reference mirroring the PyTorch code literally (sanity check).
# ----------------------------------------------------------------------------
def reference(x, params):
    (wh1, bh1, wh2, bh2, wh3, bh3,
     wf1, bf1, wf2, bf2, wf3, bf3,
     wg1, bg1, wg2, bg2, wg3, bg3) = params
    N, M, _ = x.shape
    relu = lambda v: jnp.maximum(v, 0.0)

    diff = x[:, None, :, :] - x[:, :, None, :]
    dist = jnp.sum(diff * diff, axis=-1)          # (N, M, M)
    adj = dist < R

    state = x
    for t in range(T):
        h = relu(state @ wh1[t] + bh1[t])
        h = relu(h @ wh2[t] + bh2[t])
        delta = h @ wh3[t] + bh3[t]
        xd = x - delta

        xj = jnp.broadcast_to(xd[:, :, None, :], (N, M, M, 3))
        xi = jnp.broadcast_to(xd[:, :, None, :], (N, M, M, 3))
        xi = jnp.where(adj[..., None], xj - xi, 0.0)     # -> all zeros
        st = jnp.broadcast_to(state[:, None, :, :], (N, M, M, 3))
        st = jnp.where(adj[..., None], st, 0.0)
        eij = jnp.concatenate([xi, st], axis=-1)         # (N, M, M, 6)

        f = relu(eij @ wf1[t] + bf1[t])
        f = relu(f @ wf2[t] + bf2[t])
        f = relu(f @ wf3[t] + bf3[t])
        f = jnp.where(adj[..., None], f, 0.0)
        agg = jnp.max(f, axis=2)                         # max over dim=-2

        g = relu(agg @ wg1[t] + bg1[t])
        g = relu(g @ wg2[t] + bg2[t])
        g = relu(g @ wg3[t] + bg3[t])
        state = g + state
    return state


if __name__ == "__main__":
    key = jax.random.PRNGKey(0)
    kx, kp = jax.random.split(key)

    N, M = 2, 16
    x = jax.random.normal(kx, (N, M, 3), jnp.float32) * 0.1
    params = make_params(kp)

    out = pointgnn_forward(x, params)
    out = jax.block_until_ready(out)

    ref = reference(x, params)
    assert out.shape == (N, M, 3)
    assert jnp.allclose(out, ref, atol=1e-3, rtol=1e-3), float(
        jnp.max(jnp.abs(out - ref)))

    print("KERNEL_OK")
</pallas_src>

<mosaic_0001>
module attributes {stable_mosaic.version = 11 : i64} {
  func.func @pointgnn_kernel(%arg0: i32, %arg1: memref<1x16x3xf32, #tpu.memory_space<vmem>>, %arg2: memref<3x3x64xf32, #tpu.memory_space<vmem>>, %arg3: memref<3x64x128xf32, #tpu.memory_space<vmem>>, %arg4: memref<3x128x128xf32, #tpu.memory_space<vmem>>, %arg5: memref<3x128x64xf32, #tpu.memory_space<vmem>>, %arg6: memref<3x64x32xf32, #tpu.memory_space<vmem>>, %arg7: memref<3x32x3xf32, #tpu.memory_space<vmem>>, %arg8: memref<3x6x128xf32, #tpu.memory_space<vmem>>, %arg9: memref<1x16x3xf32, #tpu.memory_space<vmem>>) attributes {dimension_semantics = [#tpu.dimension_semantics<parallel>], iteration_bounds = array<i64: 2>, scalar_prefetch = 0 : i64, scratch_operands = 0 : i64, tpu.core_type = #tpu.core_type<tc>, window_params = [{transform_indices = @transform_0, window_bounds = array<i64: 1, 16, 3>}, {pipeline_mode = #tpu.pipeline_mode<synchronous>, transform_indices = @transform_1, window_bounds = array<i64: 3, 3, 64>}, {pipeline_mode = #tpu.pipeline_mode<synchronous>, transform_indices = @transform_2, window_bounds = array<i64: 3, 64, 128>}, {pipeline_mode = #tpu.pipeline_mode<synchronous>, transform_indices = @transform_3, window_bounds = array<i64: 3, 128, 128>}, {pipeline_mode = #tpu.pipeline_mode<synchronous>, transform_indices = @transform_4, window_bounds = array<i64: 3, 128, 64>}, {pipeline_mode = #tpu.pipeline_mode<synchronous>, transform_indices = @transform_5, window_bounds = array<i64: 3, 64, 32>}, {pipeline_mode = #tpu.pipeline_mode<synchronous>, transform_indices = @transform_6, window_bounds = array<i64: 3, 32, 3>}, {pipeline_mode = #tpu.pipeline_mode<synchronous>, transform_indices = @transform_7, window_bounds = array<i64: 3, 6, 128>}, {transform_indices = @transform_8, window_bounds = array<i64: 1, 16, 3>}]} {
    %c0 = arith.constant 0 : index
    %c0_0 = arith.constant 0 : index
    %c0_1 = arith.constant 0 : index
    %0 = vector.load %arg1[%c0, %c0_0, %c0_1] : memref<1x16x3xf32, #tpu.memory_space<vmem>>, vector<1x16x3xf32>
    %1 = vector.shape_cast %0 : vector<1x16x3xf32> to vector<16x3xf32>
    %2 = vector.shape_cast %0 : vector<1x16x3xf32> to vector<1x1x16x3xf32>
    %3 = vector.shape_cast %0 : vector<1x16x3xf32> to vector<1x16x1x3xf32>
    %4 = vector.broadcast %2 : vector<1x1x16x3xf32> to vector<1x16x16x3xf32>
    %5 = vector.broadcast %3 : vector<1x16x1x3xf32> to vector<1x16x16x3xf32>
    %6 = arith.subf %4, %5 : vector<1x16x16x3xf32>
    %7 = arith.mulf %6, %6 : vector<1x16x16x3xf32>
    %cst = arith.constant dense<0.000000e+00> : vector<1x16x16xf32>
    %8 = vector.multi_reduction <add>, %7, %cst [3] : vector<1x16x16x3xf32> to vector<1x16x16xf32>
    %cst_2 = arith.constant 5.000000e-02 : f32
    %9 = vector.broadcast %cst_2 : f32 to vector<1x16x16xf32>
    %10 = arith.cmpf olt, %8, %9 : vector<1x16x16xf32>
    %11 = vector.shape_cast %10 : vector<1x16x16xi1> to vector<1x16x16x1xi1>
    %c0_3 = arith.constant 0 : index
    %c0_4 = arith.constant 0 : index
    %c0_5 = arith.constant 0 : index
    %12 = vector.load %arg8[%c0_3, %c0_4, %c0_5] : memref<3x6x128xf32, #tpu.memory_space<vmem>>, vector<3x6x128xf32>
    %c0_6 = arith.constant 0 : index
    %c0_7 = arith.constant 0 : index
    %c0_8 = arith.constant 0 : index
    %13 = vector.load %arg2[%c0_6, %c0_7, %c0_8] : memref<3x3x64xf32, #tpu.memory_space<vmem>>, vector<1x3x64xf32>
    %14 = vector.shape_cast %13 : vector<1x3x64xf32> to vector<3x64xf32>
    %15 = vector.extract_strided_slice %1 {offsets = [0, 0], sizes = [16, 1], strides = [1, 1]} : vector<16x3xf32> to vector<16x1xf32>
    %16 = vector.extract_strided_slice %14 {offsets = [0, 0], sizes = [1, 64], strides = [1, 1]} : vector<3x64xf32> to vector<1x64xf32>
    %17 = vector.broadcast %15 : vector<16x1xf32> to vector<16x64xf32>
    %18 = vector.broadcast %16 : vector<1x64xf32> to vector<16x64xf32>
    %19 = arith.mulf %17, %18 : vector<16x64xf32>
    %20 = vector.extract_strided_slice %1 {offsets = [0, 1], sizes = [16, 1], strides = [1, 1]} : vector<16x3xf32> to vector<16x1xf32>
    %21 = vector.extract_strided_slice %14 {offsets = [1, 0], sizes = [1, 64], strides = [1, 1]} : vector<3x64xf32> to vector<1x64xf32>
    %22 = vector.broadcast %20 : vector<16x1xf32> to vector<16x64xf32>
    %23 = vector.broadcast %21 : vector<1x64xf32> to vector<16x64xf32>
    %24 = arith.mulf %22, %23 : vector<16x64xf32>
    %25 = arith.addf %19, %24 : vector<16x64xf32>
    %26 = vector.extract_strided_slice %1 {offsets = [0, 2], sizes = [16, 1], strides = [1, 1]} : vector<16x3xf32> to vector<16x1xf32>
    %27 = vector.extract_strided_slice %14 {offsets = [2, 0], sizes = [1, 64], strides = [1, 1]} : vector<3x64xf32> to vector<1x64xf32>
    %28 = vector.broadcast %26 : vector<16x1xf32> to vector<16x64xf32>
    %29 = vector.broadcast %27 : vector<1x64xf32> to vector<16x64xf32>
    %30 = arith.mulf %28, %29 : vector<16x64xf32>
    %31 = arith.addf %25, %30 : vector<16x64xf32>
    %32 = vector.extract_strided_slice %12 {offsets = [0, 0, 0], sizes = [1, 1, 64], strides = [1, 1, 1]} : vector<3x6x128xf32> to vector<1x1x64xf32>
    %33 = vector.shape_cast %32 : vector<1x1x64xf32> to vector<1x64xf32>
    %34 = vector.broadcast %33 : vector<1x64xf32> to vector<16x64xf32>
    %35 = arith.addf %31, %34 : vector<16x64xf32>
    %cst_9 = arith.constant 0.000000e+00 : f32
    %36 = vector.broadcast %cst_9 : f32 to vector<16x64xf32>
    %37 = arith.maximumf %35, %36 : vector<16x64xf32>
    %c0_10 = arith.constant 0 : index
    %c0_11 = arith.constant 0 : index
    %c0_12 = arith.constant 0 : index
    %38 = vector.load %arg3[%c0_10, %c0_11, %c0_12] : memref<3x64x128xf32, #tpu.memory_space<vmem>>, vector<1x64x128xf32>
    %39 = vector.shape_cast %38 : vector<1x64x128xf32> to vector<64x128xf32>
    %cst_13 = arith.constant dense<0.000000e+00> : vector<16x128xf32>
    %40 = tpu.matmul %37, %39, %cst_13 {dimension_numbers = #tpu.dot_dimension_numbers<[1], [0], [0], [1], [0, 0, 1, 1], [], []>} : vector<16x64xf32>, vector<64x128xf32>, vector<16x128xf32> -> vector<16x128xf32>
    %41 = vector.extract_strided_slice %12 {offsets = [0, 1, 0], sizes = [1, 1, 128], strides = [1, 1, 1]} : vector<3x6x128xf32> to vector<1x1x128xf32>
    %42 = vector.shape_cast %41 : vector<1x1x128xf32> to vector<1x128xf32>
    %43 = vector.broadcast %42 : vector<1x128xf32> to vector<16x128xf32>
    %44 = arith.addf %40, %43 : vector<16x128xf32>
    %cst_14 = arith.constant 0.000000e+00 : f32
    %45 = vector.broadcast %cst_14 : f32 to vector<16x128xf32>
    %46 = arith.maximumf %44, %45 : vector<16x128xf32>
    %c0_15 = arith.constant 0 : index
    %c0_16 = arith.constant 0 : index
    %c0_17 = arith.constant 0 : index
    %47 = vector.load %arg4[%c0_15, %c0_16, %c0_17] : memref<3x128x128xf32, #tpu.memory_space<vmem>>, vector<1x128x128xf32>
    %48 = vector.shape_cast %47 : vector<1x128x128xf32> to vector<128x128xf32>
    %cst_18 = arith.constant dense<0.000000e+00> : vector<16x128xf32>
    %49 = tpu.matmul %46, %48, %cst_18 {dimension_numbers = #tpu.dot_dimension_numbers<[1], [0], [0], [1], [0, 0, 1, 1], [], []>} : vector<16x128xf32>, vector<128x128xf32>, vector<16x128xf32> -> vector<16x128xf32>
    %50 = vector.extract_strided_slice %12 {offsets = [0, 2, 0], sizes = [1, 1, 128], strides = [1, 1, 1]} : vector<3x6x128xf32> to vector<1x1x128xf32>
    %51 = vector.shape_cast %50 : vector<1x1x128xf32> to vector<1x128xf32>
    %52 = vector.broadcast %51 : vector<1x128xf32> to vector<16x128xf32>
    %53 = arith.addf %49, %52 : vector<16x128xf32>
    %cst_19 = arith.constant 0.000000e+00 : f32
    %54 = vector.broadcast %cst_19 : f32 to vector<16x128xf32>
    %55 = arith.maximumf %53, %54 : vector<16x128xf32>
    %56 = vector.shape_cast %55 : vector<16x128xf32> to vector<1x16x128xf32>
    %cst_20 = arith.constant 0.000000e+00 : f32
    %57 = vector.broadcast %cst_20 : f32 to vector<1x16x128xf32>
    %58 = vector.shape_cast %56 : vector<1x16x128xf32> to vector<1x1x16x128xf32>
    %cst_21 = arith.constant 0.000000e+00 : f32
    %59 = vector.shape_cast %11 : vector<1x16x16x1xi1> to vector<1x16x16x1xi1>
    %60 = vector.broadcast %59 : vector<1x16x16x1xi1> to vector<1x16x16x128xi1>
    %61 = vector.shape_cast %58 : vector<1x1x16x128xf32> to vector<1x1x16x128xf32>
    %62 = vector.broadcast %61 : vector<1x1x16x128xf32> to vector<1x16x16x128xf32>
    %63 = vector.broadcast %cst_21 : f32 to vector<1x16x16x128xf32>
    %64 = arith.select %60, %62, %63 : vector<1x16x16x128xi1>, vector<1x16x16x128xf32>
    %cst_22 = arith.constant dense<0xFF800000> : vector<1x16x128xf32>
    %65 = vector.multi_reduction <maximumf>, %64, %cst_22 [2] : vector<1x16x16x128xf32> to vector<1x16x128xf32>
    %66 = arith.maximumf %57, %65 : vector<1x16x128xf32>
    %67 = vector.shape_cast %66 : vector<1x16x128xf32> to vector<16x128xf32>
    %c0_23 = arith.constant 0 : index
    %c0_24 = arith.constant 0 : index
    %c0_25 = arith.constant 0 : index
    %68 = vector.load %arg5[%c0_23, %c0_24, %c0_25] : memref<3x128x64xf32, #tpu.memory_space<vmem>>, vector<1x128x64xf32>
    %69 = vector.shape_cast %68 : vector<1x128x64xf32> to vector<128x64xf32>
    %cst_26 = arith.constant dense<0.000000e+00> : vector<16x64xf32>
    %70 = tpu.matmul %67, %69, %cst_26 {dimension_numbers = #tpu.dot_dimension_numbers<[1], [0], [0], [1], [0, 0, 1, 1], [], []>} : vector<16x128xf32>, vector<128x64xf32>, vector<16x64xf32> -> vector<16x64xf32>
    %71 = vector.extract_strided_slice %12 {offsets = [0, 3, 0], sizes = [1, 1, 64], strides = [1, 1, 1]} : vector<3x6x128xf32> to vector<1x1x64xf32>
    %72 = vector.shape_cast %71 : vector<1x1x64xf32> to vector<1x64xf32>
    %73 = vector.broadcast %72 : vector<1x64xf32> to vector<16x64xf32>
    %74 = arith.addf %70, %73 : vector<16x64xf32>
    %cst_27 = arith.constant 0.000000e+00 : f32
    %75 = vector.broadcast %cst_27 : f32 to vector<16x64xf32>
    %76 = arith.maximumf %74, %75 : vector<16x64xf32>
    %c0_28 = arith.constant 0 : index
    %c0_29 = arith.constant 0 : index
    %c0_30 = arith.constant 0 : index
    %77 = vector.load %arg6[%c0_28, %c0_29, %c0_30] : memref<3x64x32xf32, #tpu.memory_space<vmem>>, vector<1x64x32xf32>
    %78 = vector.shape_cast %77 : vector<1x64x32xf32> to vector<64x32xf32>
    %cst_31 = arith.constant dense<0.000000e+00> : vector<16x32xf32>
    %79 = tpu.matmul %76, %78, %cst_31 {dimension_numbers = #tpu.dot_dimension_numbers<[1], [0], [0], [1], [0, 0, 1, 1], [], []>} : vector<16x64xf32>, vector<64x32xf32>, vector<16x32xf32> -> vector<16x32xf32>
    %80 = vector.extract_strided_slice %12 {offsets = [0, 4, 0], sizes = [1, 1, 32], strides = [1, 1, 1]} : vector<3x6x128xf32> to vector<1x1x32xf32>
    %81 = vector.shape_cast %80 : vector<1x1x32xf32> to vector<1x32xf32>
    %82 = vector.broadcast %81 : vector<1x32xf32> to vector<16x32xf32>
    %83 = arith.addf %79, %82 : vector<16x32xf32>
    %cst_32 = arith.constant 0.000000e+00 : f32
    %84 = vector.broadcast %cst_32 : f32 to vector<16x32xf32>
    %85 = arith.maximumf %83, %84 : vector<16x32xf32>
    %c0_33 = arith.constant 0 : index
    %c0_34 = arith.constant 0 : index
    %c0_35 = arith.constant 0 : index
    %86 = vector.load %arg7[%c0_33, %c0_34, %c0_35] : memref<3x32x3xf32, #tpu.memory_space<vmem>>, vector<1x32x3xf32>
    %87 = vector.shape_cast %86 : vector<1x32x3xf32> to vector<32x3xf32>
    %cst_36 = arith.constant dense<0.000000e+00> : vector<16x3xf32>
    %88 = tpu.matmul %85, %87, %cst_36 {dimension_numbers = #tpu.dot_dimension_numbers<[1], [0], [0], [1], [0, 0, 1, 1], [], []>} : vector<16x32xf32>, vector<32x3xf32>, vector<16x3xf32> -> vector<16x3xf32>
    %89 = vector.extract_strided_slice %12 {offsets = [0, 5, 0], sizes = [1, 1, 3], strides = [1, 1, 1]} : vector<3x6x128xf32> to vector<1x1x3xf32>
    %90 = vector.shape_cast %89 : vector<1x1x3xf32> to vector<1x3xf32>
    %91 = vector.broadcast %90 : vector<1x3xf32> to vector<16x3xf32>
    %92 = arith.addf %88, %91 : vector<16x3xf32>
    %cst_37 = arith.constant 0.000000e+00 : f32
    %93 = vector.broadcast %cst_37 : f32 to vector<16x3xf32>
    %94 = arith.maximumf %92, %93 : vector<16x3xf32>
    %95 = arith.addf %94, %1 : vector<16x3xf32>
    %c1 = arith.constant 1 : index
    %c0_38 = arith.constant 0 : index
    %c0_39 = arith.constant 0 : index
    %96 = vector.load %arg2[%c1, %c0_38, %c0_39] : memref<3x3x64xf32, #tpu.memory_space<vmem>>, vector<1x3x64xf32>
    %97 = vector.shape_cast %96 : vector<1x3x64xf32> to vector<3x64xf32>
    %98 = vector.extract_strided_slice %95 {offsets = [0, 0], sizes = [16, 1], strides = [1, 1]} : vector<16x3xf32> to vector<16x1xf32>
    %99 = vector.extract_strided_slice %97 {offsets = [0, 0], sizes = [1, 64], strides = [1, 1]} : vector<3x64xf32> to vector<1x64xf32>
    %100 = vector.broadcast %98 : vector<16x1xf32> to vector<16x64xf32>
    %101 = vector.broadcast %99 : vector<1x64xf32> to vector<16x64xf32>
    %102 = arith.mulf %100, %101 : vector<16x64xf32>
    %103 = vector.extract_strided_slice %95 {offsets = [0, 1], sizes = [16, 1], strides = [1, 1]} : vector<16x3xf32> to vector<16x1xf32>
    %104 = vector.extract_strided_slice %97 {offsets = [1, 0], sizes = [1, 64], strides = [1, 1]} : vector<3x64xf32> to vector<1x64xf32>
    %105 = vector.broadcast %103 : vector<16x1xf32> to vector<16x64xf32>
    %106 = vector.broadcast %104 : vector<1x64xf32> to vector<16x64xf32>
    %107 = arith.mulf %105, %106 : vector<16x64xf32>
    %108 = arith.addf %102, %107 : vector<16x64xf32>
    %109 = vector.extract_strided_slice %95 {offsets = [0, 2], sizes = [16, 1], strides = [1, 1]} : vector<16x3xf32> to vector<16x1xf32>
    %110 = vector.extract_strided_slice %97 {offsets = [2, 0], sizes = [1, 64], strides = [1, 1]} : vector<3x64xf32> to vector<1x64xf32>
    %111 = vector.broadcast %109 : vector<16x1xf32> to vector<16x64xf32>
    %112 = vector.broadcast %110 : vector<1x64xf32> to vector<16x64xf32>
    %113 = arith.mulf %111, %112 : vector<16x64xf32>
    %114 = arith.addf %108, %113 : vector<16x64xf32>
    %115 = vector.extract_strided_slice %12 {offsets = [1, 0, 0], sizes = [1, 1, 64], strides = [1, 1, 1]} : vector<3x6x128xf32> to vector<1x1x64xf32>
    %116 = vector.shape_cast %115 : vector<1x1x64xf32> to vector<1x64xf32>
    %117 = vector.broadcast %116 : vector<1x64xf32> to vector<16x64xf32>
    %118 = arith.addf %114, %117 : vector<16x64xf32>
    %cst_40 = arith.constant 0.000000e+00 : f32
    %119 = vector.broadcast %cst_40 : f32 to vector<16x64xf32>
    %120 = arith.maximumf %118, %119 : vector<16x64xf32>
    %c1_41 = arith.constant 1 : index
    %c0_42 = arith.constant 0 : index
    %c0_43 = arith.constant 0 : index
    %121 = vector.load %arg3[%c1_41, %c0_42, %c0_43] : memref<3x64x128xf32, #tpu.memory_space<vmem>>, vector<1x64x128xf32>
    %122 = vector.shape_cast %121 : vector<1x64x128xf32> to vector<64x128xf32>
    %cst_44 = arith.constant dense<0.000000e+00> : vector<16x128xf32>
    %123 = tpu.matmul %120, %122, %cst_44 {dimension_numbers = #tpu.dot_dimension_numbers<[1], [0], [0], [1], [0, 0, 1, 1], [], []>} : vector<16x64xf32>, vector<64x128xf32>, vector<16x128xf32> -> vector<16x128xf32>
    %124 = vector.extract_strided_slice %12 {offsets = [1, 1, 0], sizes = [1, 1, 128], strides = [1, 1, 1]} : vector<3x6x128xf32> to vector<1x1x128xf32>
    %125 = vector.shape_cast %124 : vector<1x1x128xf32> to vector<1x128xf32>
    %126 = vector.broadcast %125 : vector<1x128xf32> to vector<16x128xf32>
    %127 = arith.addf %123, %126 : vector<16x128xf32>
    %cst_45 = arith.constant 0.000000e+00 : f32
    %128 = vector.broadcast %cst_45 : f32 to vector<16x128xf32>
    %129 = arith.maximumf %127, %128 : vector<16x128xf32>
    %c1_46 = arith.constant 1 : index
    %c0_47 = arith.constant 0 : index
    %c0_48 = arith.constant 0 : index
    %130 = vector.load %arg4[%c1_46, %c0_47, %c0_48] : memref<3x128x128xf32, #tpu.memory_space<vmem>>, vector<1x128x128xf32>
    %131 = vector.shape_cast %130 : vector<1x128x128xf32> to vector<128x128xf32>
    %cst_49 = arith.constant dense<0.000000e+00> : vector<16x128xf32>
    %132 = tpu.matmul %129, %131, %cst_49 {dimension_numbers = #tpu.dot_dimension_numbers<[1], [0], [0], [1], [0, 0, 1, 1], [], []>} : vector<16x128xf32>, vector<128x128xf32>, vector<16x128xf32> -> vector<16x128xf32>
    %133 = vector.extract_strided_slice %12 {offsets = [1, 2, 0], sizes = [1, 1, 128], strides = [1, 1, 1]} : vector<3x6x128xf32> to vector<1x1x128xf32>
    %134 = vector.shape_cast %133 : vector<1x1x128xf32> to vector<1x128xf32>
    %135 = vector.broadcast %134 : vector<1x128xf32> to vector<16x128xf32>
    %136 = arith.addf %132, %135 : vector<16x128xf32>
    %cst_50 = arith.constant 0.000000e+00 : f32
    %137 = vector.broadcast %cst_50 : f32 to vector<16x128xf32>
    %138 = arith.maximumf %136, %137 : vector<16x128xf32>
    %139 = vector.shape_cast %138 : vector<16x128xf32> to vector<1x16x128xf32>
    %cst_51 = arith.constant 0.000000e+00 : f32
    %140 = vector.broadcast %cst_51 : f32 to vector<1x16x128xf32>
    %141 = vector.shape_cast %139 : vector<1x16x128xf32> to vector<1x1x16x128xf32>
    %cst_52 = arith.constant 0.000000e+00 : f32
    %142 = vector.shape_cast %11 : vector<1x16x16x1xi1> to vector<1x16x16x1xi1>
    %143 = vector.broadcast %142 : vector<1x16x16x1xi1> to vector<1x16x16x128xi1>
    %144 = vector.shape_cast %141 : vector<1x1x16x128xf32> to vector<1x1x16x128xf32>
    %145 = vector.broadcast %144 : vector<1x1x16x128xf32> to vector<1x16x16x128xf32>
    %146 = vector.broadcast %cst_52 : f32 to vector<1x16x16x128xf32>
    %147 = arith.select %143, %145, %146 : vector<1x16x16x128xi1>, vector<1x16x16x128xf32>
    %cst_53 = arith.constant dense<0xFF800000> : vector<1x16x128xf32>
    %148 = vector.multi_reduction <maximumf>, %147, %cst_53 [2] : vector<1x16x16x128xf32> to vector<1x16x128xf32>
    %149 = arith.maximumf %140, %148 : vector<1x16x128xf32>
    %150 = vector.shape_cast %149 : vector<1x16x128xf32> to vector<16x128xf32>
    %c1_54 = arith.constant 1 : index
    %c0_55 = arith.constant 0 : index
    %c0_56 = arith.constant 0 : index
    %151 = vector.load %arg5[%c1_54, %c0_55, %c0_56] : memref<3x128x64xf32, #tpu.memory_space<vmem>>, vector<1x128x64xf32>
    %152 = vector.shape_cast %151 : vector<1x128x64xf32> to vector<128x64xf32>
    %cst_57 = arith.constant dense<0.000000e+00> : vector<16x64xf32>
    %153 = tpu.matmul %150, %152, %cst_57 {dimension_numbers = #tpu.dot_dimension_numbers<[1], [0], [0], [1], [0, 0, 1, 1], [], []>} : vector<16x128xf32>, vector<128x64xf32>, vector<16x64xf32> -> vector<16x64xf32>
    %154 = vector.extract_strided_slice %12 {offsets = [1, 3, 0], sizes = [1, 1, 64], strides = [1, 1, 1]} : vector<3x6x128xf32> to vector<1x1x64xf32>
    %155 = vector.shape_cast %154 : vector<1x1x64xf32> to vector<1x64xf32>
    %156 = vector.broadcast %155 : vector<1x64xf32> to vector<16x64xf32>
    %157 = arith.addf %153, %156 : vector<16x64xf32>
    %cst_58 = arith.constant 0.000000e+00 : f32
    %158 = vector.broadcast %cst_58 : f32 to vector<16x64xf32>
    %159 = arith.maximumf %157, %158 : vector<16x64xf32>
    %c1_59 = arith.constant 1 : index
    %c0_60 = arith.constant 0 : index
    %c0_61 = arith.constant 0 : index
    %160 = vector.load %arg6[%c1_59, %c0_60, %c0_61] : memref<3x64x32xf32, #tpu.memory_space<vmem>>, vector<1x64x32xf32>
    %161 = vector.shape_cast %160 : vector<1x64x32xf32> to vector<64x32xf32>
    %cst_62 = arith.constant dense<0.000000e+00> : vector<16x32xf32>
    %162 = tpu.matmul %159, %161, %cst_62 {dimension_numbers = #tpu.dot_dimension_numbers<[1], [0], [0], [1], [0, 0, 1, 1], [], []>} : vector<16x64xf32>, vector<64x32xf32>, vector<16x32xf32> -> vector<16x32xf32>
    %163 = vector.extract_strided_slice %12 {offsets = [1, 4, 0], sizes = [1, 1, 32], strides = [1, 1, 1]} : vector<3x6x128xf32> to vector<1x1x32xf32>
    %164 = vector.shape_cast %163 : vector<1x1x32xf32> to vector<1x32xf32>
    %165 = vector.broadcast %164 : vector<1x32xf32> to vector<16x32xf32>
    %166 = arith.addf %162, %165 : vector<16x32xf32>
    %cst_63 = arith.constant 0.000000e+00 : f32
    %167 = vector.broadcast %cst_63 : f32 to vector<16x32xf32>
    %168 = arith.maximumf %166, %167 : vector<16x32xf32>
    %c1_64 = arith.constant 1 : index
    %c0_65 = arith.constant 0 : index
    %c0_66 = arith.constant 0 : index
    %169 = vector.load %arg7[%c1_64, %c0_65, %c0_66] : memref<3x32x3xf32, #tpu.memory_space<vmem>>, vector<1x32x3xf32>
    %170 = vector.shape_cast %169 : vector<1x32x3xf32> to vector<32x3xf32>
    %cst_67 = arith.constant dense<0.000000e+00> : vector<16x3xf32>
    %171 = tpu.matmul %168, %170, %cst_67 {dimension_numbers = #tpu.dot_dimension_numbers<[1], [0], [0], [1], [0, 0, 1, 1], [], []>} : vector<16x32xf32>, vector<32x3xf32>, vector<16x3xf32> -> vector<16x3xf32>
    %172 = vector.extract_strided_slice %12 {offsets = [1, 5, 0], sizes = [1, 1, 3], strides = [1, 1, 1]} : vector<3x6x128xf32> to vector<1x1x3xf32>
    %173 = vector.shape_cast %172 : vector<1x1x3xf32> to vector<1x3xf32>
    %174 = vector.broadcast %173 : vector<1x3xf32> to vector<16x3xf32>
    %175 = arith.addf %171, %174 : vector<16x3xf32>
    %cst_68 = arith.constant 0.000000e+00 : f32
    %176 = vector.broadcast %cst_68 : f32 to vector<16x3xf32>
    %177 = arith.maximumf %175, %176 : vector<16x3xf32>
    %178 = arith.addf %177, %95 : vector<16x3xf32>
    %c2 = arith.constant 2 : index
    %c0_69 = arith.constant 0 : index
    %c0_70 = arith.constant 0 : index
    %179 = vector.load %arg2[%c2, %c0_69, %c0_70] : memref<3x3x64xf32, #tpu.memory_space<vmem>>, vector<1x3x64xf32>
    %180 = vector.shape_cast %179 : vector<1x3x64xf32> to vector<3x64xf32>
    %181 = vector.extract_strided_slice %178 {offsets = [0, 0], sizes = [16, 1], strides = [1, 1]} : vector<16x3xf32> to vector<16x1xf32>
    %182 = vector.extract_strided_slice %180 {offsets = [0, 0], sizes = [1, 64], strides = [1, 1]} : vector<3x64xf32> to vector<1x64xf32>
    %183 = vector.broadcast %181 : vector<16x1xf32> to vector<16x64xf32>
    %184 = vector.broadcast %182 : vector<1x64xf32> to vector<16x64xf32>
    %185 = arith.mulf %183, %184 : vector<16x64xf32>
    %186 = vector.extract_strided_slice %178 {offsets = [0, 1], sizes = [16, 1], strides = [1, 1]} : vector<16x3xf32> to vector<16x1xf32>
    %187 = vector.extract_strided_slice %180 {offsets = [1, 0], sizes = [1, 64], strides = [1, 1]} : vector<3x64xf32> to vector<1x64xf32>
    %188 = vector.broadcast %186 : vector<16x1xf32> to vector<16x64xf32>
    %189 = vector.broadcast %187 : vector<1x64xf32> to vector<16x64xf32>
    %190 = arith.mulf %188, %189 : vector<16x64xf32>
    %191 = arith.addf %185, %190 : vector<16x64xf32>
    %192 = vector.extract_strided_slice %178 {offsets = [0, 2], sizes = [16, 1], strides = [1, 1]} : vector<16x3xf32> to vector<16x1xf32>
    %193 = vector.extract_strided_slice %180 {offsets = [2, 0], sizes = [1, 64], strides = [1, 1]} : vector<3x64xf32> to vector<1x64xf32>
    %194 = vector.broadcast %192 : vector<16x1xf32> to vector<16x64xf32>
    %195 = vector.broadcast %193 : vector<1x64xf32> to vector<16x64xf32>
    %196 = arith.mulf %194, %195 : vector<16x64xf32>
    %197 = arith.addf %191, %196 : vector<16x64xf32>
    %198 = vector.extract_strided_slice %12 {offsets = [2, 0, 0], sizes = [1, 1, 64], strides = [1, 1, 1]} : vector<3x6x128xf32> to vector<1x1x64xf32>
    %199 = vector.shape_cast %198 : vector<1x1x64xf32> to vector<1x64xf32>
    %200 = vector.broadcast %199 : vector<1x64xf32> to vector<16x64xf32>
    %201 = arith.addf %197, %200 : vector<16x64xf32>
    %cst_71 = arith.constant 0.000000e+00 : f32
    %202 = vector.broadcast %cst_71 : f32 to vector<16x64xf32>
    %203 = arith.maximumf %201, %202 : vector<16x64xf32>
    %c2_72 = arith.constant 2 : index
    %c0_73 = arith.constant 0 : index
    %c0_74 = arith.constant 0 : index
    %204 = vector.load %arg3[%c2_72, %c0_73, %c0_74] : memref<3x64x128xf32, #tpu.memory_space<vmem>>, vector<1x64x128xf32>
    %205 = vector.shape_cast %204 : vector<1x64x128xf32> to vector<64x128xf32>
    %cst_75 = arith.constant dense<0.000000e+00> : vector<16x128xf32>
    %206 = tpu.matmul %203, %205, %cst_75 {dimension_numbers = #tpu.dot_dimension_numbers<[1], [0], [0], [1], [0, 0, 1, 1], [], []>} : vector<16x64xf32>, vector<64x128xf32>, vector<16x128xf32> -> vector<16x128xf32>
    %207 = vector.extract_strided_slice %12 {offsets = [2, 1, 0], sizes = [1, 1, 128], strides = [1, 1, 1]} : vector<3x6x128xf32> to vector<1x1x128xf32>
    %208 = vector.shape_cast %207 : vector<1x1x128xf32> to vector<1x128xf32>
    %209 = vector.broadcast %208 : vector<1x128xf32> to vector<16x128xf32>
    %210 = arith.addf %206, %209 : vector<16x128xf32>
    %cst_76 = arith.constant 0.000000e+00 : f32
    %211 = vector.broadcast %cst_76 : f32 to vector<16x128xf32>
    %212 = arith.maximumf %210, %211 : vector<16x128xf32>
    %c2_77 = arith.constant 2 : index
    %c0_78 = arith.constant 0 : index
    %c0_79 = arith.constant 0 : index
    %213 = vector.load %arg4[%c2_77, %c0_78, %c0_79] : memref<3x128x128xf32, #tpu.memory_space<vmem>>, vector<1x128x128xf32>
    %214 = vector.shape_cast %213 : vector<1x128x128xf32> to vector<128x128xf32>
    %cst_80 = arith.constant dense<0.000000e+00> : vector<16x128xf32>
    %215 = tpu.matmul %212, %214, %cst_80 {dimension_numbers = #tpu.dot_dimension_numbers<[1], [0], [0], [1], [0, 0, 1, 1], [], []>} : vector<16x128xf32>, vector<128x128xf32>, vector<16x128xf32> -> vector<16x128xf32>
    %216 = vector.extract_strided_slice %12 {offsets = [2, 2, 0], sizes = [1, 1, 128], strides = [1, 1, 1]} : vector<3x6x128xf32> to vector<1x1x128xf32>
    %217 = vector.shape_cast %216 : vector<1x1x128xf32> to vector<1x128xf32>
    %218 = vector.broadcast %217 : vector<1x128xf32> to vector<16x128xf32>
    %219 = arith.addf %215, %218 : vector<16x128xf32>
    %cst_81 = arith.constant 0.000000e+00 : f32
    %220 = vector.broadcast %cst_81 : f32 to vector<16x128xf32>
    %221 = arith.maximumf %219, %220 : vector<16x128xf32>
    %222 = vector.shape_cast %221 : vector<16x128xf32> to vector<1x16x128xf32>
    %cst_82 = arith.constant 0.000000e+00 : f32
    %223 = vector.broadcast %cst_82 : f32 to vector<1x16x128xf32>
    %224 = vector.shape_cast %222 : vector<1x16x128xf32> to vector<1x1x16x128xf32>
    %cst_83 = arith.constant 0.000000e+00 : f32
    %225 = vector.shape_cast %11 : vector<1x16x16x1xi1> to vector<1x16x16x1xi1>
    %226 = vector.broadcast %225 : vector<1x16x16x1xi1> to vector<1x16x16x128xi1>
    %227 = vector.shape_cast %224 : vector<1x1x16x128xf32> to vector<1x1x16x128xf32>
    %228 = vector.broadcast %227 : vector<1x1x16x128xf32> to vector<1x16x16x128xf32>
    %229 = vector.broadcast %cst_83 : f32 to vector<1x16x16x128xf32>
    %230 = arith.select %226, %228, %229 : vector<1x16x16x128xi1>, vector<1x16x16x128xf32>
    %cst_84 = arith.constant dense<0xFF800000> : vector<1x16x128xf32>
    %231 = vector.multi_reduction <maximumf>, %230, %cst_84 [2] : vector<1x16x16x128xf32> to vector<1x16x128xf32>
    %232 = arith.maximumf %223, %231 : vector<1x16x128xf32>
    %233 = vector.shape_cast %232 : vector<1x16x128xf32> to vector<16x128xf32>
    %c2_85 = arith.constant 2 : index
    %c0_86 = arith.constant 0 : index
    %c0_87 = arith.constant 0 : index
    %234 = vector.load %arg5[%c2_85, %c0_86, %c0_87] : memref<3x128x64xf32, #tpu.memory_space<vmem>>, vector<1x128x64xf32>
    %235 = vector.shape_cast %234 : vector<1x128x64xf32> to vector<128x64xf32>
    %cst_88 = arith.constant dense<0.000000e+00> : vector<16x64xf32>
    %236 = tpu.matmul %233, %235, %cst_88 {dimension_numbers = #tpu.dot_dimension_numbers<[1], [0], [0], [1], [0, 0, 1, 1], [], []>} : vector<16x128xf32>, vector<128x64xf32>, vector<16x64xf32> -> vector<16x64xf32>
    %237 = vector.extract_strided_slice %12 {offsets = [2, 3, 0], sizes = [1, 1, 64], strides = [1, 1, 1]} : vector<3x6x128xf32> to vector<1x1x64xf32>
    %238 = vector.shape_cast %237 : vector<1x1x64xf32> to vector<1x64xf32>
    %239 = vector.broadcast %238 : vector<1x64xf32> to vector<16x64xf32>
    %240 = arith.addf %236, %239 : vector<16x64xf32>
    %cst_89 = arith.constant 0.000000e+00 : f32
    %241 = vector.broadcast %cst_89 : f32 to vector<16x64xf32>
    %242 = arith.maximumf %240, %241 : vector<16x64xf32>
    %c2_90 = arith.constant 2 : index
    %c0_91 = arith.constant 0 : index
    %c0_92 = arith.constant 0 : index
    %243 = vector.load %arg6[%c2_90, %c0_91, %c0_92] : memref<3x64x32xf32, #tpu.memory_space<vmem>>, vector<1x64x32xf32>
    %244 = vector.shape_cast %243 : vector<1x64x32xf32> to vector<64x32xf32>
    %cst_93 = arith.constant dense<0.000000e+00> : vector<16x32xf32>
    %245 = tpu.matmul %242, %244, %cst_93 {dimension_numbers = #tpu.dot_dimension_numbers<[1], [0], [0], [1], [0, 0, 1, 1], [], []>} : vector<16x64xf32>, vector<64x32xf32>, vector<16x32xf32> -> vector<16x32xf32>
    %246 = vector.extract_strided_slice %12 {offsets = [2, 4, 0], sizes = [1, 1, 32], strides = [1, 1, 1]} : vector<3x6x128xf32> to vector<1x1x32xf32>
    %247 = vector.shape_cast %246 : vector<1x1x32xf32> to vector<1x32xf32>
    %248 = vector.broadcast %247 : vector<1x32xf32> to vector<16x32xf32>
    %249 = arith.addf %245, %248 : vector<16x32xf32>
    %cst_94 = arith.constant 0.000000e+00 : f32
    %250 = vector.broadcast %cst_94 : f32 to vector<16x32xf32>
    %251 = arith.maximumf %249, %250 : vector<16x32xf32>
    %c2_95 = arith.constant 2 : index
    %c0_96 = arith.constant 0 : index
    %c0_97 = arith.constant 0 : index
    %252 = vector.load %arg7[%c2_95, %c0_96, %c0_97] : memref<3x32x3xf32, #tpu.memory_space<vmem>>, vector<1x32x3xf32>
    %253 = vector.shape_cast %252 : vector<1x32x3xf32> to vector<32x3xf32>
    %cst_98 = arith.constant dense<0.000000e+00> : vector<16x3xf32>
    %254 = tpu.matmul %251, %253, %cst_98 {dimension_numbers = #tpu.dot_dimension_numbers<[1], [0], [0], [1], [0, 0, 1, 1], [], []>} : vector<16x32xf32>, vector<32x3xf32>, vector<16x3xf32> -> vector<16x3xf32>
    %255 = vector.extract_strided_slice %12 {offsets = [2, 5, 0], sizes = [1, 1, 3], strides = [1, 1, 1]} : vector<3x6x128xf32> to vector<1x1x3xf32>
    %256 = vector.shape_cast %255 : vector<1x1x3xf32> to vector<1x3xf32>
    %257 = vector.broadcast %256 : vector<1x3xf32> to vector<16x3xf32>
    %258 = arith.addf %254, %257 : vector<16x3xf32>
    %cst_99 = arith.constant 0.000000e+00 : f32
    %259 = vector.broadcast %cst_99 : f32 to vector<16x3xf32>
    %260 = arith.maximumf %258, %259 : vector<16x3xf32>
    %261 = arith.addf %260, %178 : vector<16x3xf32>
    %262 = vector.shape_cast %261 : vector<16x3xf32> to vector<1x16x3xf32>
    %c0_100 = arith.constant 0 : index
    %c0_101 = arith.constant 0 : index
    %c0_102 = arith.constant 0 : index
    %263 = vector.load %arg9[%c0_100, %c0_101, %c0_102] : memref<1x16x3xf32, #tpu.memory_space<vmem>>, vector<1x16x3xf32>
    tpu.vector_store %arg9[%c0_100, %c0_101, %c0_102], %262 {strides = array<i32>} : memref<1x16x3xf32, #tpu.memory_space<vmem>>, vector<1x16x3xf32>,
    return
  }
  func.func @transform_0(%arg0: i32) -> (i32, i32, i32) {
    %c0_i32 = arith.constant 0 : i32
    %c0_i32_0 = arith.constant 0 : i32
    %c0_i32_1 = arith.constant 0 : i32
    return %arg0, %c0_i32, %c0_i32_0 : i32, i32, i32
  }
  func.func @transform_1(%arg0: i32) -> (i32, i32, i32) {
    %c0_i32 = arith.constant 0 : i32
    %c0_i32_0 = arith.constant 0 : i32
    %c0_i32_1 = arith.constant 0 : i32
    %c0_i32_2 = arith.constant 0 : i32
    return %c0_i32, %c0_i32_0, %c0_i32_1 : i32, i32, i32
  }
  func.func @transform_2(%arg0: i32) -> (i32, i32, i32) {
    %c0_i32 = arith.constant 0 : i32
    %c0_i32_0 = arith.constant 0 : i32
    %c0_i32_1 = arith.constant 0 : i32
    %c0_i32_2 = arith.constant 0 : i32
    return %c0_i32, %c0_i32_0, %c0_i32_1 : i32, i32, i32
  }
  func.func @transform_3(%arg0: i32) -> (i32, i32, i32) {
    %c0_i32 = arith.constant 0 : i32
    %c0_i32_0 = arith.constant 0 : i32
    %c0_i32_1 = arith.constant 0 : i32
    %c0_i32_2 = arith.constant 0 : i32
    return %c0_i32, %c0_i32_0, %c0_i32_1 : i32, i32, i32
  }
  func.func @transform_4(%arg0: i32) -> (i32, i32, i32) {
    %c0_i32 = arith.constant 0 : i32
    %c0_i32_0 = arith.constant 0 : i32
    %c0_i32_1 = arith.constant 0 : i32
    %c0_i32_2 = arith.constant 0 : i32
    return %c0_i32, %c0_i32_0, %c0_i32_1 : i32, i32, i32
  }
  func.func @transform_5(%arg0: i32) -> (i32, i32, i32) {
    %c0_i32 = arith.constant 0 : i32
    %c0_i32_0 = arith.constant 0 : i32
    %c0_i32_1 = arith.constant 0 : i32
    %c0_i32_2 = arith.constant 0 : i32
    return %c0_i32, %c0_i32_0, %c0_i32_1 : i32, i32, i32
  }
  func.func @transform_6(%arg0: i32) -> (i32, i32, i32) {
    %c0_i32 = arith.constant 0 : i32
    %c0_i32_0 = arith.constant 0 : i32
    %c0_i32_1 = arith.constant 0 : i32
    %c0_i32_2 = arith.constant 0 : i32
    return %c0_i32, %c0_i32_0, %c0_i32_1 : i32, i32, i32
  }
  func.func @transform_7(%arg0: i32) -> (i32, i32, i32) {
    %c0_i32 = arith.constant 0 : i32
    %c0_i32_0 = arith.constant 0 : i32
    %c0_i32_1 = arith.constant 0 : i32
    %c0_i32_2 = arith.constant 0 : i32
    return %c0_i32, %c0_i32_0, %c0_i32_1 : i32, i32, i32
  }
  func.func @transform_8(%arg0: i32) -> (i32, i32, i32) {
    %c0_i32 = arith.constant 0 : i32
    %c0_i32_0 = arith.constant 0 : i32
    %c0_i32_1 = arith.constant 0 : i32
    return %arg0, %c0_i32, %c0_i32_0 : i32, i32, i32
  }
}

</mosaic_0001>

<llo_original>
// kernel: tpu_custom_call.1
$region0: #{tpu_custom_call.1}
  #allocation0 [shape = 'u32[]', space=smem, size = 0x4, offset = 0x4, fixed_abs, tag = 'smem constant byte address 0x4 - core index']
  #allocation1 [shape = 'u32[144,128]{1,0:T(1,128)}', space=vmem, size = 0x12000, scoped, tag = 'internal scratch']
  %s0 = inlined_call_operand.vmem [shape: f32[2,16,3], index: 0, kind: input, shape index: {}]
  %s1 = inlined_call_operand.vmem [shape: f32[3,3,64], index: 1, kind: input, shape index: {}]
  %s2 = inlined_call_operand.vmem [shape: f32[3,64,128], index: 2, kind: input, shape index: {}]
  %s3 = inlined_call_operand.vmem [shape: f32[3,128,128], index: 3, kind: input, shape index: {}]
  %s4 = inlined_call_operand.vmem [shape: f32[3,128,64], index: 4, kind: input, shape index: {}]
  %s5 = inlined_call_operand.vmem [shape: f32[3,64,32], index: 5, kind: input, shape index: {}]
  %s6 = inlined_call_operand.vmem [shape: f32[3,32,3], index: 6, kind: input, shape index: {}]
  %s7 = inlined_call_operand.vmem [shape: f32[3,6,128], index: 7, kind: input, shape index: {}]
  %s8 = inlined_call_operand.vmem [shape: f32[2,16,3], index: 8, kind: output, shape index: {}]
  %s9 = sld [smem:[#allocation0]]
  $region65: #{tpu_custom_call.1} parent=0
    _
  %s11 = ssub.s32 1, %s9
  %s12 = scalar_select 0, %s11, %s9
  loop: start=0, step=1, limit=4
  $region2: #{tpu_custom_call.1} parent=0 // loop_pre_header
    _
  $region3: #{tpu_custom_call.1} parent=0 // loop_header
    %s14 = sphi 0, %s18
    %p15 = scmp.ge.s32.totalorder %s14, 4
    %s24 = sphi 0, %s26
    %s27 = sphi 0, %s24
    %s28 = sphi 0, %s27
    %s44 = sphi 0, %s28
    %s48 = sphi 0, %s48
    %s50 = sphi 0, %s48
    %s51 = sphi 0, %s50
    %s65 = sphi 0, %s51
    %s69 = sphi 0, %s69
    %s71 = sphi 0, %s69
    %s72 = sphi 0, %s71
    %s86 = sphi 0, %s72
    %s90 = sphi 0, %s90
    %s92 = sphi 0, %s90
    %s93 = sphi 0, %s92
    %s107 = sphi 0, %s93
    %s111 = sphi 0, %s111
    %s113 = sphi 0, %s111
    %s114 = sphi 0, %s113
    %s128 = sphi 0, %s114
    %s132 = sphi 0, %s132
    %s134 = sphi 0, %s132
    %s135 = sphi 0, %s134
    %s149 = sphi 0, %s135
    %s153 = sphi 0, %s153
    %s155 = sphi 0, %s153
    %s156 = sphi 0, %s155
    %s170 = sphi 0, %s156
    %s174 = sphi 0, %s174
    %s176 = sphi 0, %s174
    %s177 = sphi 0, %s176
    %s191 = sphi 0, %s177
    %s197 = sphi 0, %s199
    %s200 = sphi 0, %s197
    %s201 = sphi 0, %s200
    %s217 = sphi 0, %s201
  $region4: #{tpu_custom_call.1} parent=0 // loop_header_branch
    %17 = sbr.rel (%p15) target = $region8
  $region5: #{tpu_custom_call.1} parent=0 // loop_body
    %s19 = ssub.s32 %s14, 1
    %s20 = ssub.s32 %s14, 2
    %s21 = sadd.s32 %s14, 1
    %s22 = ssub.s32 %s14, %s21
    %p23 = scmp.eq.s32.totalorder %s22, 0
    %s25 = sadd.s32 %s24, 1
    %s26 = scalar_select %p23, %s24, %s25
    %p29 = pneg %p23
    %p30 = scmp.eq.s32.totalorder %s14, 1
    %p31 = por %p29, %p30
    %p32 = scmp.ne.s32.totalorder %s24, %s27
    %p33 = scmp.eq.s32.totalorder %s14, 0
    %p34 = por %p32, %p33
    %p35 = scmp.ne.s32.totalorder %s24, %s27
    %p36 = scmp.eq.s32.totalorder %s19, 1
    %p37 = por %p35, %p36
    %p38 = scmp.ne.s32.totalorder %s27, %s28
    %p39 = scmp.eq.s32.totalorder %s19, 0
    %p40 = por %p38, %p39
    %p41 = scmp.ne.s32.totalorder %s27, %s28
    %p42 = scmp.eq.s32.totalorder %s20, 1
    %p43 = por %p41, %p42
    %p45 = scmp.ne.s32.totalorder %s28, %s44
    %p46 = scmp.eq.s32.totalorder %s20, 0
    %p47 = por %p45, %p46
    %s49 = sadd.s32 %s48, 1
    %p52 = scmp.eq.s32.totalorder %s14, 1
    %p53 = scmp.ne.s32.totalorder %s48, %s50
    %p54 = scmp.eq.s32.totalorder %s14, 0
    %p55 = por %p53, %p54
    %p56 = scmp.ne.s32.totalorder %s48, %s50
    %p57 = scmp.eq.s32.totalorder %s19, 1
    %p58 = por %p56, %p57
    %p59 = scmp.ne.s32.totalorder %s50, %s51
    %p60 = scmp.eq.s32.totalorder %s19, 0
    %p61 = por %p59, %p60
    %p62 = scmp.ne.s32.totalorder %s50, %s51
    %p63 = scmp.eq.s32.totalorder %s20, 1
    %p64 = por %p62, %p63
    %p66 = scmp.ne.s32.totalorder %s51, %s65
    %p67 = scmp.eq.s32.totalorder %s20, 0
    %p68 = por %p66, %p67
    %s70 = sadd.s32 %s69, 1
    %p73 = scmp.eq.s32.totalorder %s14, 1
    %p74 = scmp.ne.s32.totalorder %s69, %s71
    %p75 = scmp.eq.s32.totalorder %s14, 0
    %p76 = por %p74, %p75
    %p77 = scmp.ne.s32.totalorder %s69, %s71
    %p78 = scmp.eq.s32.totalorder %s19, 1
    %p79 = por %p77, %p78
    %p80 = scmp.ne.s32.totalorder %s71, %s72
    %p81 = scmp.eq.s32.totalorder %s19, 0
    %p82 = por %p80, %p81
    %p83 = scmp.ne.s32.totalorder %s71, %s72
    %p84 = scmp.eq.s32.totalorder %s20, 1
    %p85 = por %p83, %p84
    %p87 = scmp.ne.s32.totalorder %s72, %s86
    %p88 = scmp.eq.s32.totalorder %s20, 0
    %p89 = por %p87, %p88
    %s91 = sadd.s32 %s90, 1
    %p94 = scmp.eq.s32.totalorder %s14, 1
    %p95 = scmp.ne.s32.totalorder %s90, %s92
    %p96 = scmp.eq.s32.totalorder %s14, 0
    %p97 = por %p95, %p96
    %p98 = scmp.ne.s32.totalorder %s90, %s92
    %p99 = scmp.eq.s32.totalorder %s19, 1
    %p100 = por %p98, %p99
    %p101 = scmp.ne.s32.totalorder %s92, %s93
    %p102 = scmp.eq.s32.totalorder %s19, 0
    %p103 = por %p101, %p102
    %p104 = scmp.ne.s32.totalorder %s92, %s93
    %p105 = scmp.eq.s32.totalorder %s20, 1
    %p106 = por %p104, %p105
    %p108 = scmp.ne.s32.totalorder %s93, %s107
    %p109 = scmp.eq.s32.totalorder %s20, 0
    %p110 = por %p108, %p109
    %s112 = sadd.s32 %s111, 1
    %p115 = scmp.eq.s32.totalorder %s14, 1
    %p116 = scmp.ne.s32.totalorder %s111, %s113
    %p117 = scmp.eq.s32.totalorder %s14, 0
    %p118 = por %p116, %p117
    %p119 = scmp.ne.s32.totalorder %s111, %s113
    %p120 = scmp.eq.s32.totalorder %s19, 1
    %p121 = por %p119, %p120
    %p122 = scmp.ne.s32.totalorder %s113, %s114
    %p123 = scmp.eq.s32.totalorder %s19, 0
    %p124 = por %p122, %p123
    %p125 = scmp.ne.s32.totalorder %s113, %s114
    %p126 = scmp.eq.s32.totalorder %s20, 1
    %p127 = por %p125, %p126
    %p129 = scmp.ne.s32.totalorder %s114, %s128
    %p130 = scmp.eq.s32.totalorder %s20, 0
    %p131 = por %p129, %p130
    %s133 = sadd.s32 %s132, 1
    %p136 = scmp.eq.s32.totalorder %s14, 1
    %p137 = scmp.ne.s32.totalorder %s132, %s134
    %p138 = scmp.eq.s32.totalorder %s14, 0
    %p139 = por %p137, %p138
    %p140 = scmp.ne.s32.totalorder %s132, %s134
    %p141 = scmp.eq.s32.totalorder %s19, 1
    %p142 = por %p140, %p141
    %p143 = scmp.ne.s32.totalorder %s134, %s135
    %p144 = scmp.eq.s32.totalorder %s19, 0
    %p145 = por %p143, %p144
    %p146 = scmp.ne.s32.totalorder %s134, %s135
    %p147 = scmp.eq.s32.totalorder %s20, 1
    %p148 = por %p146, %p147
    %p150 = scmp.ne.s32.totalorder %s135, %s149
    %p151 = scmp.eq.s32.totalorder %s20, 0
    %p152 = por %p150, %p151
    %s154 = sadd.s32 %s153, 1
    %p157 = scmp.eq.s32.totalorder %s14, 1
    %p158 = scmp.ne.s32.totalorder %s153, %s155
    %p159 = scmp.eq.s32.totalorder %s14, 0
    %p160 = por %p158, %p159
    %p161 = scmp.ne.s32.totalorder %s153, %s155
    %p162 = scmp.eq.s32.totalorder %s19, 1
    %p163 = por %p161, %p162
    %p164 = scmp.ne.s32.totalorder %s155, %s156
    %p165 = scmp.eq.s32.totalorder %s19, 0
    %p166 = por %p164, %p165
    %p167 = scmp.ne.s32.totalorder %s155, %s156
    %p168 = scmp.eq.s32.totalorder %s20, 1
    %p169 = por %p167, %p168
    %p171 = scmp.ne.s32.totalorder %s156, %s170
    %p172 = scmp.eq.s32.totalorder %s20, 0
    %p173 = por %p171, %p172
    %s175 = sadd.s32 %s174, 1
    %p178 = scmp.eq.s32.totalorder %s14, 1
    %p179 = scmp.ne.s32.totalorder %s174, %s176
    %p180 = scmp.eq.s32.totalorder %s14, 0
    %p181 = por %p179, %p180
    %p182 = scmp.ne.s32.totalorder %s174, %s176
    %p183 = scmp.eq.s32.totalorder %s19, 1
    %p184 = por %p182, %p183
    %p185 = scmp.ne.s32.totalorder %s176, %s177
    %p186 = scmp.eq.s32.totalorder %s19, 0
    %p187 = por %p185, %p186
    %p188 = scmp.ne.s32.totalorder %s176, %s177
    %p189 = scmp.eq.s32.totalorder %s20, 1
    %p190 = por %p188, %p189
    %p192 = scmp.ne.s32.totalorder %s177, %s191
    %p193 = scmp.eq.s32.totalorder %s20, 0
    %p194 = por %p192, %p193
    %s195 = ssub.s32 %s14, %s21
    %p196 = scmp.eq.s32.totalorder %s195, 0
    %s198 = sadd.s32 %s197, 1
    %s199 = scalar_select %p196, %s197, %s198
    %p202 = pneg %p196
    %p203 = scmp.eq.s32.totalorder %s14, 1
    %p204 = por %p202, %p203
    %p205 = scmp.ne.s32.totalorder %s197, %s200
    %p206 = scmp.eq.s32.totalorder %s14, 0
    %p207 = por %p205, %p206
    %p208 = scmp.ne.s32.totalorder %s197, %s200
    %p209 = scmp.eq.s32.totalorder %s19, 1
    %p210 = por %p208, %p209
    %p211 = scmp.ne.s32.totalorder %s200, %s201
    %p212 = scmp.eq.s32.totalorder %s19, 0
    %p213 = por %p211, %p212
    %p214 = scmp.ne.s32.totalorder %s200, %s201
    %p215 = scmp.eq.s32.totalorder %s20, 1
    %p216 = por %p214, %p215
    %p218 = scmp.ne.s32.totalorder %s201, %s217
    %p219 = scmp.eq.s32.totalorder %s20, 0
    %p220 = por %p218, %p219
    %p221 = scmp.le.s32.totalorder 1, %s14
    %p222 = scmp.lt.s32.totalorder %s14, 3
    %p223 = pnand %p221, %p222
    %p224 = pneg %p223
    // Predicated region
    $region9: #{tpu_custom_call.1} parent=5 // pred_check
      _
    $region10: #{tpu_custom_call.1} parent=5 // pred_check_branch
      %226 = sbr.rel (%p223) target = $region12
    $region11: #{tpu_custom_call.1} parent=5 // pred_region
      %s227 = ssub.s32 %s14, 1
      // Predicated region
      $region13: #{tpu_custom_call.1} parent=11 // pred_check
        %p228 = pneg %p61
      $region14: #{tpu_custom_call.1} parent=11 // pred_check_branch
        %230 = sbr.rel (%p228) target = $region16
      $region15: #{tpu_custom_call.1} parent=11 // pred_region
        _
      $region16: #{tpu_custom_call.1} parent=11 // pred_fallthru
        _
      // Predicated region
      $region17: #{tpu_custom_call.1} parent=11 // pred_check
        %p231 = pneg %p82
      $region18: #{tpu_custom_call.1} parent=11 // pred_check_branch
        %233 = sbr.rel (%p231) target = $region20
      $region19: #{tpu_custom_call.1} parent=11 // pred_region
        _
      $region20: #{tpu_custom_call.1} parent=11 // pred_fallthru
        _
      // Predicated region
      $region21: #{tpu_custom_call.1} parent=11 // pred_check
        %p234 = pneg %p103
      $region22: #{tpu_custom_call.1} parent=11 // pred_check_branch
        %236 = sbr.rel (%p234) target = $region24
      $region23: #{tpu_custom_call.1} parent=11 // pred_region
        _
      $region24: #{tpu_custom_call.1} parent=11 // pred_fallthru
        _
      // Predicated region
      $region25: #{tpu_custom_call.1} parent=11 // pred_check
        %p237 = pneg %p124
      $region26: #{tpu_custom_call.1} parent=11 // pred_check_branch
        %239 = sbr.rel (%p237) target = $region28
      $region27: #{tpu_custom_call.1} parent=11 // pred_region
        _
      $region28: #{tpu_custom_call.1} parent=11 // pred_fallthru
        _
      // Predicated region
      $region29: #{tpu_custom_call.1} parent=11 // pred_check
        %p240 = pneg %p145
      $region30: #{tpu_custom_call.1} parent=11 // pred_check_branch
        %242 = sbr.rel (%p240) target = $region32
      $region31: #{tpu_custom_call.1} parent=11 // pred_region
        _
      $region32: #{tpu_custom_call.1} parent=11 // pred_fallthru
        _
      // Predicated region
      $region33: #{tpu_custom_call.1} parent=11 // pred_check
        %p243 = pneg %p166
      $region34: #{tpu_custom_call.1} parent=11 // pred_check_branch
        %245 = sbr.rel (%p243) target = $region36
      $region35: #{tpu_custom_call.1} parent=11 // pred_region
        _
      $region36: #{tpu_custom_call.1} parent=11 // pred_fallthru
        _
      // Predicated region
      $region37: #{tpu_custom_call.1} parent=11 // pred_check
        %p246 = pneg %p187
      $region38: #{tpu_custom_call.1} parent=11 // pred_check_branch
        %248 = sbr.rel (%p246) target = $region40
      $region39: #{tpu_custom_call.1} parent=11 // pred_region
        _
      $region40: #{tpu_custom_call.1} parent=11 // pred_fallthru
        _
    $region12: #{tpu_custom_call.1} parent=5 // pred_fallthru
      _
    %p249 = scmp.lt.s32.totalorder %s14, 2
    // Predicated region
    $region41: #{tpu_custom_call.1} parent=5 // pred_check
      %p250 = pneg %p249
    $region42: #{tpu_custom_call.1} parent=5 // pred_check_branch
      %252 = sbr.rel (%p250) target = $region44
    $region43: #{tpu_custom_call.1} parent=5 // pred_region
      // Predicated region
      $region45: #{tpu_custom_call.1} parent=43 // pred_check
        %p253 = pneg %p34
      $region46: #{tpu_custom_call.1} parent=43 // pred_check_branch
        %255 = sbr.rel (%p253) target = $region48
      $region47: #{tpu_custom_call.1} parent=43 // pred_region
        %p256 = scmp.lt.s32.totalorder %s14, 1
        %s257 = scalar_select %p256, %s14, 1
        %s258 = smul.addr %s257, 2
        %s259 = smul.addr %s258, 8
        %s260 = scalar_lea.vmem %s0, %s259
      $region48: #{tpu_custom_call.1} parent=43 // pred_fallthru
        _
    $region44: #{tpu_custom_call.1} parent=5 // pred_fallthru
      _
    %p261 = scmp.le.s32.totalorder 1, %s14
    %p262 = scmp.lt.s32.totalorder %s14, 3
    %p263 = pnand %p261, %p262
    %p264 = pneg %p263
    // Predicated region
    $region49: #{tpu_custom_call.1} parent=5 // pred_check
      _
    $region50: #{tpu_custom_call.1} parent=5 // pred_check_branch
      %266 = sbr.rel (%p263) target = $region52
    $region51: #{tpu_custom_call.1} parent=5 // pred_region
      %s267 = ssub.s32 %s14, 1
      %p268 = scmp.lt.s32.totalorder %s19, 1
      %s269 = scalar_select %p268, %s19, 1
      %s270 = smul.addr %s269, 2
      %s271 = smul.addr %s270, 8
      %s272 = scalar_lea.vmem %s0, %s271
      %p273 = pneg %p40
      %p274 = pneg %p37
      %p275 = pneg %p61
      %p276 = pneg %p58
      %p277 = pneg %p82
      %p278 = pneg %p79
      %p279 = pneg %p103
      %p280 = pneg %p100
      %p281 = pneg %p124
      %p282 = pneg %p121
      %p283 = pneg %p145
      %p284 = pneg %p142
      %p285 = pneg %p166
      %p286 = pneg %p163
      %p287 = pneg %p187
      %p288 = pneg %p184
      %p289 = pneg %p213
      %p290 = pneg %p210
      %p291 = scmp.lt.s32.totalorder %s19, 1
      %s292 = scalar_select %p291, %s19, 1
      %s293 = smul.addr %s292, 2
      %s294 = smul.addr %s293, 8
      %s295 = scalar_lea.vmem %s8, %s294
      %p296 = scmp.lt.s32.totalorder %s19, 1
      %s297 = scalar_select %p296, %s19, 1
      %s298 = smul.addr %s297, 2
      %s299 = smul.addr %s298, 8
      %s300 = scalar_lea.vmem %s0, %s299
      %p301 = scmp.lt.s32.totalorder %s19, 1
      %s302 = scalar_select %p301, %s19, 1
      %s303 = smul.addr %s302, 2
      %s304 = smul.addr %s303, 8
      %s305 = scalar_lea.vmem %s8, %s304
      %v306 = vld [vmem:[%s300] sm:$0xff]
      %v307 = vld [vmem:[%s300 + $0x8] sm:$0xff]
      %v310 = vcombine.high %v306, %v306
      %v312 = vunpack.c.l.s4 1966171168
      %v313 = vunpack.c.0.s8 %v312
      %v314 = vlaneseq
      %v315 = vshrl.u32 %v314, 7
      %v316 = vsub.s32 %v313, %v315
      %v317 = vrot.slane %v306, %v316
      %v319 = vunpack.c.l.s4 1966171168
      %v320 = vunpack.c.0.s8 %v319
      %v321 = vlaneseq
      %v322 = vshrl.u32 %v321, 7
      %v323 = vsub.s32 %v320, %v322
      %v324 = vrot.slane %v310, %v323
      %v325 = vcombine.high %v317, %v317
      %v326 = vcombine.high %v324, %v324
      %v328 = vunpack.c.l.s4 1966171168
      %v329 = vunpack.c.0.s8 %v328
      %v330 = vlaneseq
      %v331 = vshrl.u32 %v330, 7
      %v332 = vsub.s32 %v329, %v331
      %v333 = vrot.slane %v317, %v332
      %v335 = vunpack.c.l.s4 1966171168
      %v336 = vunpack.c.0.s8 %v335
      %v337 = vlaneseq
      %v338 = vshrl.u32 %v337, 7
      %v339 = vsub.s32 %v336, %v338
      %v340 = vrot.slane %v324, %v339
      %v342 = vunpack.c.l.s4 1966171168
      %v343 = vunpack.c.0.s8 %v342
      %v344 = vlaneseq
      %v345 = vshrl.u32 %v344, 7
      %v346 = vsub.s32 %v343, %v345
      %v347 = vrot.slane %v325, %v346
      %v349 = vunpack.c.l.s4 1966171168
      %v350 = vunpack.c.0.s8 %v349
      %v351 = vlaneseq
      %v352 = vshrl.u32 %v351, 7
      %v353 = vsub.s32 %v350, %v352
      %v354 = vrot.slane %v326, %v353
      %v355 = vcombine.high %v333, %v333
      %v356 = vcombine.high %v340, %v340
      %v357 = vcombine.high %v347, %v347
      %v358 = vcombine.high %v354, %v354
      %v359 = vcombine.high %v307, %v307
      %v361 = vunpack.c.l.s4 1966171168
      %v362 = vunpack.c.0.s8 %v361
      %v363 = vlaneseq
      %v364 = vshrl.u32 %v363, 7
      %v365 = vsub.s32 %v362, %v364
      %v366 = vrot.slane %v307, %v365
      %v368 = vunpack.c.l.s4 1966171168
      %v369 = vunpack.c.0.s8 %v368
      %v370 = vlaneseq
      %v371 = vshrl.u32 %v370, 7
      %v372 = vsub.s32 %v369, %v371
      %v373 = vrot.slane %v359, %v372
      %v374 = vcombine.high %v366, %v366
      %v375 = vcombine.high %v373, %v373
      %v377 = vunpack.c.l.s4 1966171168
      %v378 = vunpack.c.0.s8 %v377
      %v379 = vlaneseq
      %v380 = vshrl.u32 %v379, 7
      %v381 = vsub.s32 %v378, %v380
      %v382 = vrot.slane %v366, %v381
      %v384 = vunpack.c.l.s4 1966171168
      %v385 = vunpack.c.0.s8 %v384
      %v386 = vlaneseq
      %v387 = vshrl.u32 %v386, 7
      %v388 = vsub.s32 %v385, %v387
      %v389 = vrot.slane %v373, %v388
      %v391 = vunpack.c.l.s4 1966171168
      %v392 = vunpack.c.0.s8 %v391
      %v393 = vlaneseq
      %v394 = vshrl.u32 %v393, 7
      %v395 = vsub.s32 %v392, %v394
      %v396 = vrot.slane %v374, %v395
      %v398 = vunpack.c.l.s4 1966171168
      %v399 = vunpack.c.0.s8 %v398
      %v400 = vlaneseq
      %v401 = vshrl.u32 %v400, 7
      %v402 = vsub.s32 %v399, %v401
      %v403 = vrot.slane %v375, %v402
      %v404 = vcombine.high %v382, %v382
      %v405 = vcombine.high %v389, %v389
      %v406 = vcombine.high %v396, %v396
      %v407 = vcombine.high %v403, %v403
      %v408 = vlaneseq
      %v409 = vshrl.u32 %v408, 7
      %v410 = vsub.s32 0, %v409
      %v411 = vrot.slane %v333, %v410
      %v412 = vlaneseq
      %v413 = vshrl.u32 %v412, 7
      %v414 = vsub.s32 0, %v413
      %v415 = vrot.slane %v347, %v414
      %v416 = vlaneseq
      %v417 = vshrl.u32 %v416, 7
      %v418 = vsub.s32 0, %v417
      %v419 = vrot.slane %v355, %v418
      %v420 = vlaneseq
      %v421 = vshrl.u32 %v420, 7
      %v422 = vsub.s32 0, %v421
      %v423 = vrot.slane %v357, %v422
      %v424 = vlaneseq
      %v425 = vshrl.u32 %v424, 7
      %v426 = vsub.s32 0, %v425
      %v427 = vrot.slane %v340, %v426
      %v428 = vlaneseq
      %v429 = vshrl.u32 %v428, 7
      %v430 = vsub.s32 0, %v429
      %v431 = vrot.slane %v354, %v430
      %v432 = vlaneseq
      %v433 = vshrl.u32 %v432, 7
      %v434 = vsub.s32 0, %v433
      %v435 = vrot.slane %v356, %v434
      %v436 = vlaneseq
      %v437 = vshrl.u32 %v436, 7
      %v438 = vsub.s32 0, %v437
      %v439 = vrot.slane %v358, %v438
      %v440 = vlaneseq
      %v441 = vshrl.u32 %v440, 7
      %v442 = vsub.s32 0, %v441
      %v443 = vrot.slane %v382, %v442
      %v444 = vlaneseq
      %v445 = vshrl.u32 %v444, 7
      %v446 = vsub.s32 0, %v445
      %v447 = vrot.slane %v396, %v446
      %v448 = vlaneseq
      %v449 = vshrl.u32 %v448, 7
      %v450 = vsub.s32 0, %v449
      %v451 = vrot.slane %v404, %v450
      %v452 = vlaneseq
      %v453 = vshrl.u32 %v452, 7
      %v454 = vsub.s32 0, %v453
      %v455 = vrot.slane %v406, %v454
      %v456 = vlaneseq
      %v457 = vshrl.u32 %v456, 7
      %v458 = vsub.s32 0, %v457
      %v459 = vrot.slane %v389, %v458
      %v460 = vlaneseq
      %v461 = vshrl.u32 %v460, 7
      %v462 = vsub.s32 0, %v461
      %v463 = vrot.slane %v403, %v462
      %v464 = vlaneseq
      %v465 = vshrl.u32 %v464, 7
      %v466 = vsub.s32 0, %v465
      %v467 = vrot.slane %v405, %v466
      %v468 = vlaneseq
      %v469 = vshrl.u32 %v468, 7
      %v470 = vsub.s32 0, %v469
      %v471 = vrot.slane %v407, %v470
      %v488 = vsub.f32 %v306, %v411
      %v489 = vsub.f32 %v307, %v411
      %v490 = vsub.f32 %v306, %v415
      %v491 = vsub.f32 %v307, %v415
      %v492 = vsub.f32 %v306, %v419
      %v493 = vsub.f32 %v307, %v419
      %v494 = vsub.f32 %v306, %v423
      %v495 = vsub.f32 %v307, %v423
      %v496 = vsub.f32 %v306, %v427
      %v497 = vsub.f32 %v307, %v427
      %v498 = vsub.f32 %v306, %v431
      %v499 = vsub.f32 %v307, %v431
      %v500 = vsub.f32 %v306, %v435
      %v501 = vsub.f32 %v307, %v435
      %v502 = vsub.f32 %v306, %v439
      %v503 = vsub.f32 %v307, %v439
      %v504 = vsub.f32 %v306, %v443
      %v505 = vsub.f32 %v307, %v443
      %v506 = vsub.f32 %v306, %v447
      %v507 = vsub.f32 %v307, %v447
      %v508 = vsub.f32 %v306, %v451
      %v509 = vsub.f32 %v307, %v451
      %v510 = vsub.f32 %v306, %v455
      %v511 = vsub.f32 %v307, %v455
      %v512 = vsub.f32 %v306, %v459
      %v513 = vsub.f32 %v307, %v459
      %v514 = vsub.f32 %v306, %v463
      %v515 = vsub.f32 %v307, %v463
      %v516 = vsub.f32 %v306, %v467
      %v517 = vsub.f32 %v307, %v467
      %v518 = vsub.f32 %v306, %v471
      %v519 = vsub.f32 %v307, %v471
      %v520 = vmul.f32 %v488, %v488
      %v521 = vmul.f32 %v489, %v489
      %v522 = vmul.f32 %v490, %v490
      %v523 = vmul.f32 %v491, %v491
      %v524 = vmul.f32 %v492, %v492
      %v525 = vmul.f32 %v493, %v493
      %v526 = vmul.f32 %v494, %v494
      %v527 = vmul.f32 %v495, %v495
      %v528 = vmul.f32 %v496, %v496
      %v529 = vmul.f32 %v497, %v497
      %v530 = vmul.f32 %v498, %v498
      %v531 = vmul.f32 %v499, %v499
      %v532 = vmul.f32 %v500, %v500
      %v533 = vmul.f32 %v501, %v501
      %v534 = vmul.f32 %v502, %v502
      %v535 = vmul.f32 %v503, %v503
      %v536 = vmul.f32 %v504, %v504
      %v537 = vmul.f32 %v505, %v505
      %v538 = vmul.f32 %v506, %v506
      %v539 = vmul.f32 %v507, %v507
      %v540 = vmul.f32 %v508, %v508
      %v541 = vmul.f32 %v509, %v509
      %v542 = vmul.f32 %v510, %v510
      %v543 = vmul.f32 %v511, %v511
      %v544 = vmul.f32 %v512, %v512
      %v545 = vmul.f32 %v513, %v513
      %v546 = vmul.f32 %v514, %v514
      %v547 = vmul.f32 %v515, %v515
      %v548 = vmul.f32 %v516, %v516
      %v549 = vmul.f32 %v517, %v517
      %v550 = vmul.f32 %v518, %v518
      %v551 = vmul.f32 %v519, %v519
      %vm552 = vcmask 23552
      %v553 = vsel %vm552, %v520, 0.0
      %554 = vadd.xlane.f32.xlu0 %v553
      %v555 = vpop.xlane.xlu0 %554
      %v556 = vsel %vm552, %v521, 0.0
      %557 = vadd.xlane.f32.xlu0 %v556
      %v558 = vpop.xlane.xlu0 %557
      %v559 = vsel %vm552, %v522, 0.0
      %560 = vadd.xlane.f32.xlu0 %v559
      %v561 = vpop.xlane.xlu0 %560
      %v562 = vsel %vm552, %v523, 0.0
      %563 = vadd.xlane.f32.xlu0 %v562
      %v564 = vpop.xlane.xlu0 %563
      %v565 = vsel %vm552, %v524, 0.0
      %566 = vadd.xlane.f32.xlu0 %v565
      %v567 = vpop.xlane.xlu0 %566
      %v568 = vsel %vm552, %v525, 0.0
      %569 = vadd.xlane.f32.xlu0 %v568
      %v570 = vpop.xlane.xlu0 %569
      %v571 = vsel %vm552, %v526, 0.0
      %572 = vadd.xlane.f32.xlu0 %v571
      %v573 = vpop.xlane.xlu0 %572
      %v574 = vsel %vm552, %v527, 0.0
      %575 = vadd.xlane.f32.xlu0 %v574
      %v576 = vpop.xlane.xlu0 %575
      %v577 = vsel %vm552, %v528, 0.0
      %578 = vadd.xlane.f32.xlu0 %v577
      %v579 = vpop.xlane.xlu0 %578
      %v580 = vsel %vm552, %v529, 0.0
      %581 = vadd.xlane.f32.xlu0 %v580
      %v582 = vpop.xlane.xlu0 %581
      %v583 = vsel %vm552, %v530, 0.0
      %584 = vadd.xlane.f32.xlu0 %v583
      %v585 = vpop.xlane.xlu0 %584
      %v586 = vsel %vm552, %v531, 0.0
      %587 = vadd.xlane.f32.xlu0 %v586
      %v588 = vpop.xlane.xlu0 %587
      %v589 = vsel %vm552, %v532, 0.0
      %590 = vadd.xlane.f32.xlu0 %v589
      %v591 = vpop.xlane.xlu0 %590
      %v592 = vsel %vm552, %v533, 0.0
      %593 = vadd.xlane.f32.xlu0 %v592
      %v594 = vpop.xlane.xlu0 %593
      %v595 = vsel %vm552, %v534, 0.0
      %596 = vadd.xlane.f32.xlu0 %v595
      %v597 = vpop.xlane.xlu0 %596
      %v598 = vsel %vm552, %v535, 0.0
      %599 = vadd.xlane.f32.xlu0 %v598
      %v600 = vpop.xlane.xlu0 %599
      %v601 = vsel %vm552, %v536, 0.0
      %602 = vadd.xlane.f32.xlu0 %v601
      %v603 = vpop.xlane.xlu0 %602
      %v604 = vsel %vm552, %v537, 0.0
      %605 = vadd.xlane.f32.xlu0 %v604
      %v606 = vpop.xlane.xlu0 %605
      %v607 = vsel %vm552, %v538, 0.0
      %608 = vadd.xlane.f32.xlu0 %v607
      %v609 = vpop.xlane.xlu0 %608
      %v610 = vsel %vm552, %v539, 0.0
      %611 = vadd.xlane.f32.xlu0 %v610
      %v612 = vpop.xlane.xlu0 %611
      %v613 = vsel %vm552, %v540, 0.0
      %614 = vadd.xlane.f32.xlu0 %v613
      %v615 = vpop.xlane.xlu0 %614
      %v616 = vsel %vm552, %v541, 0.0
      %617 = vadd.xlane.f32.xlu0 %v616
      %v618 = vpop.xlane.xlu0 %617
      %v619 = vsel %vm552, %v542, 0.0
      %620 = vadd.xlane.f32.xlu0 %v619
      %v621 = vpop.xlane.xlu0 %620
      %v622 = vsel %vm552, %v543, 0.0
      %623 = vadd.xlane.f32.xlu0 %v622
      %v624 = vpop.xlane.xlu0 %623
      %v625 = vsel %vm552, %v544, 0.0
      %626 = vadd.xlane.f32.xlu0 %v625
      %v627 = vpop.xlane.xlu0 %626
      %v628 = vsel %vm552, %v545, 0.0
      %629 = vadd.xlane.f32.xlu0 %v628
      %v630 = vpop.xlane.xlu0 %629
      %v631 = vsel %vm552, %v546, 0.0
      %632 = vadd.xlane.f32.xlu0 %v631
      %v633 = vpop.xlane.xlu0 %632
      %v634 = vsel %vm552, %v547, 0.0
      %635 = vadd.xlane.f32.xlu0 %v634
      %v636 = vpop.xlane.xlu0 %635
      %v637 = vsel %vm552, %v548, 0.0
      %638 = vadd.xlane.f32.xlu0 %v637
      %v639 = vpop.xlane.xlu0 %638
      %v640 = vsel %vm552, %v549, 0.0
      %641 = vadd.xlane.f32.xlu0 %v640
      %v642 = vpop.xlane.xlu0 %641
      %v643 = vsel %vm552, %v550, 0.0
      %644 = vadd.xlane.f32.xlu0 %v643
      %v645 = vpop.xlane.xlu0 %644
      %v646 = vsel %vm552, %v551, 0.0
      %647 = vadd.xlane.f32.xlu0 %v646
      %v648 = vpop.xlane.xlu0 %647
      %vm649 = vcmp.lt.f32.partialorder %v555, 0.05
      %vm650 = vcmp.lt.f32.partialorder %v558, 0.05
      %vm651 = vcmp.lt.f32.partialorder %v561, 0.05
      %vm652 = vcmp.lt.f32.partialorder %v564, 0.05
      %vm653 = vcmp.lt.f32.partialorder %v567, 0.05
      %vm654 = vcmp.lt.f32.partialorder %v570, 0.05
      %vm655 = vcmp.lt.f32.partialorder %v573, 0.05
      %vm656 = vcmp.lt.f32.partialorder %v576, 0.05
      %vm657 = vcmp.lt.f32.partialorder %v579, 0.05
      %vm658 = vcmp.lt.f32.partialorder %v582, 0.05
      %vm659 = vcmp.lt.f32.partialorder %v585, 0.05
      %vm660 = vcmp.lt.f32.partialorder %v588, 0.05
      %vm661 = vcmp.lt.f32.partialorder %v591, 0.05
      %vm662 = vcmp.lt.f32.partialorder %v594, 0.05
      %vm663 = vcmp.lt.f32.partialorder %v597, 0.05
      %vm664 = vcmp.lt.f32.partialorder %v600, 0.05
      %vm665 = vcmp.lt.f32.partialorder %v603, 0.05
      %vm666 = vcmp.lt.f32.partialorder %v606, 0.05
      %vm667 = vcmp.lt.f32.partialorder %v609, 0.05
      %vm668 = vcmp.lt.f32.partialorder %v612, 0.05
      %vm669 = vcmp.lt.f32.partialorder %v615, 0.05
      %vm670 = vcmp.lt.f32.partialorder %v618, 0.05
      %vm671 = vcmp.lt.f32.partialorder %v621, 0.05
      %vm672 = vcmp.lt.f32.partialorder %v624, 0.05
      %vm673 = vcmp.lt.f32.partialorder %v627, 0.05
      %vm674 = vcmp.lt.f32.partialorder %v630, 0.05
      %vm675 = vcmp.lt.f32.partialorder %v633, 0.05
      %vm676 = vcmp.lt.f32.partialorder %v636, 0.05
      %vm677 = vcmp.lt.f32.partialorder %v639, 0.05
      %vm678 = vcmp.lt.f32.partialorder %v642, 0.05
      %vm679 = vcmp.lt.f32.partialorder %v645, 0.05
      %vm680 = vcmp.lt.f32.partialorder %v648, 0.05
      %v681 = vld [vmem:[%s7] sm:$0x3f]
      %v682 = vld [vmem:[%s7 + $0x8] sm:$0x3f]
      %v683 = vld [vmem:[%s7 + $0x10] sm:$0x3f]
      %v684 = vld [vmem:[%s1] sm:$0x7]
      %685 = vset.pattern.permute.xlu0 0
      %686 = vperm.xlu0 %685, %v306
      %v687 = vpop.permute.xlu0 %686
      %689 = vset.pattern.permute.xlu0 0
      %690 = vperm.xlu0 %689, %v307
      %v691 = vpop.permute.xlu0 %690
      %v693 = vlaneseq
      %v694 = vshrl.u32 %v693, 7
      %v695 = vsub.s32 0, %v694
      %v696 = vrot.slane %v684, %v695
      %v697 = vmul.f32 %v687, %v696
      %v698 = vmul.f32 %v691, %v696
      %699 = vset.pattern.permute.xlu0 1
      %700 = vperm.xlu0 %699, %v306
      %v701 = vpop.permute.xlu0 %700
      %703 = vset.pattern.permute.xlu0 1
      %704 = vperm.xlu0 %703, %v307
      %v705 = vpop.permute.xlu0 %704
      %v707 = vlaneseq
      %v708 = vshrl.u32 %v707, 7
      %v709 = vsub.s32 1, %v708
      %v710 = vrot.slane %v684, %v709
      %v711 = vmul.f32 %v701, %v710
      %v712 = vmul.f32 %v705, %v710
      %v713 = vadd.f32 %v697, %v711
      %v714 = vadd.f32 %v698, %v712
      %715 = vset.pattern.permute.xlu0 2
      %716 = vperm.xlu0 %715, %v306
      %v717 = vpop.permute.xlu0 %716
      %719 = vset.pattern.permute.xlu0 2
      %720 = vperm.xlu0 %719, %v307
      %v721 = vpop.permute.xlu0 %720
      %v723 = vlaneseq
      %v724 = vshrl.u32 %v723, 7
      %v725 = vsub.s32 2, %v724
      %v726 = vrot.slane %v684, %v725
      %v727 = vmul.f32 %v717, %v726
      %v728 = vmul.f32 %v721, %v726
      %v729 = vadd.f32 %v713, %v727
      %v730 = vadd.f32 %v714, %v728
      %v731 = vlaneseq
      %v732 = vshrl.u32 %v731, 7
      %v733 = vsub.s32 0, %v732
      %v734 = vrot.slane %v681, %v733
      %v735 = vadd.f32 %v729, %v734
      %v736 = vadd.f32 %v730, %v734
      %v737 = vmax.f32 %v735, 0.0
      %v738 = vmax.f32 %v736, 0.0
      %v739 = vld [vmem:[%s2] sm:$0xff]
      %v740 = vld [vmem:[%s2 + $0x8] sm:$0xff]
      %v741 = vld [vmem:[%s2 + $0x10] sm:$0xff]
      %v742 = vld [vmem:[%s2 + $0x18] sm:$0xff]
      %v743 = vld [vmem:[%s2 + $0x20] sm:$0xff]
      %v744 = vld [vmem:[%s2 + $0x28] sm:$0xff]
      %v745 = vld [vmem:[%s2 + $0x30] sm:$0xff]
      %v746 = vld [vmem:[%s2 + $0x38] sm:$0xff]
      %v747 = vlaneseq
      %v748 = vshrl.u32 %v747, 7
      %v749 = vsub.s32 1, %v748
      %v750 = vrot.slane %v681, %v749
      %vm751 = vcmask 523264
      %v753 = vsel %vm751, %v737, 0
      %v756 = vsel %vm751, %v738, 0
      %758 = vmatprep.subr.mxu0 0.0
      %759 = vmatpush1.msra.mxu0 %v739
      %760 = vmatprep.subr.mxu0 0.0
      %761 = vmatpush1.msra.mxu0 %v740
      %762 = vmatprep.subr.mxu0 0.0
      %763 = vmatpush1.msra.mxu0 %v741
      %764 = vmatprep.subr.mxu0 0.0
      %765 = vmatpush1.msra.mxu0 %v742
      %766 = vmatprep.subr.mxu0 0.0
      %767 = vmatpush1.msra.mxu0 %v743
      %768 = vmatprep.subr.mxu0 0.0
      %769 = vmatpush1.msra.mxu0 %v744
      %770 = vmatprep.subr.mxu0 0.0
      %771 = vmatpush1.msra.mxu0 %v745
      %772 = vmatprep.subr.mxu0 0.0
      %773 = vmatpush1.msra.mxu0 %v746
      %774 = vmatprep.subr.mxu0 0.0
      %775 = vmatpush1.msra.mxu0 0.0
      %776 = vmatprep.subr.mxu0 0.0
      %777 = vmatpush1.msra.mxu0 0.0
      %778 = vmatprep.subr.mxu0 0.0
      %779 = vmatpush1.msra.mxu0 0.0
      %780 = vmatprep.subr.mxu0 0.0
      %781 = vmatpush1.msra.mxu0 0.0
      %782 = vmatprep.subr.mxu0 0.0
      %783 = vmatpush1.msra.mxu0 0.0
      %784 = vmatprep.subr.mxu0 0.0
      %785 = vmatpush1.msra.mxu0 0.0
      %786 = vmatprep.subr.mxu0 0.0
      %787 = vmatpush1.msra.mxu0 0.0
      %788 = vmatprep.subr.mxu0 0.0
      %789 = vmatpush1.msra.mxu0 0.0
      %790 = vmatprep.subr.mxu0 0.0
      %791 = vmatpush1.msra.mxu0 0.0
      %792 = vmatprep.subr.mxu0 0.0
      %793 = vmatpush1.msra.mxu0 0.0
      %794 = vmatprep.subr.mxu0 0.0
      %795 = vmatpush1.msra.mxu0 0.0
      %796 = vmatprep.subr.mxu0 0.0
      %797 = vmatpush1.msra.mxu0 0.0
      %798 = vmatprep.subr.mxu0 0.0
      %799 = vmatpush1.msra.mxu0 0.0
      %800 = vmatprep.subr.mxu0 0.0
      %801 = vmatpush1.msra.mxu0 0.0
      %802 = vmatprep.subr.mxu0 0.0
      %803 = vmatpush1.msra.mxu0 0.0
      %804 = vmatprep.subr.mxu0 0.0
      %805 = vmatpush1.msra.mxu0 0.0
      %806 = vmatprep.subr.mxu0 0.0
      %807 = vmatpush1.msra.mxu0 0.0
      %808 = vmatprep.subr.mxu0 0.0
      %809 = vmatpush1.msra.mxu0 0.0
      %810 = vmatprep.subr.mxu0 0.0
      %811 = vmatpush1.msra.mxu0 0.0
      %812 = vmatprep.subr.mxu0 0.0
      %813 = vmatpush1.msra.mxu0 0.0
      %814 = vmatprep.subr.mxu0 0.0
      %815 = vmatpush1.msra.mxu0 0.0
      %816 = vmatprep.subr.mxu0 0.0
      %817 = vmatpush1.msra.mxu0 0.0
      %818 = vmatprep.subr.mxu0 0.0
      %819 = vmatpush1.msra.mxu0 0.0
      %820 = vmatprep.subr.mxu0 0.0
      %821 = vmatpush1.msra.mxu0 0.0
      %822 = vmatprep.mubr.f32.mxu0 0.0
      %823 = vmatmul.mubr.f32.gmra.mrb[0].mxu0 %v753
      %v824 = vpop.f32.mrb[0].mxu0
      %v825 = vadd.f32 %v750, %v824
      %v826 = vpop.f32.mrb[0].mxu0
      %827 = vmatprep.mubr.f32.mxu0 0.0
      %828 = vmatmul.mubr.f32.gmra.mrb[0].mxu0 %v756
      %v829 = vpop.f32.mrb[0].mxu0
      %v830 = vadd.f32 %v750, %v829
      %v831 = vpop.f32.mrb[0].mxu0
      %832 = vdwg.mxu0
      %v833 = vmax.f32 %v825, 0.0
      %v834 = vmax.f32 %v830, 0.0
      %v835 = vld [vmem:[%s3] sm:$0xff]
      %v836 = vld [vmem:[%s3 + $0x8] sm:$0xff]
      %v837 = vld [vmem:[%s3 + $0x10] sm:$0xff]
      %v838 = vld [vmem:[%s3 + $0x18] sm:$0xff]
      %v839 = vld [vmem:[%s3 + $0x20] sm:$0xff]
      %v840 = vld [vmem:[%s3 + $0x28] sm:$0xff]
      %v841 = vld [vmem:[%s3 + $0x30] sm:$0xff]
      %v842 = vld [vmem:[%s3 + $0x38] sm:$0xff]
      %v843 = vld [vmem:[%s3 + $0x40] sm:$0xff]
      %v844 = vld [vmem:[%s3 + $0x48] sm:$0xff]
      %v845 = vld [vmem:[%s3 + $0x50] sm:$0xff]
      %v846 = vld [vmem:[%s3 + $0x58] sm:$0xff]
      %v847 = vld [vmem:[%s3 + $0x60] sm:$0xff]
      %v848 = vld [vmem:[%s3 + $0x68] sm:$0xff]
      %v849 = vld [vmem:[%s3 + $0x70] sm:$0xff]
      %v850 = vld [vmem:[%s3 + $0x78] sm:$0xff]
      %v851 = vlaneseq
      %v852 = vshrl.u32 %v851, 7
      %v853 = vsub.s32 2, %v852
      %v854 = vrot.slane %v681, %v853
      %855 = vmatprep.subr.mxu0 0.0
      %856 = vmatpush1.msra.mxu0 %v835
      %857 = vmatprep.subr.mxu0 0.0
      %858 = vmatpush1.msra.mxu0 %v836
      %859 = vmatprep.subr.mxu0 0.0
      %860 = vmatpush1.msra.mxu0 %v837
      %861 = vmatprep.subr.mxu0 0.0
      %862 = vmatpush1.msra.mxu0 %v838
      %863 = vmatprep.subr.mxu0 0.0
      %864 = vmatpush1.msra.mxu0 %v839
      %865 = vmatprep.subr.mxu0 0.0
      %866 = vmatpush1.msra.mxu0 %v840
      %867 = vmatprep.subr.mxu0 0.0
      %868 = vmatpush1.msra.mxu0 %v841
      %869 = vmatprep.subr.mxu0 0.0
      %870 = vmatpush1.msra.mxu0 %v842
      %871 = vmatprep.subr.mxu0 0.0
      %872 = vmatpush1.msra.mxu0 %v843
      %873 = vmatprep.subr.mxu0 0.0
      %874 = vmatpush1.msra.mxu0 %v844
      %875 = vmatprep.subr.mxu0 0.0
      %876 = vmatpush1.msra.mxu0 %v845
      %877 = vmatprep.subr.mxu0 0.0
      %878 = vmatpush1.msra.mxu0 %v846
      %879 = vmatprep.subr.mxu0 0.0
      %880 = vmatpush1.msra.mxu0 %v847
      %881 = vmatprep.subr.mxu0 0.0
      %882 = vmatpush1.msra.mxu0 %v848
      %883 = vmatprep.subr.mxu0 0.0
      %884 = vmatpush1.msra.mxu0 %v849
      %885 = vmatprep.subr.mxu0 0.0
      %886 = vmatpush1.msra.mxu0 %v850
      %887 = vmatprep.subr.mxu0 0.0
      %888 = vmatpush1.msra.mxu0 0.0
      %889 = vmatprep.subr.mxu0 0.0
      %890 = vmatpush1.msra.mxu0 0.0
      %891 = vmatprep.subr.mxu0 0.0
      %892 = vmatpush1.msra.mxu0 0.0
      %893 = vmatprep.subr.mxu0 0.0
      %894 = vmatpush1.msra.mxu0 0.0
      %895 = vmatprep.subr.mxu0 0.0
      %896 = vmatpush1.msra.mxu0 0.0
      %897 = vmatprep.subr.mxu0 0.0
      %898 = vmatpush1.msra.mxu0 0.0
      %899 = vmatprep.subr.mxu0 0.0
      %900 = vmatpush1.msra.mxu0 0.0
      %901 = vmatprep.subr.mxu0 0.0
      %902 = vmatpush1.msra.mxu0 0.0
      %903 = vmatprep.subr.mxu0 0.0
      %904 = vmatpush1.msra.mxu0 0.0
      %905 = vmatprep.subr.mxu0 0.0
      %906 = vmatpush1.msra.mxu0 0.0
      %907 = vmatprep.subr.mxu0 0.0
      %908 = vmatpush1.msra.mxu0 0.0
      %909 = vmatprep.subr.mxu0 0.0
      %910 = vmatpush1.msra.mxu0 0.0
      %911 = vmatprep.subr.mxu0 0.0
      %912 = vmatpush1.msra.mxu0 0.0
      %913 = vmatprep.subr.mxu0 0.0
      %914 = vmatpush1.msra.mxu0 0.0
      %915 = vmatprep.subr.mxu0 0.0
      %916 = vmatpush1.msra.mxu0 0.0
      %917 = vmatprep.subr.mxu0 0.0
      %918 = vmatpush1.msra.mxu0 0.0
      %919 = vmatprep.mubr.f32.mxu0 0.0
      %920 = vmatmul.mubr.f32.gmra.mrb[0].mxu0 %v833
      %v921 = vpop.f32.mrb[0].mxu0
      %v922 = vadd.f32 %v854, %v921
      %v923 = vpop.f32.mrb[0].mxu0
      %924 = vmatprep.mubr.f32.mxu0 0.0
      %925 = vmatmul.mubr.f32.gmra.mrb[0].mxu0 %v834
      %v926 = vpop.f32.mrb[0].mxu0
      %v927 = vadd.f32 %v854, %v926
      %v928 = vpop.f32.mrb[0].mxu0
      %929 = vdwg.mxu0
      %v930 = vmax.f32 %v922, 0.0
      %v931 = vmax.f32 %v927, 0.0
      %v932 = vsel %vm649, 1, 0
      %v933 = vsel %vm650, 1, 0
      %v934 = vsel %vm651, 1, 0
      %v935 = vsel %vm652, 1, 0
      %v936 = vsel %vm653, 1, 0
      %v937 = vsel %vm654, 1, 0
      %v938 = vsel %vm655, 1, 0
      %v939 = vsel %vm656, 1, 0
      %v940 = vsel %vm657, 1, 0
      %v941 = vsel %vm658, 1, 0
      %v942 = vsel %vm659, 1, 0
      %v943 = vsel %vm660, 1, 0
      %v944 = vsel %vm661, 1, 0
      %v945 = vsel %vm662, 1, 0
      %v946 = vsel %vm663, 1, 0
      %v947 = vsel %vm664, 1, 0
      %v948 = vsel %vm665, 1, 0
      %v949 = vsel %vm666, 1, 0
      %v950 = vsel %vm667, 1, 0
      %v951 = vsel %vm668, 1, 0
      %v952 = vsel %vm669, 1, 0
      %v953 = vsel %vm670, 1, 0
      %v954 = vsel %vm671, 1, 0
      %v955 = vsel %vm672, 1, 0
      %v956 = vsel %vm673, 1, 0
      %v957 = vsel %vm674, 1, 0
      %v958 = vsel %vm675, 1, 0
      %v959 = vsel %vm676, 1, 0
      %v960 = vsel %vm677, 1, 0
      %v961 = vsel %vm678, 1, 0
      %v962 = vsel %vm679, 1, 0
      %v963 = vsel %vm680, 1, 0
      %vm964 = vcmp.eq.s32.totalorder %v932, 1
      %vm965 = vcmp.eq.s32.totalorder %v933, 1
      %vm966 = vcmp.eq.s32.totalorder %v934, 1
      %vm967 = vcmp.eq.s32.totalorder %v935, 1
      %vm968 = vcmp.eq.s32.totalorder %v936, 1
      %vm969 = vcmp.eq.s32.totalorder %v937, 1
      %vm970 = vcmp.eq.s32.totalorder %v938, 1
      %vm971 = vcmp.eq.s32.totalorder %v939, 1
      %vm972 = vcmp.eq.s32.totalorder %v940, 1
      %vm973 = vcmp.eq.s32.totalorder %v941, 1
      %vm974 = vcmp.eq.s32.totalorder %v942, 1
      %vm975 = vcmp.eq.s32.totalorder %v943, 1
      %vm976 = vcmp.eq.s32.totalorder %v944, 1
      %vm977 = vcmp.eq.s32.totalorder %v945, 1
      %vm978 = vcmp.eq.s32.totalorder %v946, 1
      %vm979 = vcmp.eq.s32.totalorder %v947, 1
      %vm980 = vcmp.eq.s32.totalorder %v948, 1
      %vm981 = vcmp.eq.s32.totalorder %v949, 1
      %vm982 = vcmp.eq.s32.totalorder %v950, 1
      %vm983 = vcmp.eq.s32.totalorder %v951, 1
      %vm984 = vcmp.eq.s32.totalorder %v952, 1
      %vm985 = vcmp.eq.s32.totalorder %v953, 1
      %vm986 = vcmp.eq.s32.totalorder %v954, 1
      %vm987 = vcmp.eq.s32.totalorder %v955, 1
      %vm988 = vcmp.eq.s32.totalorder %v956, 1
      %vm989 = vcmp.eq.s32.totalorder %v957, 1
      %vm990 = vcmp.eq.s32.totalorder %v958, 1
      %vm991 = vcmp.eq.s32.totalorder %v959, 1
      %vm992 = vcmp.eq.s32.totalorder %v960, 1
      %vm993 = vcmp.eq.s32.totalorder %v961, 1
      %vm994 = vcmp.eq.s32.totalorder %v962, 1
      %vm995 = vcmp.eq.s32.totalorder %v963, 1
      %v996 = vsel %vm964, %v930, 0.0
      %v997 = vsel %vm965, %v931, 0.0
      %v998 = vsel %vm966, %v930, 0.0
      %v999 = vsel %vm967, %v931, 0.0
      %v1000 = vsel %vm968, %v930, 0.0
      %v1001 = vsel %vm969, %v931, 0.0
      %v1002 = vsel %vm970, %v930, 0.0
      %v1003 = vsel %vm971, %v931, 0.0
      %v1004 = vsel %vm972, %v930, 0.0
      %v1005 = vsel %vm973, %v931, 0.0
      %v1006 = vsel %vm974, %v930, 0.0
      %v1007 = vsel %vm975, %v931, 0.0
      %v1008 = vsel %vm976, %v930, 0.0
      %v1009 = vsel %vm977, %v931, 0.0
      %v1010 = vsel %vm978, %v930, 0.0
      %v1011 = vsel %vm979, %v931, 0.0
      %v1012 = vsel %vm980, %v930, 0.0
      %v1013 = vsel %vm981, %v931, 0.0
      %v1014 = vsel %vm982, %v930, 0.0
      %v1015 = vsel %vm983, %v931, 0.0
      %v1016 = vsel %vm984, %v930, 0.0
      %v1017 = vsel %vm985, %v931, 0.0
      %v1018 = vsel %vm986, %v930, 0.0
      %v1019 = vsel %vm987, %v931, 0.0
      %v1020 = vsel %vm988, %v930, 0.0
      %v1021 = vsel %vm989, %v931, 0.0
      %v1022 = vsel %vm990, %v930, 0.0
      %v1023 = vsel %vm991, %v931, 0.0
      %v1024 = vsel %vm992, %v930, 0.0
      %v1025 = vsel %vm993, %v931, 0.0
      %v1026 = vsel %vm994, %v930, 0.0
      %v1027 = vsel %vm995, %v931, 0.0
      %v1028 = vmax.f32 %v996, %v997
      %v1029 = vrot.slane %v1028, 4
      %v1030 = vmax.f32 %v1028, %v1029
      %v1031 = vrot.slane %v1030, 2
      %v1032 = vmax.f32 %v1030, %v1031
      %v1033 = vrot.slane %v1032, 1
      %v1034 = vmax.f32 %v1032, %v1033
      %v1035 = vmax.f32 %v998, %v999
      %v1036 = vrot.slane %v1035, 4
      %v1037 = vmax.f32 %v1035, %v1036
      %v1038 = vrot.slane %v1037, 2
      %v1039 = vmax.f32 %v1037, %v1038
      %v1040 = vrot.slane %v1039, 1
      %v1041 = vmax.f32 %v1039, %v1040
      %v1042 = vmax.f32 %v1000, %v1001
      %v1043 = vrot.slane %v1042, 4
      %v1044 = vmax.f32 %v1042, %v1043
      %v1045 = vrot.slane %v1044, 2
      %v1046 = vmax.f32 %v1044, %v1045
      %v1047 = vrot.slane %v1046, 1
      %v1048 = vmax.f32 %v1046, %v1047
      %v1049 = vmax.f32 %v1002, %v1003
      %v1050 = vrot.slane %v1049, 4
      %v1051 = vmax.f32 %v1049, %v1050
      %v1052 = vrot.slane %v1051, 2
      %v1053 = vmax.f32 %v1051, %v1052
      %v1054 = vrot.slane %v1053, 1
      %v1055 = vmax.f32 %v1053, %v1054
      %v1056 = vmax.f32 %v1004, %v1005
      %v1057 = vrot.slane %v1056, 4
      %v1058 = vmax.f32 %v1056, %v1057
      %v1059 = vrot.slane %v1058, 2
      %v1060 = vmax.f32 %v1058, %v1059
      %v1061 = vrot.slane %v1060, 1
      %v1062 = vmax.f32 %v1060, %v1061
      %v1063 = vmax.f32 %v1006, %v1007
      %v1064 = vrot.slane %v1063, 4
      %v1065 = vmax.f32 %v1063, %v1064
      %v1066 = vrot.slane %v1065, 2
      %v1067 = vmax.f32 %v1065, %v1066
      %v1068 = vrot.slane %v1067, 1
      %v1069 = vmax.f32 %v1067, %v1068
      %v1070 = vmax.f32 %v1008, %v1009
      %v1071 = vrot.slane %v1070, 4
      %v1072 = vmax.f32 %v1070, %v1071
      %v1073 = vrot.slane %v1072, 2
      %v1074 = vmax.f32 %v1072, %v1073
      %v1075 = vrot.slane %v1074, 1
      %v1076 = vmax.f32 %v1074, %v1075
      %v1077 = vmax.f32 %v1010, %v1011
      %v1078 = vrot.slane %v1077, 4
      %v1079 = vmax.f32 %v1077, %v1078
      %v1080 = vrot.slane %v1079, 2
      %v1081 = vmax.f32 %v1079, %v1080
      %v1082 = vrot.slane %v1081, 1
      %v1083 = vmax.f32 %v1081, %v1082
      %v1084 = vmax.f32 %v1012, %v1013
      %v1085 = vrot.slane %v1084, 4
      %v1086 = vmax.f32 %v1084, %v1085
      %v1087 = vrot.slane %v1086, 2
      %v1088 = vmax.f32 %v1086, %v1087
      %v1089 = vrot.slane %v1088, 1
      %v1090 = vmax.f32 %v1088, %v1089
      %v1091 = vmax.f32 %v1014, %v1015
      %v1092 = vrot.slane %v1091, 4
      %v1093 = vmax.f32 %v1091, %v1092
      %v1094 = vrot.slane %v1093, 2
      %v1095 = vmax.f32 %v1093, %v1094
      %v1096 = vrot.slane %v1095, 1
      %v1097 = vmax.f32 %v1095, %v1096
      %v1098 = vmax.f32 %v1016, %v1017
      %v1099 = vrot.slane %v1098, 4
      %v1100 = vmax.f32 %v1098, %v1099
      %v1101 = vrot.slane %v1100, 2
      %v1102 = vmax.f32 %v1100, %v1101
      %v1103 = vrot.slane %v1102, 1
      %v1104 = vmax.f32 %v1102, %v1103
      %v1105 = vmax.f32 %v1018, %v1019
      %v1106 = vrot.slane %v1105, 4
      %v1107 = vmax.f32 %v1105, %v1106
      %v1108 = vrot.slane %v1107, 2
      %v1109 = vmax.f32 %v1107, %v1108
      %v1110 = vrot.slane %v1109, 1
      %v1111 = vmax.f32 %v1109, %v1110
      %v1112 = vmax.f32 %v1020, %v1021
      %v1113 = vrot.slane %v1112, 4
      %v1114 = vmax.f32 %v1112, %v1113
      %v1115 = vrot.slane %v1114, 2
      %v1116 = vmax.f32 %v1114, %v1115
      %v1117 = vrot.slane %v1116, 1
      %v1118 = vmax.f32 %v1116, %v1117
      %v1119 = vmax.f32 %v1022, %v1023
      %v1120 = vrot.slane %v1119, 4
      %v1121 = vmax.f32 %v1119, %v1120
      %v1122 = vrot.slane %v1121, 2
      %v1123 = vmax.f32 %v1121, %v1122
      %v1124 = vrot.slane %v1123, 1
      %v1125 = vmax.f32 %v1123, %v1124
      %v1126 = vmax.f32 %v1024, %v1025
      %v1127 = vrot.slane %v1126, 4
      %v1128 = vmax.f32 %v1126, %v1127
      %v1129 = vrot.slane %v1128, 2
      %v1130 = vmax.f32 %v1128, %v1129
      %v1131 = vrot.slane %v1130, 1
      %v1132 = vmax.f32 %v1130, %v1131
      %v1133 = vmax.f32 %v1026, %v1027
      %v1134 = vrot.slane %v1133, 4
      %v1135 = vmax.f32 %v1133, %v1134
      %v1136 = vrot.slane %v1135, 2
      %v1137 = vmax.f32 %v1135, %v1136
      %v1138 = vrot.slane %v1137, 1
      %v1139 = vmax.f32 %v1137, %v1138
      %v1140 = vmax.f32 %v1034, 0.0
      %v1141 = vmax.f32 %v1041, 0.0
      %v1142 = vmax.f32 %v1048, 0.0
      %v1143 = vmax.f32 %v1055, 0.0
      %v1144 = vmax.f32 %v1062, 0.0
      %v1145 = vmax.f32 %v1069, 0.0
      %v1146 = vmax.f32 %v1076, 0.0
      %v1147 = vmax.f32 %v1083, 0.0
      %v1148 = vmax.f32 %v1090, 0.0
      %v1149 = vmax.f32 %v1097, 0.0
      %v1150 = vmax.f32 %v1104, 0.0
      %v1151 = vmax.f32 %v1111, 0.0
      %v1152 = vmax.f32 %v1118, 0.0
      %v1153 = vmax.f32 %v1125, 0.0
      %v1154 = vmax.f32 %v1132, 0.0
      %v1155 = vmax.f32 %v1139, 0.0
      %v1156 = vld [vmem:[%s4] sm:$0xff]
      %v1157 = vld [vmem:[%s4 + $0x8] sm:$0xff]
      %v1158 = vld [vmem:[%s4 + $0x10] sm:$0xff]
      %v1159 = vld [vmem:[%s4 + $0x18] sm:$0xff]
      %v1160 = vld [vmem:[%s4 + $0x20] sm:$0xff]
      %v1161 = vld [vmem:[%s4 + $0x28] sm:$0xff]
      %v1162 = vld [vmem:[%s4 + $0x30] sm:$0xff]
      %v1163 = vld [vmem:[%s4 + $0x38] sm:$0xff]
      %v1164 = vld [vmem:[%s4 + $0x40] sm:$0xff]
      %v1165 = vld [vmem:[%s4 + $0x48] sm:$0xff]
      %v1166 = vld [vmem:[%s4 + $0x50] sm:$0xff]
      %v1167 = vld [vmem:[%s4 + $0x58] sm:$0xff]
      %v1168 = vld [vmem:[%s4 + $0x60] sm:$0xff]
      %v1169 = vld [vmem:[%s4 + $0x68] sm:$0xff]
      %v1170 = vld [vmem:[%s4 + $0x70] sm:$0xff]
      %v1171 = vld [vmem:[%s4 + $0x78] sm:$0xff]
      %v1172 = vlaneseq
      %v1173 = vshrl.u32 %v1172, 7
      %v1174 = vsub.s32 3, %v1173
      %v1175 = vrot.slane %v681, %v1174
      %vm1192 = vcmask 1041409
      %v1193 = vsel %vm1192, %v1141, %v1140
      %vm1194 = vcmask 1042434
      %v1195 = vsel %vm1194, %v1142, %v1193
      %vm1196 = vcmask 1043459
      %v1197 = vsel %vm1196, %v1143, %v1195
      %vm1198 = vcmask 1044484
      %v1199 = vsel %vm1198, %v1144, %v1197
      %vm1200 = vcmask 1045509
      %v1201 = vsel %vm1200, %v1145, %v1199
      %vm1202 = vcmask 1046534
      %v1203 = vsel %vm1202, %v1146, %v1201
      %vm1204 = vcmask 1047559
      %v1205 = vsel %vm1204, %v1147, %v1203
      %v1206 = vsel %vm1192, %v1149, %v1148
      %v1207 = vsel %vm1194, %v1150, %v1206
      %v1208 = vsel %vm1196, %v1151, %v1207
      %v1209 = vsel %vm1198, %v1152, %v1208
      %v1210 = vsel %vm1200, %v1153, %v1209
      %v1211 = vsel %vm1202, %v1154, %v1210
      %v1212 = vsel %vm1204, %v1155, %v1211
      %1215 = vmatprep.subr.mxu0 0.0
      %1216 = vmatpush1.msra.mxu0 %v1156
      %1217 = vmatprep.subr.mxu0 0.0
      %1218 = vmatpush1.msra.mxu0 %v1157
      %1219 = vmatprep.subr.mxu0 0.0
      %1220 = vmatpush1.msra.mxu0 %v1158
      %1221 = vmatprep.subr.mxu0 0.0
      %1222 = vmatpush1.msra.mxu0 %v1159
      %1223 = vmatprep.subr.mxu0 0.0
      %1224 = vmatpush1.msra.mxu0 %v1160
      %1225 = vmatprep.subr.mxu0 0.0
      %1226 = vmatpush1.msra.mxu0 %v1161
      %1227 = vmatprep.subr.mxu0 0.0
      %1228 = vmatpush1.msra.mxu0 %v1162
      %1229 = vmatprep.subr.mxu0 0.0
      %1230 = vmatpush1.msra.mxu0 %v1163
      %1231 = vmatprep.subr.mxu0 0.0
      %1232 = vmatpush1.msra.mxu0 %v1164
      %1233 = vmatprep.subr.mxu0 0.0
      %1234 = vmatpush1.msra.mxu0 %v1165
      %1235 = vmatprep.subr.mxu0 0.0
      %1236 = vmatpush1.msra.mxu0 %v1166
      %1237 = vmatprep.subr.mxu0 0.0
      %1238 = vmatpush1.msra.mxu0 %v1167
      %1239 = vmatprep.subr.mxu0 0.0
      %1240 = vmatpush1.msra.mxu0 %v1168
      %1241 = vmatprep.subr.mxu0 0.0
      %1242 = vmatpush1.msra.mxu0 %v1169
      %1243 = vmatprep.subr.mxu0 0.0
      %1244 = vmatpush1.msra.mxu0 %v1170
      %1245 = vmatprep.subr.mxu0 0.0
      %1246 = vmatpush1.msra.mxu0 %v1171
      %1247 = vmatprep.subr.mxu0 0.0
      %1248 = vmatpush1.msra.mxu0 0.0
      %1249 = vmatprep.subr.mxu0 0.0
      %1250 = vmatpush1.msra.mxu0 0.0
      %1251 = vmatprep.subr.mxu0 0.0
      %1252 = vmatpush1.msra.mxu0 0.0
      %1253 = vmatprep.subr.mxu0 0.0
      %1254 = vmatpush1.msra.mxu0 0.0
      %1255 = vmatprep.subr.mxu0 0.0
      %1256 = vmatpush1.msra.mxu0 0.0
      %1257 = vmatprep.subr.mxu0 0.0
      %1258 = vmatpush1.msra.mxu0 0.0
      %1259 = vmatprep.subr.mxu0 0.0
      %1260 = vmatpush1.msra.mxu0 0.0
      %1261 = vmatprep.subr.mxu0 0.0
      %1262 = vmatpush1.msra.mxu0 0.0
      %1263 = vmatprep.subr.mxu0 0.0
      %1264 = vmatpush1.msra.mxu0 0.0
      %1265 = vmatprep.subr.mxu0 0.0
      %1266 = vmatpush1.msra.mxu0 0.0
      %1267 = vmatprep.subr.mxu0 0.0
      %1268 = vmatpush1.msra.mxu0 0.0
      %1269 = vmatprep.subr.mxu0 0.0
      %1270 = vmatpush1.msra.mxu0 0.0
      %1271 = vmatprep.subr.mxu0 0.0
      %1272 = vmatpush1.msra.mxu0 0.0
      %1273 = vmatprep.subr.mxu0 0.0
      %1274 = vmatpush1.msra.mxu0 0.0
      %1275 = vmatprep.subr.mxu0 0.0
      %1276 = vmatpush1.msra.mxu0 0.0
      %1277 = vmatprep.subr.mxu0 0.0
      %1278 = vmatpush1.msra.mxu0 0.0
      %1279 = vmatprep.mubr.f32.mxu0 0.0
      %1280 = vmatmul.mubr.f32.gmra.mrb[0].mxu0 %v1205
      %v1281 = vpop.f32.mrb[0].mxu0
      %v1282 = vadd.f32 %v1175, %v1281
      %v1283 = vpop.f32.mrb[0].mxu0
      %1284 = vmatprep.mubr.f32.mxu0 0.0
      %1285 = vmatmul.mubr.f32.gmra.mrb[0].mxu0 %v1212
      %v1286 = vpop.f32.mrb[0].mxu0
      %v1287 = vadd.f32 %v1175, %v1286
      %v1288 = vpop.f32.mrb[0].mxu0
      %1289 = vdwg.mxu0
      %v1290 = vmax.f32 %v1282, 0.0
      %v1291 = vmax.f32 %v1287, 0.0
      %v1292 = vld [vmem:[%s5] sm:$0xff]
      %v1293 = vld [vmem:[%s5 + $0x8] sm:$0xff]
      %v1294 = vld [vmem:[%s5 + $0x10] sm:$0xff]
      %v1295 = vld [vmem:[%s5 + $0x18] sm:$0xff]
      %v1296 = vld [vmem:[%s5 + $0x20] sm:$0xff]
      %v1297 = vld [vmem:[%s5 + $0x28] sm:$0xff]
      %v1298 = vld [vmem:[%s5 + $0x30] sm:$0xff]
      %v1299 = vld [vmem:[%s5 + $0x38] sm:$0xff]
      %v1300 = vlaneseq
      %v1301 = vshrl.u32 %v1300, 7
      %v1302 = vsub.s32 4, %v1301
      %v1303 = vrot.slane %v681, %v1302
      %v1305 = vsel %vm751, %v1290, 0
      %v1308 = vsel %vm751, %v1291, 0
      %1310 = vmatprep.subr.mxu0 0.0
      %1311 = vmatpush1.msra.mxu0 %v1292
      %1312 = vmatprep.subr.mxu0 0.0
      %1313 = vmatpush1.msra.mxu0 %v1293
      %1314 = vmatprep.subr.mxu0 0.0
      %1315 = vmatpush1.msra.mxu0 %v1294
      %1316 = vmatprep.subr.mxu0 0.0
      %1317 = vmatpush1.msra.mxu0 %v1295
      %1318 = vmatprep.subr.mxu0 0.0
      %1319 = vmatpush1.msra.mxu0 %v1296
      %1320 = vmatprep.subr.mxu0 0.0
      %1321 = vmatpush1.msra.mxu0 %v1297
      %1322 = vmatprep.subr.mxu0 0.0
      %1323 = vmatpush1.msra.mxu0 %v1298
      %1324 = vmatprep.subr.mxu0 0.0
      %1325 = vmatpush1.msra.mxu0 %v1299
      %1326 = vmatprep.subr.mxu0 0.0
      %1327 = vmatpush1.msra.mxu0 0.0
      %1328 = vmatprep.subr.mxu0 0.0
      %1329 = vmatpush1.msra.mxu0 0.0
      %1330 = vmatprep.subr.mxu0 0.0
      %1331 = vmatpush1.msra.mxu0 0.0
      %1332 = vmatprep.subr.mxu0 0.0
      %1333 = vmatpush1.msra.mxu0 0.0
      %1334 = vmatprep.subr.mxu0 0.0
      %1335 = vmatpush1.msra.mxu0 0.0
      %1336 = vmatprep.subr.mxu0 0.0
      %1337 = vmatpush1.msra.mxu0 0.0
      %1338 = vmatprep.subr.mxu0 0.0
      %1339 = vmatpush1.msra.mxu0 0.0
      %1340 = vmatprep.subr.mxu0 0.0
      %1341 = vmatpush1.msra.mxu0 0.0
      %1342 = vmatprep.subr.mxu0 0.0
      %1343 = vmatpush1.msra.mxu0 0.0
      %1344 = vmatprep.subr.mxu0 0.0
      %1345 = vmatpush1.msra.mxu0 0.0
      %1346 = vmatprep.subr.mxu0 0.0
      %1347 = vmatpush1.msra.mxu0 0.0
      %1348 = vmatprep.subr.mxu0 0.0
      %1349 = vmatpush1.msra.mxu0 0.0
      %1350 = vmatprep.subr.mxu0 0.0
      %1351 = vmatpush1.msra.mxu0 0.0
      %1352 = vmatprep.subr.mxu0 0.0
      %1353 = vmatpush1.msra.mxu0 0.0
      %1354 = vmatprep.subr.mxu0 0.0
      %1355 = vmatpush1.msra.mxu0 0.0
      %1356 = vmatprep.subr.mxu0 0.0
      %1357 = vmatpush1.msra.mxu0 0.0
      %1358 = vmatprep.subr.mxu0 0.0
      %1359 = vmatpush1.msra.mxu0 0.0
      %1360 = vmatprep.subr.mxu0 0.0
      %1361 = vmatpush1.msra.mxu0 0.0
      %1362 = vmatprep.subr.mxu0 0.0
      %1363 = vmatpush1.msra.mxu0 0.0
      %1364 = vmatprep.subr.mxu0 0.0
      %1365 = vmatpush1.msra.mxu0 0.0
      %1366 = vmatprep.subr.mxu0 0.0
      %1367 = vmatpush1.msra.mxu0 0.0
      %1368 = vmatprep.subr.mxu0 0.0
      %1369 = vmatpush1.msra.mxu0 0.0
      %1370 = vmatprep.subr.mxu0 0.0
      %1371 = vmatpush1.msra.mxu0 0.0
      %1372 = vmatprep.subr.mxu0 0.0
      %1373 = vmatpush1.msra.mxu0 0.0
      %1374 = vmatprep.mubr.f32.mxu0 0.0
      %1375 = vmatmul.mubr.f32.gmra.mrb[0].mxu0 %v1305
      %v1376 = vpop.f32.mrb[0].mxu0
      %v1377 = vadd.f32 %v1303, %v1376
      %v1378 = vpop.f32.mrb[0].mxu0
      %1379 = vmatprep.mubr.f32.mxu0 0.0
      %1380 = vmatmul.mubr.f32.gmra.mrb[0].mxu0 %v1308
      %v1381 = vpop.f32.mrb[0].mxu0
      %v1382 = vadd.f32 %v1303, %v1381
      %v1383 = vpop.f32.mrb[0].mxu0
      %1384 = vdwg.mxu0
      %v1385 = vmax.f32 %v1377, 0.0
      %v1386 = vmax.f32 %v1382, 0.0
      %v1387 = vld [vmem:[%s6] sm:$0xff]
      %v1388 = vld [vmem:[%s6 + $0x8] sm:$0xff]
      %v1389 = vld [vmem:[%s6 + $0x10] sm:$0xff]
      %v1390 = vld [vmem:[%s6 + $0x18] sm:$0xff]
      %v1391 = vlaneseq
      %v1392 = vshrl.u32 %v1391, 7
      %v1393 = vsub.s32 5, %v1392
      %v1394 = vrot.slane %v681, %v1393
      %vm1395 = vcmask 261120
      %v1397 = vsel %vm1395, %v1385, 0
      %v1400 = vsel %vm1395, %v1386, 0
      %1402 = vmatprep.subr.mxu0 0.0
      %1403 = vmatpush1.msra.mxu0 %v1387
      %1404 = vmatprep.subr.mxu0 0.0
      %1405 = vmatpush1.msra.mxu0 %v1388
      %1406 = vmatprep.subr.mxu0 0.0
      %1407 = vmatpush1.msra.mxu0 %v1389
      %1408 = vmatprep.subr.mxu0 0.0
      %1409 = vmatpush1.msra.mxu0 %v1390
      %1410 = vmatprep.subr.mxu0 0.0
      %1411 = vmatpush1.msra.mxu0 0.0
      %1412 = vmatprep.subr.mxu0 0.0
      %1413 = vmatpush1.msra.mxu0 0.0
      %1414 = vmatprep.subr.mxu0 0.0
      %1415 = vmatpush1.msra.mxu0 0.0
      %1416 = vmatprep.subr.mxu0 0.0
      %1417 = vmatpush1.msra.mxu0 0.0
      %1418 = vmatprep.subr.mxu0 0.0
      %1419 = vmatpush1.msra.mxu0 0.0
      %1420 = vmatprep.subr.mxu0 0.0
      %1421 = vmatpush1.msra.mxu0 0.0
      %1422 = vmatprep.subr.mxu0 0.0
      %1423 = vmatpush1.msra.mxu0 0.0
      %1424 = vmatprep.subr.mxu0 0.0
      %1425 = vmatpush1.msra.mxu0 0.0
      %1426 = vmatprep.subr.mxu0 0.0
      %1427 = vmatpush1.msra.mxu0 0.0
      %1428 = vmatprep.subr.mxu0 0.0
      %1429 = vmatpush1.msra.mxu0 0.0
      %1430 = vmatprep.subr.mxu0 0.0
      %1431 = vmatpush1.msra.mxu0 0.0
      %1432 = vmatprep.subr.mxu0 0.0
      %1433 = vmatpush1.msra.mxu0 0.0
      %1434 = vmatprep.subr.mxu0 0.0
      %1435 = vmatpush1.msra.mxu0 0.0
      %1436 = vmatprep.subr.mxu0 0.0
      %1437 = vmatpush1.msra.mxu0 0.0
      %1438 = vmatprep.subr.mxu0 0.0
      %1439 = vmatpush1.msra.mxu0 0.0
      %1440 = vmatprep.subr.mxu0 0.0
      %1441 = vmatpush1.msra.mxu0 0.0
      %1442 = vmatprep.subr.mxu0 0.0
      %1443 = vmatpush1.msra.mxu0 0.0
      %1444 = vmatprep.subr.mxu0 0.0
      %1445 = vmatpush1.msra.mxu0 0.0
      %1446 = vmatprep.subr.mxu0 0.0
      %1447 = vmatpush1.msra.mxu0 0.0
      %1448 = vmatprep.subr.mxu0 0.0
      %1449 = vmatpush1.msra.mxu0 0.0
      %1450 = vmatprep.subr.mxu0 0.0
      %1451 = vmatpush1.msra.mxu0 0.0
      %1452 = vmatprep.subr.mxu0 0.0
      %1453 = vmatpush1.msra.mxu0 0.0
      %1454 = vmatprep.subr.mxu0 0.0
      %1455 = vmatpush1.msra.mxu0 0.0
      %1456 = vmatprep.subr.mxu0 0.0
      %1457 = vmatpush1.msra.mxu0 0.0
      %1458 = vmatprep.subr.mxu0 0.0
      %1459 = vmatpush1.msra.mxu0 0.0
      %1460 = vmatprep.subr.mxu0 0.0
      %1461 = vmatpush1.msra.mxu0 0.0
      %1462 = vmatprep.subr.mxu0 0.0
      %1463 = vmatpush1.msra.mxu0 0.0
      %1464 = vmatprep.subr.mxu0 0.0
      %1465 = vmatpush1.msra.mxu0 0.0
      %1466 = vmatprep.mubr.f32.mxu0 0.0
      %1467 = vmatmul.mubr.f32.gmra.mrb[0].mxu0 %v1397
      %v1468 = vpop.f32.mrb[0].mxu0
      %v1469 = vadd.f32 %v1394, %v1468
      %v1470 = vpop.f32.mrb[0].mxu0
      %1471 = vmatprep.mubr.f32.mxu0 0.0
      %1472 = vmatmul.mubr.f32.gmra.mrb[0].mxu0 %v1400
      %v1473 = vpop.f32.mrb[0].mxu0
      %v1474 = vadd.f32 %v1394, %v1473
      %v1475 = vpop.f32.mrb[0].mxu0
      %1476 = vdwg.mxu0
      %v1477 = vmax.f32 %v1469, 0.0
      %v1478 = vmax.f32 %v1474, 0.0
      %v1479 = vadd.f32 %v1477, %v306
      %v1480 = vadd.f32 %v1478, %v307
      %s1481 = scalar_lea.vmem %s1, 4
      %v1482 = vld [vmem:[%s1481] sm:$0x7]
      %1484 = vset.pattern.permute.xlu0 0
      %1485 = vperm.xlu0 %1484, %v1479
      %v1486 = vpop.permute.xlu0 %1485
      %1489 = vset.pattern.permute.xlu0 0
      %1490 = vperm.xlu0 %1489, %v1480
      %v1491 = vpop.permute.xlu0 %1490
      %v1493 = vlaneseq
      %v1494 = vshrl.u32 %v1493, 7
      %v1495 = vsub.s32 0, %v1494
      %v1496 = vrot.slane %v1482, %v1495
      %v1497 = vmul.f32 %v1486, %v1496
      %v1498 = vmul.f32 %v1491, %v1496
      %1499 = vset.pattern.permute.xlu0 1
      %1500 = vperm.xlu0 %1499, %v1479
      %v1501 = vpop.permute.xlu0 %1500
      %1503 = vset.pattern.permute.xlu0 1
      %1504 = vperm.xlu0 %1503, %v1480
      %v1505 = vpop.permute.xlu0 %1504
      %v1507 = vlaneseq
      %v1508 = vshrl.u32 %v1507, 7
      %v1509 = vsub.s32 1, %v1508
      %v1510 = vrot.slane %v1482, %v1509
      %v1511 = vmul.f32 %v1501, %v1510
      %v1512 = vmul.f32 %v1505, %v1510
      %v1513 = vadd.f32 %v1497, %v1511
      %v1514 = vadd.f32 %v1498, %v1512
      %1515 = vset.pattern.permute.xlu0 2
      %1516 = vperm.xlu0 %1515, %v1479
      %v1517 = vpop.permute.xlu0 %1516
      %1519 = vset.pattern.permute.xlu0 2
      %1520 = vperm.xlu0 %1519, %v1480
      %v1521 = vpop.permute.xlu0 %1520
      %v1523 = vlaneseq
      %v1524 = vshrl.u32 %v1523, 7
      %v1525 = vsub.s32 2, %v1524
      %v1526 = vrot.slane %v1482, %v1525
      %v1527 = vmul.f32 %v1517, %v1526
      %v1528 = vmul.f32 %v1521, %v1526
      %v1529 = vadd.f32 %v1513, %v1527
      %v1530 = vadd.f32 %v1514, %v1528
      %v1531 = vlaneseq
      %v1532 = vshrl.u32 %v1531, 7
      %v1533 = vsub.s32 0, %v1532
      %v1534 = vrot.slane %v682, %v1533
      %v1535 = vadd.f32 %v1529, %v1534
      %v1536 = vadd.f32 %v1530, %v1534
      %v1537 = vmax.f32 %v1535, 0.0
      %v1538 = vmax.f32 %v1536, 0.0
      %s1539 = scalar_lea.vmem %s2, 64
      %v1540 = vld [vmem:[%s1539] sm:$0xff]
      %v1541 = vld [vmem:[%s1539 + $0x8] sm:$0xff]
      %v1542 = vld [vmem:[%s1539 + $0x10] sm:$0xff]
      %v1543 = vld [vmem:[%s1539 + $0x18] sm:$0xff]
      %v1544 = vld [vmem:[%s1539 + $0x20] sm:$0xff]
      %v1545 = vld [vmem:[%s1539 + $0x28] sm:$0xff]
      %v1546 = vld [vmem:[%s1539 + $0x30] sm:$0xff]
      %v1547 = vld [vmem:[%s1539 + $0x38] sm:$0xff]
      %v1548 = vlaneseq
      %v1549 = vshrl.u32 %v1548, 7
      %v1550 = vsub.s32 1, %v1549
      %v1551 = vrot.slane %v682, %v1550
      %v1553 = vsel %vm751, %v1537, 0
      %v1556 = vsel %vm751, %v1538, 0
      %1558 = vmatprep.subr.mxu0 0.0
      %1559 = vmatpush1.msra.mxu0 %v1540
      %1560 = vmatprep.subr.mxu0 0.0
      %1561 = vmatpush1.msra.mxu0 %v1541
      %1562 = vmatprep.subr.mxu0 0.0
      %1563 = vmatpush1.msra.mxu0 %v1542
      %1564 = vmatprep.subr.mxu0 0.0
      %1565 = vmatpush1.msra.mxu0 %v1543
      %1566 = vmatprep.subr.mxu0 0.0
      %1567 = vmatpush1.msra.mxu0 %v1544
      %1568 = vmatprep.subr.mxu0 0.0
      %1569 = vmatpush1.msra.mxu0 %v1545
      %1570 = vmatprep.subr.mxu0 0.0
      %1571 = vmatpush1.msra.mxu0 %v1546
      %1572 = vmatprep.subr.mxu0 0.0
      %1573 = vmatpush1.msra.mxu0 %v1547
      %1574 = vmatprep.subr.mxu0 0.0
      %1575 = vmatpush1.msra.mxu0 0.0
      %1576 = vmatprep.subr.mxu0 0.0
      %1577 = vmatpush1.msra.mxu0 0.0
      %1578 = vmatprep.subr.mxu0 0.0
      %1579 = vmatpush1.msra.mxu0 0.0
      %1580 = vmatprep.subr.mxu0 0.0
      %1581 = vmatpush1.msra.mxu0 0.0
      %1582 = vmatprep.subr.mxu0 0.0
      %1583 = vmatpush1.msra.mxu0 0.0
      %1584 = vmatprep.subr.mxu0 0.0
      %1585 = vmatpush1.msra.mxu0 0.0
      %1586 = vmatprep.subr.mxu0 0.0
      %1587 = vmatpush1.msra.mxu0 0.0
      %1588 = vmatprep.subr.mxu0 0.0
      %1589 = vmatpush1.msra.mxu0 0.0
      %1590 = vmatprep.subr.mxu0 0.0
      %1591 = vmatpush1.msra.mxu0 0.0
      %1592 = vmatprep.subr.mxu0 0.0
      %1593 = vmatpush1.msra.mxu0 0.0
      %1594 = vmatprep.subr.mxu0 0.0
      %1595 = vmatpush1.msra.mxu0 0.0
      %1596 = vmatprep.subr.mxu0 0.0
      %1597 = vmatpush1.msra.mxu0 0.0
      %1598 = vmatprep.subr.mxu0 0.0
      %1599 = vmatpush1.msra.mxu0 0.0
      %1600 = vmatprep.subr.mxu0 0.0
      %1601 = vmatpush1.msra.mxu0 0.0
      %1602 = vmatprep.subr.mxu0 0.0
      %1603 = vmatpush1.msra.mxu0 0.0
      %1604 = vmatprep.subr.mxu0 0.0
      %1605 = vmatpush1.msra.mxu0 0.0
      %1606 = vmatprep.subr.mxu0 0.0
      %1607 = vmatpush1.msra.mxu0 0.0
      %1608 = vmatprep.subr.mxu0 0.0
      %1609 = vmatpush1.msra.mxu0 0.0
      %1610 = vmatprep.subr.mxu0 0.0
      %1611 = vmatpush1.msra.mxu0 0.0
      %1612 = vmatprep.subr.mxu0 0.0
      %1613 = vmatpush1.msra.mxu0 0.0
      %1614 = vmatprep.subr.mxu0 0.0
      %1615 = vmatpush1.msra.mxu0 0.0
      %1616 = vmatprep.subr.mxu0 0.0
      %1617 = vmatpush1.msra.mxu0 0.0
      %1618 = vmatprep.subr.mxu0 0.0
      %1619 = vmatpush1.msra.mxu0 0.0
      %1620 = vmatprep.subr.mxu0 0.0
      %1621 = vmatpush1.msra.mxu0 0.0
      %1622 = vmatprep.mubr.f32.mxu0 0.0
      %1623 = vmatmul.mubr.f32.gmra.mrb[0].mxu0 %v1553
      %v1624 = vpop.f32.mrb[0].mxu0
      %v1625 = vadd.f32 %v1551, %v1624
      %v1626 = vpop.f32.mrb[0].mxu0
      %1627 = vmatprep.mubr.f32.mxu0 0.0
      %1628 = vmatmul.mubr.f32.gmra.mrb[0].mxu0 %v1556
      %v1629 = vpop.f32.mrb[0].mxu0
      %v1630 = vadd.f32 %v1551, %v1629
      %v1631 = vpop.f32.mrb[0].mxu0
      %1632 = vdwg.mxu0
      %v1633 = vmax.f32 %v1625, 0.0
      %v1634 = vmax.f32 %v1630, 0.0
      %s1635 = scalar_lea.vmem %s3, 128
      %v1636 = vld [vmem:[%s1635] sm:$0xff]
      %v1637 = vld [vmem:[%s1635 + $0x8] sm:$0xff]
      %v1638 = vld [vmem:[%s1635 + $0x10] sm:$0xff]
      %v1639 = vld [vmem:[%s1635 + $0x18] sm:$0xff]
      %v1640 = vld [vmem:[%s1635 + $0x20] sm:$0xff]
      %v1641 = vld [vmem:[%s1635 + $0x28] sm:$0xff]
      %v1642 = vld [vmem:[%s1635 + $0x30] sm:$0xff]
      %v1643 = vld [vmem:[%s1635 + $0x38] sm:$0xff]
      %v1644 = vld [vmem:[%s1635 + $0x40] sm:$0xff]
      %v1645 = vld [vmem:[%s1635 + $0x48] sm:$0xff]
      %v1646 = vld [vmem:[%s1635 + $0x50] sm:$0xff]
      %v1647 = vld [vmem:[%s1635 + $0x58] sm:$0xff]
      %v1648 = vld [vmem:[%s1635 + $0x60] sm:$0xff]
      %v1649 = vld [vmem:[%s1635 + $0x68] sm:$0xff]
      %v1650 = vld [vmem:[%s1635 + $0x70] sm:$0xff]
      %v1651 = vld [vmem:[%s1635 + $0x78] sm:$0xff]
      %v1652 = vlaneseq
      %v1653 = vshrl.u32 %v1652, 7
      %v1654 = vsub.s32 2, %v1653
      %v1655 = vrot.slane %v682, %v1654
      %1656 = vmatprep.subr.mxu0 0.0
      %1657 = vmatpush1.msra.mxu0 %v1636
      %1658 = vmatprep.subr.mxu0 0.0
      %1659 = vmatpush1.msra.mxu0 %v1637
      %1660 = vmatprep.subr.mxu0 0.0
      %1661 = vmatpush1.msra.mxu0 %v1638
      %1662 = vmatprep.subr.mxu0 0.0
      %1663 = vmatpush1.msra.mxu0 %v1639
      %1664 = vmatprep.subr.mxu0 0.0
      %1665 = vmatpush1.msra.mxu0 %v1640
      %1666 = vmatprep.subr.mxu0 0.0
      %1667 = vmatpush1.msra.mxu0 %v1641
      %1668 = vmatprep.subr.mxu0 0.0
      %1669 = vmatpush1.msra.mxu0 %v1642
      %1670 = vmatprep.subr.mxu0 0.0
      %1671 = vmatpush1.msra.mxu0 %v1643
      %1672 = vmatprep.subr.mxu0 0.0
      %1673 = vmatpush1.msra.mxu0 %v1644
      %1674 = vmatprep.subr.mxu0 0.0
      %1675 = vmatpush1.msra.mxu0 %v1645
      %1676 = vmatprep.subr.mxu0 0.0
      %1677 = vmatpush1.msra.mxu0 %v1646
      %1678 = vmatprep.subr.mxu0 0.0
      %1679 = vmatpush1.msra.mxu0 %v1647
      %1680 = vmatprep.subr.mxu0 0.0
      %1681 = vmatpush1.msra.mxu0 %v1648
      %1682 = vmatprep.subr.mxu0 0.0
      %1683 = vmatpush1.msra.mxu0 %v1649
      %1684 = vmatprep.subr.mxu0 0.0
      %1685 = vmatpush1.msra.mxu0 %v1650
      %1686 = vmatprep.subr.mxu0 0.0
      %1687 = vmatpush1.msra.mxu0 %v1651
      %1688 = vmatprep.subr.mxu0 0.0
      %1689 = vmatpush1.msra.mxu0 0.0
      %1690 = vmatprep.subr.mxu0 0.0
      %1691 = vmatpush1.msra.mxu0 0.0
      %1692 = vmatprep.subr.mxu0 0.0
      %1693 = vmatpush1.msra.mxu0 0.0
      %1694 = vmatprep.subr.mxu0 0.0
      %1695 = vmatpush1.msra.mxu0 0.0
      %1696 = vmatprep.subr.mxu0 0.0
      %1697 = vmatpush1.msra.mxu0 0.0
      %1698 = vmatprep.subr.mxu0 0.0
      %1699 = vmatpush1.msra.mxu0 0.0
      %1700 = vmatprep.subr.mxu0 0.0
      %1701 = vmatpush1.msra.mxu0 0.0
      %1702 = vmatprep.subr.mxu0 0.0
      %1703 = vmatpush1.msra.mxu0 0.0
      %1704 = vmatprep.subr.mxu0 0.0
      %1705 = vmatpush1.msra.mxu0 0.0
      %1706 = vmatprep.subr.mxu0 0.0
      %1707 = vmatpush1.msra.mxu0 0.0
      %1708 = vmatprep.subr.mxu0 0.0
      %1709 = vmatpush1.msra.mxu0 0.0
      %1710 = vmatprep.subr.mxu0 0.0
      %1711 = vmatpush1.msra.mxu0 0.0
      %1712 = vmatprep.subr.mxu0 0.0
      %1713 = vmatpush1.msra.mxu0 0.0
      %1714 = vmatprep.subr.mxu0 0.0
      %1715 = vmatpush1.msra.mxu0 0.0
      %1716 = vmatprep.subr.mxu0 0.0
      %1717 = vmatpush1.msra.mxu0 0.0
      %1718 = vmatprep.subr.mxu0 0.0
      %1719 = vmatpush1.msra.mxu0 0.0
      %1720 = vmatprep.mubr.f32.mxu0 0.0
      %1721 = vmatmul.mubr.f32.gmra.mrb[0].mxu0 %v1633
      %v1722 = vpop.f32.mrb[0].mxu0
      %v1723 = vadd.f32 %v1655, %v1722
      %v1724 = vpop.f32.mrb[0].mxu0
      %1725 = vmatprep.mubr.f32.mxu0 0.0
      %1726 = vmatmul.mubr.f32.gmra.mrb[0].mxu0 %v1634
      %v1727 = vpop.f32.mrb[0].mxu0
      %v1728 = vadd.f32 %v1655, %v1727
      %v1729 = vpop.f32.mrb[0].mxu0
      %1730 = vdwg.mxu0
      %v1731 = vmax.f32 %v1723, 0.0
      %v1732 = vmax.f32 %v1728, 0.0
      %v1733 = vsel %vm964, %v1731, 0.0
      %v1734 = vsel %vm965, %v1732, 0.0
      %v1735 = vsel %vm966, %v1731, 0.0
      %v1736 = vsel %vm967, %v1732, 0.0
      %v1737 = vsel %vm968, %v1731, 0.0
      %v1738 = vsel %vm969, %v1732, 0.0
      %v1739 = vsel %vm970, %v1731, 0.0
      %v1740 = vsel %vm971, %v1732, 0.0
      %v1741 = vsel %vm972, %v1731, 0.0
      %v1742 = vsel %vm973, %v1732, 0.0
      %v1743 = vsel %vm974, %v1731, 0.0
      %v1744 = vsel %vm975, %v1732, 0.0
      %v1745 = vsel %vm976, %v1731, 0.0
      %v1746 = vsel %vm977, %v1732, 0.0
      %v1747 = vsel %vm978, %v1731, 0.0
      %v1748 = vsel %vm979, %v1732, 0.0
      %v1749 = vsel %vm980, %v1731, 0.0
      %v1750 = vsel %vm981, %v1732, 0.0
      %v1751 = vsel %vm982, %v1731, 0.0
      %v1752 = vsel %vm983, %v1732, 0.0
      %v1753 = vsel %vm984, %v1731, 0.0
      %v1754 = vsel %vm985, %v1732, 0.0
      %v1755 = vsel %vm986, %v1731, 0.0
      %v1756 = vsel %vm987, %v1732, 0.0
      %v1757 = vsel %vm988, %v1731, 0.0
      %v1758 = vsel %vm989, %v1732, 0.0
      %v1759 = vsel %vm990, %v1731, 0.0
      %v1760 = vsel %vm991, %v1732, 0.0
      %v1761 = vsel %vm992, %v1731, 0.0
      %v1762 = vsel %vm993, %v1732, 0.0
      %v1763 = vsel %vm994, %v1731, 0.0
      %v1764 = vsel %vm995, %v1732, 0.0
      %v1765 = vmax.f32 %v1733, %v1734
      %v1766 = vrot.slane %v1765, 4
      %v1767 = vmax.f32 %v1765, %v1766
      %v1768 = vrot.slane %v1767, 2
      %v1769 = vmax.f32 %v1767, %v1768
      %v1770 = vrot.slane %v1769, 1
      %v1771 = vmax.f32 %v1769, %v1770
      %v1772 = vmax.f32 %v1735, %v1736
      %v1773 = vrot.slane %v1772, 4
      %v1774 = vmax.f32 %v1772, %v1773
      %v1775 = vrot.slane %v1774, 2
      %v1776 = vmax.f32 %v1774, %v1775
      %v1777 = vrot.slane %v1776, 1
      %v1778 = vmax.f32 %v1776, %v1777
      %v1779 = vmax.f32 %v1737, %v1738
      %v1780 = vrot.slane %v1779, 4
      %v1781 = vmax.f32 %v1779, %v1780
      %v1782 = vrot.slane %v1781, 2
      %v1783 = vmax.f32 %v1781, %v1782
      %v1784 = vrot.slane %v1783, 1
      %v1785 = vmax.f32 %v1783, %v1784
      %v1786 = vmax.f32 %v1739, %v1740
      %v1787 = vrot.slane %v1786, 4
      %v1788 = vmax.f32 %v1786, %v1787
      %v1789 = vrot.slane %v1788, 2
      %v1790 = vmax.f32 %v1788, %v1789
      %v1791 = vrot.slane %v1790, 1
      %v1792 = vmax.f32 %v1790, %v1791
      %v1793 = vmax.f32 %v1741, %v1742
      %v1794 = vrot.slane %v1793, 4
      %v1795 = vmax.f32 %v1793, %v1794
      %v1796 = vrot.slane %v1795, 2
      %v1797 = vmax.f32 %v1795, %v1796
      %v1798 = vrot.slane %v1797, 1
      %v1799 = vmax.f32 %v1797, %v1798
      %v1800 = vmax.f32 %v1743, %v1744
      %v1801 = vrot.slane %v1800, 4
      %v1802 = vmax.f32 %v1800, %v1801
      %v1803 = vrot.slane %v1802, 2
      %v1804 = vmax.f32 %v1802, %v1803
      %v1805 = vrot.slane %v1804, 1
      %v1806 = vmax.f32 %v1804, %v1805
      %v1807 = vmax.f32 %v1745, %v1746
      %v1808 = vrot.slane %v1807, 4
      %v1809 = vmax.f32 %v1807, %v1808
      %v1810 = vrot.slane %v1809, 2
      %v1811 = vmax.f32 %v1809, %v1810
      %v1812 = vrot.slane %v1811, 1
      %v1813 = vmax.f32 %v1811, %v1812
      %v1814 = vmax.f32 %v1747, %v1748
      %v1815 = vrot.slane %v1814, 4
      %v1816 = vmax.f32 %v1814, %v1815
      %v1817 = vrot.slane %v1816, 2
      %v1818 = vmax.f32 %v1816, %v1817
      %v1819 = vrot.slane %v1818, 1
      %v1820 = vmax.f32 %v1818, %v1819
      %v1821 = vmax.f32 %v1749, %v1750
      %v1822 = vrot.slane %v1821, 4
      %v1823 = vmax.f32 %v1821, %v1822
      %v1824 = vrot.slane %v1823, 2
      %v1825 = vmax.f32 %v1823, %v1824
      %v1826 = vrot.slane %v1825, 1
      %v1827 = vmax.f32 %v1825, %v1826
      %v1828 = vmax.f32 %v1751, %v1752
      %v1829 = vrot.slane %v1828, 4
      %v1830 = vmax.f32 %v1828, %v1829
      %v1831 = vrot.slane %v1830, 2
      %v1832 = vmax.f32 %v1830, %v1831
      %v1833 = vrot.slane %v1832, 1
      %v1834 = vmax.f32 %v1832, %v1833
      %v1835 = vmax.f32 %v1753, %v1754
      %v1836 = vrot.slane %v1835, 4
      %v1837 = vmax.f32 %v1835, %v1836
      %v1838 = vrot.slane %v1837, 2
      %v1839 = vmax.f32 %v1837, %v1838
      %v1840 = vrot.slane %v1839, 1
      %v1841 = vmax.f32 %v1839, %v1840
      %v1842 = vmax.f32 %v1755, %v1756
      %v1843 = vrot.slane %v1842, 4
      %v1844 = vmax.f32 %v1842, %v1843
      %v1845 = vrot.slane %v1844, 2
      %v1846 = vmax.f32 %v1844, %v1845
      %v1847 = vrot.slane %v1846, 1
      %v1848 = vmax.f32 %v1846, %v1847
      %v1849 = vmax.f32 %v1757, %v1758
      %v1850 = vrot.slane %v1849, 4
      %v1851 = vmax.f32 %v1849, %v1850
      %v1852 = vrot.slane %v1851, 2
      %v1853 = vmax.f32 %v1851, %v1852
      %v1854 = vrot.slane %v1853, 1
      %v1855 = vmax.f32 %v1853, %v1854
      %v1856 = vmax.f32 %v1759, %v1760
      %v1857 = vrot.slane %v1856, 4
      %v1858 = vmax.f32 %v1856, %v1857
      %v1859 = vrot.slane %v1858, 2
      %v1860 = vmax.f32 %v1858, %v1859
      %v1861 = vrot.slane %v1860, 1
      %v1862 = vmax.f32 %v1860, %v1861
      %v1863 = vmax.f32 %v1761, %v1762
      %v1864 = vrot.slane %v1863, 4
      %v1865 = vmax.f32 %v1863, %v1864
      %v1866 = vrot.slane %v1865, 2
      %v1867 = vmax.f32 %v1865, %v1866
      %v1868 = vrot.slane %v1867, 1
      %v1869 = vmax.f32 %v1867, %v1868
      %v1870 = vmax.f32 %v1763, %v1764
      %v1871 = vrot.slane %v1870, 4
      %v1872 = vmax.f32 %v1870, %v1871
      %v1873 = vrot.slane %v1872, 2
      %v1874 = vmax.f32 %v1872, %v1873
      %v1875 = vrot.slane %v1874, 1
      %v1876 = vmax.f32 %v1874, %v1875
      %v1877 = vmax.f32 %v1771, 0.0
      %v1878 = vmax.f32 %v1778, 0.0
      %v1879 = vmax.f32 %v1785, 0.0
      %v1880 = vmax.f32 %v1792, 0.0
      %v1881 = vmax.f32 %v1799, 0.0
      %v1882 = vmax.f32 %v1806, 0.0
      %v1883 = vmax.f32 %v1813, 0.0
      %v1884 = vmax.f32 %v1820, 0.0
      %v1885 = vmax.f32 %v1827, 0.0
      %v1886 = vmax.f32 %v1834, 0.0
      %v1887 = vmax.f32 %v1841, 0.0
      %v1888 = vmax.f32 %v1848, 0.0
      %v1889 = vmax.f32 %v1855, 0.0
      %v1890 = vmax.f32 %v1862, 0.0
      %v1891 = vmax.f32 %v1869, 0.0
      %v1892 = vmax.f32 %v1876, 0.0
      %s1893 = scalar_lea.vmem %s4, 128
      %v1894 = vld [vmem:[%s1893] sm:$0xff]
      %v1895 = vld [vmem:[%s1893 + $0x8] sm:$0xff]
      %v1896 = vld [vmem:[%s1893 + $0x10] sm:$0xff]
      %v1897 = vld [vmem:[%s1893 + $0x18] sm:$0xff]
      %v1898 = vld [vmem:[%s1893 + $0x20] sm:$0xff]
      %v1899 = vld [vmem:[%s1893 + $0x28] sm:$0xff]
      %v1900 = vld [vmem:[%s1893 + $0x30] sm:$0xff]
      %v1901 = vld [vmem:[%s1893 + $0x38] sm:$0xff]
      %v1902 = vld [vmem:[%s1893 + $0x40] sm:$0xff]
      %v1903 = vld [vmem:[%s1893 + $0x48] sm:$0xff]
      %v1904 = vld [vmem:[%s1893 + $0x50] sm:$0xff]
      %v1905 = vld [vmem:[%s1893 + $0x58] sm:$0xff]
      %v1906 = vld [vmem:[%s1893 + $0x60] sm:$0xff]
      %v1907 = vld [vmem:[%s1893 + $0x68] sm:$0xff]
      %v1908 = vld [vmem:[%s1893 + $0x70] sm:$0xff]
      %v1909 = vld [vmem:[%s1893 + $0x78] sm:$0xff]
      %v1910 = vlaneseq
      %v1911 = vshrl.u32 %v1910, 7
      %v1912 = vsub.s32 3, %v1911
      %v1913 = vrot.slane %v682, %v1912
      %v1930 = vsel %vm1192, %v1878, %v1877
      %v1931 = vsel %vm1194, %v1879, %v1930
      %v1932 = vsel %vm1196, %v1880, %v1931
      %v1933 = vsel %vm1198, %v1881, %v1932
      %v1934 = vsel %vm1200, %v1882, %v1933
      %v1935 = vsel %vm1202, %v1883, %v1934
      %v1936 = vsel %vm1204, %v1884, %v1935
      %v1937 = vsel %vm1192, %v1886, %v1885
      %v1938 = vsel %vm1194, %v1887, %v1937
      %v1939 = vsel %vm1196, %v1888, %v1938
      %v1940 = vsel %vm1198, %v1889, %v1939
      %v1941 = vsel %vm1200, %v1890, %v1940
      %v1942 = vsel %vm1202, %v1891, %v1941
      %v1943 = vsel %vm1204, %v1892, %v1942
      %1946 = vmatprep.subr.mxu0 0.0
      %1947 = vmatpush1.msra.mxu0 %v1894
      %1948 = vmatprep.subr.mxu0 0.0
      %1949 = vmatpush1.msra.mxu0 %v1895
      %1950 = vmatprep.subr.mxu0 0.0
      %1951 = vmatpush1.msra.mxu0 %v1896
      %1952 = vmatprep.subr.mxu0 0.0
      %1953 = vmatpush1.msra.mxu0 %v1897
      %1954 = vmatprep.subr.mxu0 0.0
      %1955 = vmatpush1.msra.mxu0 %v1898
      %1956 = vmatprep.subr.mxu0 0.0
      %1957 = vmatpush1.msra.mxu0 %v1899
      %1958 = vmatprep.subr.mxu0 0.0
      %1959 = vmatpush1.msra.mxu0 %v1900
      %1960 = vmatprep.subr.mxu0 0.0
      %1961 = vmatpush1.msra.mxu0 %v1901
      %1962 = vmatprep.subr.mxu0 0.0
      %1963 = vmatpush1.msra.mxu0 %v1902
      %1964 = vmatprep.subr.mxu0 0.0
      %1965 = vmatpush1.msra.mxu0 %v1903
      %1966 = vmatprep.subr.mxu0 0.0
      %1967 = vmatpush1.msra.mxu0 %v1904
      %1968 = vmatprep.subr.mxu0 0.0
      %1969 = vmatpush1.msra.mxu0 %v1905
      %1970 = vmatprep.subr.mxu0 0.0
      %1971 = vmatpush1.msra.mxu0 %v1906
      %1972 = vmatprep.subr.mxu0 0.0
      %1973 = vmatpush1.msra.mxu0 %v1907
      %1974 = vmatprep.subr.mxu0 0.0
      %1975 = vmatpush1.msra.mxu0 %v1908
      %1976 = vmatprep.subr.mxu0 0.0
      %1977 = vmatpush1.msra.mxu0 %v1909
      %1978 = vmatprep.subr.mxu0 0.0
      %1979 = vmatpush1.msra.mxu0 0.0
      %1980 = vmatprep.subr.mxu0 0.0
      %1981 = vmatpush1.msra.mxu0 0.0
      %1982 = vmatprep.subr.mxu0 0.0
      %1983 = vmatpush1.msra.mxu0 0.0
      %1984 = vmatprep.subr.mxu0 0.0
      %1985 = vmatpush1.msra.mxu0 0.0
      %1986 = vmatprep.subr.mxu0 0.0
      %1987 = vmatpush1.msra.mxu0 0.0
      %1988 = vmatprep.subr.mxu0 0.0
      %1989 = vmatpush1.msra.mxu0 0.0
      %1990 = vmatprep.subr.mxu0 0.0
      %1991 = vmatpush1.msra.mxu0 0.0
      %1992 = vmatprep.subr.mxu0 0.0
      %1993 = vmatpush1.msra.mxu0 0.0
      %1994 = vmatprep.subr.mxu0 0.0
      %1995 = vmatpush1.msra.mxu0 0.0
      %1996 = vmatprep.subr.mxu0 0.0
      %1997 = vmatpush1.msra.mxu0 0.0
      %1998 = vmatprep.subr.mxu0 0.0
      %1999 = vmatpush1.msra.mxu0 0.0
      %2000 = vmatprep.subr.mxu0 0.0
      %2001 = vmatpush1.msra.mxu0 0.0
      %2002 = vmatprep.subr.mxu0 0.0
      %2003 = vmatpush1.msra.mxu0 0.0
      %2004 = vmatprep.subr.mxu0 0.0
      %2005 = vmatpush1.msra.mxu0 0.0
      %2006 = vmatprep.subr.mxu0 0.0
      %2007 = vmatpush1.msra.mxu0 0.0
      %2008 = vmatprep.subr.mxu0 0.0
      %2009 = vmatpush1.msra.mxu0 0.0
      %2010 = vmatprep.mubr.f32.mxu0 0.0
      %2011 = vmatmul.mubr.f32.gmra.mrb[0].mxu0 %v1936
      %v2012 = vpop.f32.mrb[0].mxu0
      %v2013 = vadd.f32 %v1913, %v2012
      %v2014 = vpop.f32.mrb[0].mxu0
      %2015 = vmatprep.mubr.f32.mxu0 0.0
      %2016 = vmatmul.mubr.f32.gmra.mrb[0].mxu0 %v1943
      %v2017 = vpop.f32.mrb[0].mxu0
      %v2018 = vadd.f32 %v1913, %v2017
      %v2019 = vpop.f32.mrb[0].mxu0
      %2020 = vdwg.mxu0
      %v2021 = vmax.f32 %v2013, 0.0
      %v2022 = vmax.f32 %v2018, 0.0
      %s2023 = scalar_lea.vmem %s5, 64
      %v2024 = vld [vmem:[%s2023] sm:$0xff]
      %v2025 = vld [vmem:[%s2023 + $0x8] sm:$0xff]
      %v2026 = vld [vmem:[%s2023 + $0x10] sm:$0xff]
      %v2027 = vld [vmem:[%s2023 + $0x18] sm:$0xff]
      %v2028 = vld [vmem:[%s2023 + $0x20] sm:$0xff]
      %v2029 = vld [vmem:[%s2023 + $0x28] sm:$0xff]
      %v2030 = vld [vmem:[%s2023 + $0x30] sm:$0xff]
      %v2031 = vld [vmem:[%s2023 + $0x38] sm:$0xff]
      %v2032 = vlaneseq
      %v2033 = vshrl.u32 %v2032, 7
      %v2034 = vsub.s32 4, %v2033
      %v2035 = vrot.slane %v682, %v2034
      %v2037 = vsel %vm751, %v2021, 0
      %v2040 = vsel %vm751, %v2022, 0
      %2042 = vmatprep.subr.mxu0 0.0
      %2043 = vmatpush1.msra.mxu0 %v2024
      %2044 = vmatprep.subr.mxu0 0.0
      %2045 = vmatpush1.msra.mxu0 %v2025
      %2046 = vmatprep.subr.mxu0 0.0
      %2047 = vmatpush1.msra.mxu0 %v2026
      %2048 = vmatprep.subr.mxu0 0.0
      %2049 = vmatpush1.msra.mxu0 %v2027
      %2050 = vmatprep.subr.mxu0 0.0
      %2051 = vmatpush1.msra.mxu0 %v2028
      %2052 = vmatprep.subr.mxu0 0.0
      %2053 = vmatpush1.msra.mxu0 %v2029
      %2054 = vmatprep.subr.mxu0 0.0
      %2055 = vmatpush1.msra.mxu0 %v2030
      %2056 = vmatprep.subr.mxu0 0.0
      %2057 = vmatpush1.msra.mxu0 %v2031
      %2058 = vmatprep.subr.mxu0 0.0
      %2059 = vmatpush1.msra.mxu0 0.0
      %2060 = vmatprep.subr.mxu0 0.0
      %2061 = vmatpush1.msra.mxu0 0.0
      %2062 = vmatprep.subr.mxu0 0.0
      %2063 = vmatpush1.msra.mxu0 0.0
      %2064 = vmatprep.subr.mxu0 0.0
      %2065 = vmatpush1.msra.mxu0 0.0
      %2066 = vmatprep.subr.mxu0 0.0
      %2067 = vmatpush1.msra.mxu0 0.0
      %2068 = vmatprep.subr.mxu0 0.0
      %2069 = vmatpush1.msra.mxu0 0.0
      %2070 = vmatprep.subr.mxu0 0.0
      %2071 = vmatpush1.msra.mxu0 0.0
      %2072 = vmatprep.subr.mxu0 0.0
      %2073 = vmatpush1.msra.mxu0 0.0
      %2074 = vmatprep.subr.mxu0 0.0
      %2075 = vmatpush1.msra.mxu0 0.0
      %2076 = vmatprep.subr.mxu0 0.0
      %2077 = vmatpush1.msra.mxu0 0.0
      %2078 = vmatprep.subr.mxu0 0.0
      %2079 = vmatpush1.msra.mxu0 0.0
      %2080 = vmatprep.subr.mxu0 0.0
      %2081 = vmatpush1.msra.mxu0 0.0
      %2082 = vmatprep.subr.mxu0 0.0
      %2083 = vmatpush1.msra.mxu0 0.0
      %2084 = vmatprep.subr.mxu0 0.0
      %2085 = vmatpush1.msra.mxu0 0.0
      %2086 = vmatprep.subr.mxu0 0.0
      %2087 = vmatpush1.msra.mxu0 0.0
      %2088 = vmatprep.subr.mxu0 0.0
      %2089 = vmatpush1.msra.mxu0 0.0
      %2090 = vmatprep.subr.mxu0 0.0
      %2091 = vmatpush1.msra.mxu0 0.0
      %2092 = vmatprep.subr.mxu0 0.0
      %2093 = vmatpush1.msra.mxu0 0.0
      %2094 = vmatprep.subr.mxu0 0.0
      %2095 = vmatpush1.msra.mxu0 0.0
      %2096 = vmatprep.subr.mxu0 0.0
      %2097 = vmatpush1.msra.mxu0 0.0
      %2098 = vmatprep.subr.mxu0 0.0
      %2099 = vmatpush1.msra.mxu0 0.0
      %2100 = vmatprep.subr.mxu0 0.0
      %2101 = vmatpush1.msra.mxu0 0.0
      %2102 = vmatprep.subr.mxu0 0.0
      %2103 = vmatpush1.msra.mxu0 0.0
      %2104 = vmatprep.subr.mxu0 0.0
      %2105 = vmatpush1.msra.mxu0 0.0
      %2106 = vmatprep.mubr.f32.mxu0 0.0
      %2107 = vmatmul.mubr.f32.gmra.mrb[0].mxu0 %v2037
      %v2108 = vpop.f32.mrb[0].mxu0
      %v2109 = vadd.f32 %v2035, %v2108
      %v2110 = vpop.f32.mrb[0].mxu0
      %2111 = vmatprep.mubr.f32.mxu0 0.0
      %2112 = vmatmul.mubr.f32.gmra.mrb[0].mxu0 %v2040
      %v2113 = vpop.f32.mrb[0].mxu0
      %v2114 = vadd.f32 %v2035, %v2113
      %v2115 = vpop.f32.mrb[0].mxu0
      %2116 = vdwg.mxu0
      %v2117 = vmax.f32 %v2109, 0.0
      %v2118 = vmax.f32 %v2114, 0.0
      %s2119 = scalar_lea.vmem %s6, 32
      %v2120 = vld [vmem:[%s2119] sm:$0xff]
      %v2121 = vld [vmem:[%s2119 + $0x8] sm:$0xff]
      %v2122 = vld [vmem:[%s2119 + $0x10] sm:$0xff]
      %v2123 = vld [vmem:[%s2119 + $0x18] sm:$0xff]
      %v2124 = vlaneseq
      %v2125 = vshrl.u32 %v2124, 7
      %v2126 = vsub.s32 5, %v2125
      %v2127 = vrot.slane %v682, %v2126
      %v2129 = vsel %vm1395, %v2117, 0
      %v2132 = vsel %vm1395, %v2118, 0
      %2134 = vmatprep.subr.mxu0 0.0
      %2135 = vmatpush1.msra.mxu0 %v2120
      %2136 = vmatprep.subr.mxu0 0.0
      %2137 = vmatpush1.msra.mxu0 %v2121
      %2138 = vmatprep.subr.mxu0 0.0
      %2139 = vmatpush1.msra.mxu0 %v2122
      %2140 = vmatprep.subr.mxu0 0.0
      %2141 = vmatpush1.msra.mxu0 %v2123
      %2142 = vmatprep.subr.mxu0 0.0
      %2143 = vmatpush1.msra.mxu0 0.0
      %2144 = vmatprep.subr.mxu0 0.0
      %2145 = vmatpush1.msra.mxu0 0.0
      %2146 = vmatprep.subr.mxu0 0.0
      %2147 = vmatpush1.msra.mxu0 0.0
      %2148 = vmatprep.subr.mxu0 0.0
      %2149 = vmatpush1.msra.mxu0 0.0
      %2150 = vmatprep.subr.mxu0 0.0
      %2151 = vmatpush1.msra.mxu0 0.0
      %2152 = vmatprep.subr.mxu0 0.0
      %2153 = vmatpush1.msra.mxu0 0.0
      %2154 = vmatprep.subr.mxu0 0.0
      %2155 = vmatpush1.msra.mxu0 0.0
      %2156 = vmatprep.subr.mxu0 0.0
      %2157 = vmatpush1.msra.mxu0 0.0
      %2158 = vmatprep.subr.mxu0 0.0
      %2159 = vmatpush1.msra.mxu0 0.0
      %2160 = vmatprep.subr.mxu0 0.0
      %2161 = vmatpush1.msra.mxu0 0.0
      %2162 = vmatprep.subr.mxu0 0.0
      %2163 = vmatpush1.msra.mxu0 0.0
      %2164 = vmatprep.subr.mxu0 0.0
      %2165 = vmatpush1.msra.mxu0 0.0
      %2166 = vmatprep.subr.mxu0 0.0
      %2167 = vmatpush1.msra.mxu0 0.0
      %2168 = vmatprep.subr.mxu0 0.0
      %2169 = vmatpush1.msra.mxu0 0.0
      %2170 = vmatprep.subr.mxu0 0.0
      %2171 = vmatpush1.msra.mxu0 0.0
      %2172 = vmatprep.subr.mxu0 0.0
      %2173 = vmatpush1.msra.mxu0 0.0
      %2174 = vmatprep.subr.mxu0 0.0
      %2175 = vmatpush1.msra.mxu0 0.0
      %2176 = vmatprep.subr.mxu0 0.0
      %2177 = vmatpush1.msra.mxu0 0.0
      %2178 = vmatprep.subr.mxu0 0.0
      %2179 = vmatpush1.msra.mxu0 0.0
      %2180 = vmatprep.subr.mxu0 0.0
      %2181 = vmatpush1.msra.mxu0 0.0
      %2182 = vmatprep.subr.mxu0 0.0
      %2183 = vmatpush1.msra.mxu0 0.0
      %2184 = vmatprep.subr.mxu0 0.0
      %2185 = vmatpush1.msra.mxu0 0.0
      %2186 = vmatprep.subr.mxu0 0.0
      %2187 = vmatpush1.msra.mxu0 0.0
      %2188 = vmatprep.subr.mxu0 0.0
      %2189 = vmatpush1.msra.mxu0 0.0
      %2190 = vmatprep.subr.mxu0 0.0
      %2191 = vmatpush1.msra.mxu0 0.0
      %2192 = vmatprep.subr.mxu0 0.0
      %2193 = vmatpush1.msra.mxu0 0.0
      %2194 = vmatprep.subr.mxu0 0.0
      %2195 = vmatpush1.msra.mxu0 0.0
      %2196 = vmatprep.subr.mxu0 0.0
      %2197 = vmatpush1.msra.mxu0 0.0
      %2198 = vmatprep.mubr.f32.mxu0 0.0
      %2199 = vmatmul.mubr.f32.gmra.mrb[0].mxu0 %v2129
      %v2200 = vpop.f32.mrb[0].mxu0
      %v2201 = vadd.f32 %v2127, %v2200
      %v2202 = vpop.f32.mrb[0].mxu0
      %2203 = vmatprep.mubr.f32.mxu0 0.0
      %2204 = vmatmul.mubr.f32.gmra.mrb[0].mxu0 %v2132
      %v2205 = vpop.f32.mrb[0].mxu0
      %v2206 = vadd.f32 %v2127, %v2205
      %v2207 = vpop.f32.mrb[0].mxu0
      %2208 = vdwg.mxu0
      %v2209 = vmax.f32 %v2201, 0.0
      %v2210 = vmax.f32 %v2206, 0.0
      %v2211 = vadd.f32 %v2209, %v1479
      %v2212 = vadd.f32 %v2210, %v1480
      %s2213 = scalar_lea.vmem %s1, 8
      %v2214 = vld [vmem:[%s2213] sm:$0x7]
      %2216 = vset.pattern.permute.xlu0 0
      %2217 = vperm.xlu0 %2216, %v2211
      %v2218 = vpop.permute.xlu0 %2217
      %2221 = vset.pattern.permute.xlu0 0
      %2222 = vperm.xlu0 %2221, %v2212
      %v2223 = vpop.permute.xlu0 %2222
      %v2225 = vlaneseq
      %v2226 = vshrl.u32 %v2225, 7
      %v2227 = vsub.s32 0, %v2226
      %v2228 = vrot.slane %v2214, %v2227
      %v2229 = vmul.f32 %v2218, %v2228
      %v2230 = vmul.f32 %v2223, %v2228
      %2231 = vset.pattern.permute.xlu0 1
      %2232 = vperm.xlu0 %2231, %v2211
      %v2233 = vpop.permute.xlu0 %2232
      %2235 = vset.pattern.permute.xlu0 1
      %2236 = vperm.xlu0 %2235, %v2212
      %v2237 = vpop.permute.xlu0 %2236
      %v2239 = vlaneseq
      %v2240 = vshrl.u32 %v2239, 7
      %v2241 = vsub.s32 1, %v2240
      %v2242 = vrot.slane %v2214, %v2241
      %v2243 = vmul.f32 %v2233, %v2242
      %v2244 = vmul.f32 %v2237, %v2242
      %v2245 = vadd.f32 %v2229, %v2243
      %v2246 = vadd.f32 %v2230, %v2244
      %2247 = vset.pattern.permute.xlu0 2
      %2248 = vperm.xlu0 %2247, %v2211
      %v2249 = vpop.permute.xlu0 %2248
      %2251 = vset.pattern.permute.xlu0 2
      %2252 = vperm.xlu0 %2251, %v2212
      %v2253 = vpop.permute.xlu0 %2252
      %v2255 = vlaneseq
      %v2256 = vshrl.u32 %v2255, 7
      %v2257 = vsub.s32 2, %v2256
      %v2258 = vrot.slane %v2214, %v2257
      %v2259 = vmul.f32 %v2249, %v2258
      %v2260 = vmul.f32 %v2253, %v2258
      %v2261 = vadd.f32 %v2245, %v2259
      %v2262 = vadd.f32 %v2246, %v2260
      %v2263 = vlaneseq
      %v2264 = vshrl.u32 %v2263, 7
      %v2265 = vsub.s32 0, %v2264
      %v2266 = vrot.slane %v683, %v2265
      %v2267 = vadd.f32 %v2261, %v2266
      %v2268 = vadd.f32 %v2262, %v2266
      %v2269 = vmax.f32 %v2267, 0.0
      %v2270 = vmax.f32 %v2268, 0.0
      %s2271 = scalar_lea.vmem %s2, 128
      %v2272 = vld [vmem:[%s2271] sm:$0xff]
      %v2273 = vld [vmem:[%s2271 + $0x8] sm:$0xff]
      %v2274 = vld [vmem:[%s2271 + $0x10] sm:$0xff]
      %v2275 = vld [vmem:[%s2271 + $0x18] sm:$0xff]
      %v2276 = vld [vmem:[%s2271 + $0x20] sm:$0xff]
      %v2277 = vld [vmem:[%s2271 + $0x28] sm:$0xff]
      %v2278 = vld [vmem:[%s2271 + $0x30] sm:$0xff]
      %v2279 = vld [vmem:[%s2271 + $0x38] sm:$0xff]
      %v2280 = vlaneseq
      %v2281 = vshrl.u32 %v2280, 7
      %v2282 = vsub.s32 1, %v2281
      %v2283 = vrot.slane %v683, %v2282
      %v2285 = vsel %vm751, %v2269, 0
      %v2288 = vsel %vm751, %v2270, 0
      %2290 = vmatprep.subr.mxu0 0.0
      %2291 = vmatpush1.msra.mxu0 %v2272
      %2292 = vmatprep.subr.mxu0 0.0
      %2293 = vmatpush1.msra.mxu0 %v2273
      %2294 = vmatprep.subr.mxu0 0.0
      %2295 = vmatpush1.msra.mxu0 %v2274
      %2296 = vmatprep.subr.mxu0 0.0
      %2297 = vmatpush1.msra.mxu0 %v2275
      %2298 = vmatprep.subr.mxu0 0.0
      %2299 = vmatpush1.msra.mxu0 %v2276
      %2300 = vmatprep.subr.mxu0 0.0
      %2301 = vmatpush1.msra.mxu0 %v2277
      %2302 = vmatprep.subr.mxu0 0.0
      %2303 = vmatpush1.msra.mxu0 %v2278
      %2304 = vmatprep.subr.mxu0 0.0
      %2305 = vmatpush1.msra.mxu0 %v2279
      %2306 = vmatprep.subr.mxu0 0.0
      %2307 = vmatpush1.msra.mxu0 0.0
      %2308 = vmatprep.subr.mxu0 0.0
      %2309 = vmatpush1.msra.mxu0 0.0
      %2310 = vmatprep.subr.mxu0 0.0
      %2311 = vmatpush1.msra.mxu0 0.0
      %2312 = vmatprep.subr.mxu0 0.0
      %2313 = vmatpush1.msra.mxu0 0.0
      %2314 = vmatprep.subr.mxu0 0.0
      %2315 = vmatpush1.msra.mxu0 0.0
      %2316 = vmatprep.subr.mxu0 0.0
      %2317 = vmatpush1.msra.mxu0 0.0
      %2318 = vmatprep.subr.mxu0 0.0
      %2319 = vmatpush1.msra.mxu0 0.0
      %2320 = vmatprep.subr.mxu0 0.0
      %2321 = vmatpush1.msra.mxu0 0.0
      %2322 = vmatprep.subr.mxu0 0.0
      %2323 = vmatpush1.msra.mxu0 0.0
      %2324 = vmatprep.subr.mxu0 0.0
      %2325 = vmatpush1.msra.mxu0 0.0
      %2326 = vmatprep.subr.mxu0 0.0
      %2327 = vmatpush1.msra.mxu0 0.0
      %2328 = vmatprep.subr.mxu0 0.0
      %2329 = vmatpush1.msra.mxu0 0.0
      %2330 = vmatprep.subr.mxu0 0.0
      %2331 = vmatpush1.msra.mxu0 0.0
      %2332 = vmatprep.subr.mxu0 0.0
      %2333 = vmatpush1.msra.mxu0 0.0
      %2334 = vmatprep.subr.mxu0 0.0
      %2335 = vmatpush1.msra.mxu0 0.0
      %2336 = vmatprep.subr.mxu0 0.0
      %2337 = vmatpush1.msra.mxu0 0.0
      %2338 = vmatprep.subr.mxu0 0.0
      %2339 = vmatpush1.msra.mxu0 0.0
      %2340 = vmatprep.subr.mxu0 0.0
      %2341 = vmatpush1.msra.mxu0 0.0
      %2342 = vmatprep.subr.mxu0 0.0
      %2343 = vmatpush1.msra.mxu0 0.0
      %2344 = vmatprep.subr.mxu0 0.0
      %2345 = vmatpush1.msra.mxu0 0.0
      %2346 = vmatprep.subr.mxu0 0.0
      %2347 = vmatpush1.msra.mxu0 0.0
      %2348 = vmatprep.subr.mxu0 0.0
      %2349 = vmatpush1.msra.mxu0 0.0
      %2350 = vmatprep.subr.mxu0 0.0
      %2351 = vmatpush1.msra.mxu0 0.0
      %2352 = vmatprep.subr.mxu0 0.0
      %2353 = vmatpush1.msra.mxu0 0.0
      %2354 = vmatprep.mubr.f32.mxu0 0.0
      %2355 = vmatmul.mubr.f32.gmra.mrb[0].mxu0 %v2285
      %v2356 = vpop.f32.mrb[0].mxu0
      %v2357 = vadd.f32 %v2283, %v2356
      %v2358 = vpop.f32.mrb[0].mxu0
      %2359 = vmatprep.mubr.f32.mxu0 0.0
      %2360 = vmatmul.mubr.f32.gmra.mrb[0].mxu0 %v2288
      %v2361 = vpop.f32.mrb[0].mxu0
      %v2362 = vadd.f32 %v2283, %v2361
      %v2363 = vpop.f32.mrb[0].mxu0
      %2364 = vdwg.mxu0
      %v2365 = vmax.f32 %v2357, 0.0
      %v2366 = vmax.f32 %v2362, 0.0
      %s2367 = scalar_lea.vmem %s3, 256
      %v2368 = vld [vmem:[%s2367] sm:$0xff]
      %v2369 = vld [vmem:[%s2367 + $0x8] sm:$0xff]
      %v2370 = vld [vmem:[%s2367 + $0x10] sm:$0xff]
      %v2371 = vld [vmem:[%s2367 + $0x18] sm:$0xff]
      %v2372 = vld [vmem:[%s2367 + $0x20] sm:$0xff]
      %v2373 = vld [vmem:[%s2367 + $0x28] sm:$0xff]
      %v2374 = vld [vmem:[%s2367 + $0x30] sm:$0xff]
      %v2375 = vld [vmem:[%s2367 + $0x38] sm:$0xff]
      %v2376 = vld [vmem:[%s2367 + $0x40] sm:$0xff]
      %v2377 = vld [vmem:[%s2367 + $0x48] sm:$0xff]
      %v2378 = vld [vmem:[%s2367 + $0x50] sm:$0xff]
      %v2379 = vld [vmem:[%s2367 + $0x58] sm:$0xff]
      %v2380 = vld [vmem:[%s2367 + $0x60] sm:$0xff]
      %v2381 = vld [vmem:[%s2367 + $0x68] sm:$0xff]
      %v2382 = vld [vmem:[%s2367 + $0x70] sm:$0xff]
      %v2383 = vld [vmem:[%s2367 + $0x78] sm:$0xff]
      %v2384 = vlaneseq
      %v2385 = vshrl.u32 %v2384, 7
      %v2386 = vsub.s32 2, %v2385
      %v2387 = vrot.slane %v683, %v2386
      %2388 = vmatprep.subr.mxu0 0.0
      %2389 = vmatpush1.msra.mxu0 %v2368
      %2390 = vmatprep.subr.mxu0 0.0
      %2391 = vmatpush1.msra.mxu0 %v2369
      %2392 = vmatprep.subr.mxu0 0.0
      %2393 = vmatpush1.msra.mxu0 %v2370
      %2394 = vmatprep.subr.mxu0 0.0
      %2395 = vmatpush1.msra.mxu0 %v2371
      %2396 = vmatprep.subr.mxu0 0.0
      %2397 = vmatpush1.msra.mxu0 %v2372
      %2398 = vmatprep.subr.mxu0 0.0
      %2399 = vmatpush1.msra.mxu0 %v2373
      %2400 = vmatprep.subr.mxu0 0.0
      %2401 = vmatpush1.msra.mxu0 %v2374
      %2402 = vmatprep.subr.mxu0 0.0
      %2403 = vmatpush1.msra.mxu0 %v2375
      %2404 = vmatprep.subr.mxu0 0.0
      %2405 = vmatpush1.msra.mxu0 %v2376
      %2406 = vmatprep.subr.mxu0 0.0
      %2407 = vmatpush1.msra.mxu0 %v2377
      %2408 = vmatprep.subr.mxu0 0.0
      %2409 = vmatpush1.msra.mxu0 %v2378
      %2410 = vmatprep.subr.mxu0 0.0
      %2411 = vmatpush1.msra.mxu0 %v2379
      %2412 = vmatprep.subr.mxu0 0.0
      %2413 = vmatpush1.msra.mxu0 %v2380
      %2414 = vmatprep.subr.mxu0 0.0
      %2415 = vmatpush1.msra.mxu0 %v2381
      %2416 = vmatprep.subr.mxu0 0.0
      %2417 = vmatpush1.msra.mxu0 %v2382
      %2418 = vmatprep.subr.mxu0 0.0
      %2419 = vmatpush1.msra.mxu0 %v2383
      %2420 = vmatprep.subr.mxu0 0.0
      %2421 = vmatpush1.msra.mxu0 0.0
      %2422 = vmatprep.subr.mxu0 0.0
      %2423 = vmatpush1.msra.mxu0 0.0
      %2424 = vmatprep.subr.mxu0 0.0
      %2425 = vmatpush1.msra.mxu0 0.0
      %2426 = vmatprep.subr.mxu0 0.0
      %2427 = vmatpush1.msra.mxu0 0.0
      %2428 = vmatprep.subr.mxu0 0.0
      %2429 = vmatpush1.msra.mxu0 0.0
      %2430 = vmatprep.subr.mxu0 0.0
      %2431 = vmatpush1.msra.mxu0 0.0
      %2432 = vmatprep.subr.mxu0 0.0
      %2433 = vmatpush1.msra.mxu0 0.0
      %2434 = vmatprep.subr.mxu0 0.0
      %2435 = vmatpush1.msra.mxu0 0.0
      %2436 = vmatprep.subr.mxu0 0.0
      %2437 = vmatpush1.msra.mxu0 0.0
      %2438 = vmatprep.subr.mxu0 0.0
      %2439 = vmatpush1.msra.mxu0 0.0
      %2440 = vmatprep.subr.mxu0 0.0
      %2441 = vmatpush1.msra.mxu0 0.0
      %2442 = vmatprep.subr.mxu0 0.0
      %2443 = vmatpush1.msra.mxu0 0.0
      %2444 = vmatprep.subr.mxu0 0.0
      %2445 = vmatpush1.msra.mxu0 0.0
      %2446 = vmatprep.subr.mxu0 0.0
      %2447 = vmatpush1.msra.mxu0 0.0
      %2448 = vmatprep.subr.mxu0 0.0
      %2449 = vmatpush1.msra.mxu0 0.0
      %2450 = vmatprep.subr.mxu0 0.0
      %2451 = vmatpush1.msra.mxu0 0.0
      %2452 = vmatprep.mubr.f32.mxu0 0.0
      %2453 = vmatmul.mubr.f32.gmra.mrb[0].mxu0 %v2365
      %v2454 = vpop.f32.mrb[0].mxu0
      %v2455 = vadd.f32 %v2387, %v2454
      %v2456 = vpop.f32.mrb[0].mxu0
      %2457 = vmatprep.mubr.f32.mxu0 0.0
      %2458 = vmatmul.mubr.f32.gmra.mrb[0].mxu0 %v2366
      %v2459 = vpop.f32.mrb[0].mxu0
      %v2460 = vadd.f32 %v2387, %v2459
      %v2461 = vpop.f32.mrb[0].mxu0
      %2462 = vdwg.mxu0
      %v2463 = vmax.f32 %v2455, 0.0
      %v2464 = vmax.f32 %v2460, 0.0
      %v2465 = vsel %vm964, %v2463, 0.0
      %v2466 = vsel %vm965, %v2464, 0.0
      %v2467 = vsel %vm966, %v2463, 0.0
      %v2468 = vsel %vm967, %v2464, 0.0
      %v2469 = vsel %vm968, %v2463, 0.0
      %v2470 = vsel %vm969, %v2464, 0.0
      %v2471 = vsel %vm970, %v2463, 0.0
      %v2472 = vsel %vm971, %v2464, 0.0
      %v2473 = vsel %vm972, %v2463, 0.0
      %v2474 = vsel %vm973, %v2464, 0.0
      %v2475 = vsel %vm974, %v2463, 0.0
      %v2476 = vsel %vm975, %v2464, 0.0
      %v2477 = vsel %vm976, %v2463, 0.0
      %v2478 = vsel %vm977, %v2464, 0.0
      %v2479 = vsel %vm978, %v2463, 0.0
      %v2480 = vsel %vm979, %v2464, 0.0
      %v2481 = vsel %vm980, %v2463, 0.0
      %v2482 = vsel %vm981, %v2464, 0.0
      %v2483 = vsel %vm982, %v2463, 0.0
      %v2484 = vsel %vm983, %v2464, 0.0
      %v2485 = vsel %vm984, %v2463, 0.0
      %v2486 = vsel %vm985, %v2464, 0.0
      %v2487 = vsel %vm986, %v2463, 0.0
      %v2488 = vsel %vm987, %v2464, 0.0
      %v2489 = vsel %vm988, %v2463, 0.0
      %v2490 = vsel %vm989, %v2464, 0.0
      %v2491 = vsel %vm990, %v2463, 0.0
      %v2492 = vsel %vm991, %v2464, 0.0
      %v2493 = vsel %vm992, %v2463, 0.0
      %v2494 = vsel %vm993, %v2464, 0.0
      %v2495 = vsel %vm994, %v2463, 0.0
      %v2496 = vsel %vm995, %v2464, 0.0
      %v2497 = vmax.f32 %v2465, %v2466
      %v2498 = vrot.slane %v2497, 4
      %v2499 = vmax.f32 %v2497, %v2498
      %v2500 = vrot.slane %v2499, 2
      %v2501 = vmax.f32 %v2499, %v2500
      %v2502 = vrot.slane %v2501, 1
      %v2503 = vmax.f32 %v2501, %v2502
      %v2504 = vmax.f32 %v2467, %v2468
      %v2505 = vrot.slane %v2504, 4
      %v2506 = vmax.f32 %v2504, %v2505
      %v2507 = vrot.slane %v2506, 2
      %v2508 = vmax.f32 %v2506, %v2507
      %v2509 = vrot.slane %v2508, 1
      %v2510 = vmax.f32 %v2508, %v2509
      %v2511 = vmax.f32 %v2469, %v2470
      %v2512 = vrot.slane %v2511, 4
      %v2513 = vmax.f32 %v2511, %v2512
      %v2514 = vrot.slane %v2513, 2
      %v2515 = vmax.f32 %v2513, %v2514
      %v2516 = vrot.slane %v2515, 1
      %v2517 = vmax.f32 %v2515, %v2516
      %v2518 = vmax.f32 %v2471, %v2472
      %v2519 = vrot.slane %v2518, 4
      %v2520 = vmax.f32 %v2518, %v2519
      %v2521 = vrot.slane %v2520, 2
      %v2522 = vmax.f32 %v2520, %v2521
      %v2523 = vrot.slane %v2522, 1
      %v2524 = vmax.f32 %v2522, %v2523
      %v2525 = vmax.f32 %v2473, %v2474
      %v2526 = vrot.slane %v2525, 4
      %v2527 = vmax.f32 %v2525, %v2526
      %v2528 = vrot.slane %v2527, 2
      %v2529 = vmax.f32 %v2527, %v2528
      %v2530 = vrot.slane %v2529, 1
      %v2531 = vmax.f32 %v2529, %v2530
      %v2532 = vmax.f32 %v2475, %v2476
      %v2533 = vrot.slane %v2532, 4
      %v2534 = vmax.f32 %v2532, %v2533
      %v2535 = vrot.slane %v2534, 2
      %v2536 = vmax.f32 %v2534, %v2535
      %v2537 = vrot.slane %v2536, 1
      %v2538 = vmax.f32 %v2536, %v2537
      %v2539 = vmax.f32 %v2477, %v2478
      %v2540 = vrot.slane %v2539, 4
      %v2541 = vmax.f32 %v2539, %v2540
      %v2542 = vrot.slane %v2541, 2
      %v2543 = vmax.f32 %v2541, %v2542
      %v2544 = vrot.slane %v2543, 1
      %v2545 = vmax.f32 %v2543, %v2544
      %v2546 = vmax.f32 %v2479, %v2480
      %v2547 = vrot.slane %v2546, 4
      %v2548 = vmax.f32 %v2546, %v2547
      %v2549 = vrot.slane %v2548, 2
      %v2550 = vmax.f32 %v2548, %v2549
      %v2551 = vrot.slane %v2550, 1
      %v2552 = vmax.f32 %v2550, %v2551
      %v2553 = vmax.f32 %v2481, %v2482
      %v2554 = vrot.slane %v2553, 4
      %v2555 = vmax.f32 %v2553, %v2554
      %v2556 = vrot.slane %v2555, 2
      %v2557 = vmax.f32 %v2555, %v2556
      %v2558 = vrot.slane %v2557, 1
      %v2559 = vmax.f32 %v2557, %v2558
      %v2560 = vmax.f32 %v2483, %v2484
      %v2561 = vrot.slane %v2560, 4
      %v2562 = vmax.f32 %v2560, %v2561
      %v2563 = vrot.slane %v2562, 2
      %v2564 = vmax.f32 %v2562, %v2563
      %v2565 = vrot.slane %v2564, 1
      %v2566 = vmax.f32 %v2564, %v2565
      %v2567 = vmax.f32 %v2485, %v2486
      %v2568 = vrot.slane %v2567, 4
      %v2569 = vmax.f32 %v2567, %v2568
      %v2570 = vrot.slane %v2569, 2
      %v2571 = vmax.f32 %v2569, %v2570
      %v2572 = vrot.slane %v2571, 1
      %v2573 = vmax.f32 %v2571, %v2572
      %v2574 = vmax.f32 %v2487, %v2488
      %v2575 = vrot.slane %v2574, 4
      %v2576 = vmax.f32 %v2574, %v2575
      %v2577 = vrot.slane %v2576, 2
      %v2578 = vmax.f32 %v2576, %v2577
      %v2579 = vrot.slane %v2578, 1
      %v2580 = vmax.f32 %v2578, %v2579
      %v2581 = vmax.f32 %v2489, %v2490
      %v2582 = vrot.slane %v2581, 4
      %v2583 = vmax.f32 %v2581, %v2582
      %v2584 = vrot.slane %v2583, 2
      %v2585 = vmax.f32 %v2583, %v2584
      %v2586 = vrot.slane %v2585, 1
      %v2587 = vmax.f32 %v2585, %v2586
      %v2588 = vmax.f32 %v2491, %v2492
      %v2589 = vrot.slane %v2588, 4
      %v2590 = vmax.f32 %v2588, %v2589
      %v2591 = vrot.slane %v2590, 2
      %v2592 = vmax.f32 %v2590, %v2591
      %v2593 = vrot.slane %v2592, 1
      %v2594 = vmax.f32 %v2592, %v2593
      %v2595 = vmax.f32 %v2493, %v2494
      %v2596 = vrot.slane %v2595, 4
      %v2597 = vmax.f32 %v2595, %v2596
      %v2598 = vrot.slane %v2597, 2
      %v2599 = vmax.f32 %v2597, %v2598
      %v2600 = vrot.slane %v2599, 1
      %v2601 = vmax.f32 %v2599, %v2600
      %v2602 = vmax.f32 %v2495, %v2496
      %v2603 = vrot.slane %v2602, 4
      %v2604 = vmax.f32 %v2602, %v2603
      %v2605 = vrot.slane %v2604, 2
      %v2606 = vmax.f32 %v2604, %v2605
      %v2607 = vrot.slane %v2606, 1
      %v2608 = vmax.f32 %v2606, %v2607
      %v2609 = vmax.f32 %v2503, 0.0
      %v2610 = vmax.f32 %v2510, 0.0
      %v2611 = vmax.f32 %v2517, 0.0
      %v2612 = vmax.f32 %v2524, 0.0
      %v2613 = vmax.f32 %v2531, 0.0
      %v2614 = vmax.f32 %v2538, 0.0
      %v2615 = vmax.f32 %v2545, 0.0
      %v2616 = vmax.f32 %v2552, 0.0
      %v2617 = vmax.f32 %v2559, 0.0
      %v2618 = vmax.f32 %v2566, 0.0
      %v2619 = vmax.f32 %v2573, 0.0
      %v2620 = vmax.f32 %v2580, 0.0
      %v2621 = vmax.f32 %v2587, 0.0
      %v2622 = vmax.f32 %v2594, 0.0
      %v2623 = vmax.f32 %v2601, 0.0
      %v2624 = vmax.f32 %v2608, 0.0
      %s2625 = scalar_lea.vmem %s4, 256
      %v2626 = vld [vmem:[%s2625] sm:$0xff]
      %v2627 = vld [vmem:[%s2625 + $0x8] sm:$0xff]
      %v2628 = vld [vmem:[%s2625 + $0x10] sm:$0xff]
      %v2629 = vld [vmem:[%s2625 + $0x18] sm:$0xff]
      %v2630 = vld [vmem:[%s2625 + $0x20] sm:$0xff]
      %v2631 = vld [vmem:[%s2625 + $0x28] sm:$0xff]
      %v2632 = vld [vmem:[%s2625 + $0x30] sm:$0xff]
      %v2633 = vld [vmem:[%s2625 + $0x38] sm:$0xff]
      %v2634 = vld [vmem:[%s2625 + $0x40] sm:$0xff]
      %v2635 = vld [vmem:[%s2625 + $0x48] sm:$0xff]
      %v2636 = vld [vmem:[%s2625 + $0x50] sm:$0xff]
      %v2637 = vld [vmem:[%s2625 + $0x58] sm:$0xff]
      %v2638 = vld [vmem:[%s2625 + $0x60] sm:$0xff]
      %v2639 = vld [vmem:[%s2625 + $0x68] sm:$0xff]
      %v2640 = vld [vmem:[%s2625 + $0x70] sm:$0xff]
      %v2641 = vld [vmem:[%s2625 + $0x78] sm:$0xff]
      %v2642 = vlaneseq
      %v2643 = vshrl.u32 %v2642, 7
      %v2644 = vsub.s32 3, %v2643
      %v2645 = vrot.slane %v683, %v2644
      %v2662 = vsel %vm1192, %v2610, %v2609
      %v2663 = vsel %vm1194, %v2611, %v2662
      %v2664 = vsel %vm1196, %v2612, %v2663
      %v2665 = vsel %vm1198, %v2613, %v2664
      %v2666 = vsel %vm1200, %v2614, %v2665
      %v2667 = vsel %vm1202, %v2615, %v2666
      %v2668 = vsel %vm1204, %v2616, %v2667
      %v2669 = vsel %vm1192, %v2618, %v2617
      %v2670 = vsel %vm1194, %v2619, %v2669
      %v2671 = vsel %vm1196, %v2620, %v2670
      %v2672 = vsel %vm1198, %v2621, %v2671
      %v2673 = vsel %vm1200, %v2622, %v2672
      %v2674 = vsel %vm1202, %v2623, %v2673
      %v2675 = vsel %vm1204, %v2624, %v2674
      %2678 = vmatprep.subr.mxu0 0.0
      %2679 = vmatpush1.msra.mxu0 %v2626
      %2680 = vmatprep.subr.mxu0 0.0
      %2681 = vmatpush1.msra.mxu0 %v2627
      %2682 = vmatprep.subr.mxu0 0.0
      %2683 = vmatpush1.msra.mxu0 %v2628
      %2684 = vmatprep.subr.mxu0 0.0
      %2685 = vmatpush1.msra.mxu0 %v2629
      %2686 = vmatprep.subr.mxu0 0.0
      %2687 = vmatpush1.msra.mxu0 %v2630
      %2688 = vmatprep.subr.mxu0 0.0
      %2689 = vmatpush1.msra.mxu0 %v2631
      %2690 = vmatprep.subr.mxu0 0.0
      %2691 = vmatpush1.msra.mxu0 %v2632
      %2692 = vmatprep.subr.mxu0 0.0
      %2693 = vmatpush1.msra.mxu0 %v2633
      %2694 = vmatprep.subr.mxu0 0.0
      %2695 = vmatpush1.msra.mxu0 %v2634
      %2696 = vmatprep.subr.mxu0 0.0
      %2697 = vmatpush1.msra.mxu0 %v2635
      %2698 = vmatprep.subr.mxu0 0.0
      %2699 = vmatpush1.msra.mxu0 %v2636
      %2700 = vmatprep.subr.mxu0 0.0
      %2701 = vmatpush1.msra.mxu0 %v2637
      %2702 = vmatprep.subr.mxu0 0.0
      %2703 = vmatpush1.msra.mxu0 %v2638
      %2704 = vmatprep.subr.mxu0 0.0
      %2705 = vmatpush1.msra.mxu0 %v2639
      %2706 = vmatprep.subr.mxu0 0.0
      %2707 = vmatpush1.msra.mxu0 %v2640
      %2708 = vmatprep.subr.mxu0 0.0
      %2709 = vmatpush1.msra.mxu0 %v2641
      %2710 = vmatprep.subr.mxu0 0.0
      %2711 = vmatpush1.msra.mxu0 0.0
      %2712 = vmatprep.subr.mxu0 0.0
      %2713 = vmatpush1.msra.mxu0 0.0
      %2714 = vmatprep.subr.mxu0 0.0
      %2715 = vmatpush1.msra.mxu0 0.0
      %2716 = vmatprep.subr.mxu0 0.0
      %2717 = vmatpush1.msra.mxu0 0.0
      %2718 = vmatprep.subr.mxu0 0.0
      %2719 = vmatpush1.msra.mxu0 0.0
      %2720 = vmatprep.subr.mxu0 0.0
      %2721 = vmatpush1.msra.mxu0 0.0
      %2722 = vmatprep.subr.mxu0 0.0
      %2723 = vmatpush1.msra.mxu0 0.0
      %2724 = vmatprep.subr.mxu0 0.0
      %2725 = vmatpush1.msra.mxu0 0.0
      %2726 = vmatprep.subr.mxu0 0.0
      %2727 = vmatpush1.msra.mxu0 0.0
      %2728 = vmatprep.subr.mxu0 0.0
      %2729 = vmatpush1.msra.mxu0 0.0
      %2730 = vmatprep.subr.mxu0 0.0
      %2731 = vmatpush1.msra.mxu0 0.0
      %2732 = vmatprep.subr.mxu0 0.0
      %2733 = vmatpush1.msra.mxu0 0.0
      %2734 = vmatprep.subr.mxu0 0.0
      %2735 = vmatpush1.msra.mxu0 0.0
      %2736 = vmatprep.subr.mxu0 0.0
      %2737 = vmatpush1.msra.mxu0 0.0
      %2738 = vmatprep.subr.mxu0 0.0
      %2739 = vmatpush1.msra.mxu0 0.0
      %2740 = vmatprep.subr.mxu0 0.0
      %2741 = vmatpush1.msra.mxu0 0.0
      %2742 = vmatprep.mubr.f32.mxu0 0.0
      %2743 = vmatmul.mubr.f32.gmra.mrb[0].mxu0 %v2668
      %v2744 = vpop.f32.mrb[0].mxu0
      %v2745 = vadd.f32 %v2645, %v2744
      %v2746 = vpop.f32.mrb[0].mxu0
      %2747 = vmatprep.mubr.f32.mxu0 0.0
      %2748 = vmatmul.mubr.f32.gmra.mrb[0].mxu0 %v2675
      %v2749 = vpop.f32.mrb[0].mxu0
      %v2750 = vadd.f32 %v2645, %v2749
      %v2751 = vpop.f32.mrb[0].mxu0
      %2752 = vdwg.mxu0
      %v2753 = vmax.f32 %v2745, 0.0
      %v2754 = vmax.f32 %v2750, 0.0
      %s2755 = scalar_lea.vmem %s5, 128
      %v2756 = vld [vmem:[%s2755] sm:$0xff]
      %v2757 = vld [vmem:[%s2755 + $0x8] sm:$0xff]
      %v2758 = vld [vmem:[%s2755 + $0x10] sm:$0xff]
      %v2759 = vld [vmem:[%s2755 + $0x18] sm:$0xff]
      %v2760 = vld [vmem:[%s2755 + $0x20] sm:$0xff]
      %v2761 = vld [vmem:[%s2755 + $0x28] sm:$0xff]
      %v2762 = vld [vmem:[%s2755 + $0x30] sm:$0xff]
      %v2763 = vld [vmem:[%s2755 + $0x38] sm:$0xff]
      %v2764 = vlaneseq
      %v2765 = vshrl.u32 %v2764, 7
      %v2766 = vsub.s32 4, %v2765
      %v2767 = vrot.slane %v683, %v2766
      %v2769 = vsel %vm751, %v2753, 0
      %v2772 = vsel %vm751, %v2754, 0
      %2774 = vmatprep.subr.mxu0 0.0
      %2775 = vmatpush1.msra.mxu0 %v2756
      %2776 = vmatprep.subr.mxu0 0.0
      %2777 = vmatpush1.msra.mxu0 %v2757
      %2778 = vmatprep.subr.mxu0 0.0
      %2779 = vmatpush1.msra.mxu0 %v2758
      %2780 = vmatprep.subr.mxu0 0.0
      %2781 = vmatpush1.msra.mxu0 %v2759
      %2782 = vmatprep.subr.mxu0 0.0
      %2783 = vmatpush1.msra.mxu0 %v2760
      %2784 = vmatprep.subr.mxu0 0.0
      %2785 = vmatpush1.msra.mxu0 %v2761
      %2786 = vmatprep.subr.mxu0 0.0
      %2787 = vmatpush1.msra.mxu0 %v2762
      %2788 = vmatprep.subr.mxu0 0.0
      %2789 = vmatpush1.msra.mxu0 %v2763
      %2790 = vmatprep.subr.mxu0 0.0
      %2791 = vmatpush1.msra.mxu0 0.0
      %2792 = vmatprep.subr.mxu0 0.0
      %2793 = vmatpush1.msra.mxu0 0.0
      %2794 = vmatprep.subr.mxu0 0.0
      %2795 = vmatpush1.msra.mxu0 0.0
      %2796 = vmatprep.subr.mxu0 0.0
      %2797 = vmatpush1.msra.mxu0 0.0
      %2798 = vmatprep.subr.mxu0 0.0
      %2799 = vmatpush1.msra.mxu0 0.0
      %2800 = vmatprep.subr.mxu0 0.0
      %2801 = vmatpush1.msra.mxu0 0.0
      %2802 = vmatprep.subr.mxu0 0.0
      %2803 = vmatpush1.msra.mxu0 0.0
      %2804 = vmatprep.subr.mxu0 0.0
      %2805 = vmatpush1.msra.mxu0 0.0
      %2806 = vmatprep.subr.mxu0 0.0
      %2807 = vmatpush1.msra.mxu0 0.0
      %2808 = vmatprep.subr.mxu0 0.0
      %2809 = vmatpush1.msra.mxu0 0.0
      %2810 = vmatprep.subr.mxu0 0.0
      %2811 = vmatpush1.msra.mxu0 0.0
      %2812 = vmatprep.subr.mxu0 0.0
      %2813 = vmatpush1.msra.mxu0 0.0
      %2814 = vmatprep.subr.mxu0 0.0
      %2815 = vmatpush1.msra.mxu0 0.0
      %2816 = vmatprep.subr.mxu0 0.0
      %2817 = vmatpush1.msra.mxu0 0.0
      %2818 = vmatprep.subr.mxu0 0.0
      %2819 = vmatpush1.msra.mxu0 0.0
      %2820 = vmatprep.subr.mxu0 0.0
      %2821 = vmatpush1.msra.mxu0 0.0
      %2822 = vmatprep.subr.mxu0 0.0
      %2823 = vmatpush1.msra.mxu0 0.0
      %2824 = vmatprep.subr.mxu0 0.0
      %2825 = vmatpush1.msra.mxu0 0.0
      %2826 = vmatprep.subr.mxu0 0.0
      %2827 = vmatpush1.msra.mxu0 0.0
      %2828 = vmatprep.subr.mxu0 0.0
      %2829 = vmatpush1.msra.mxu0 0.0
      %2830 = vmatprep.subr.mxu0 0.0
      %2831 = vmatpush1.msra.mxu0 0.0
      %2832 = vmatprep.subr.mxu0 0.0
      %2833 = vmatpush1.msra.mxu0 0.0
      %2834 = vmatprep.subr.mxu0 0.0
      %2835 = vmatpush1.msra.mxu0 0.0
      %2836 = vmatprep.subr.mxu0 0.0
      %2837 = vmatpush1.msra.mxu0 0.0
      %2838 = vmatprep.mubr.f32.mxu0 0.0
      %2839 = vmatmul.mubr.f32.gmra.mrb[0].mxu0 %v2769
      %v2840 = vpop.f32.mrb[0].mxu0
      %v2841 = vadd.f32 %v2767, %v2840
      %v2842 = vpop.f32.mrb[0].mxu0
      %2843 = vmatprep.mubr.f32.mxu0 0.0
      %2844 = vmatmul.mubr.f32.gmra.mrb[0].mxu0 %v2772
      %v2845 = vpop.f32.mrb[0].mxu0
      %v2846 = vadd.f32 %v2767, %v2845
      %v2847 = vpop.f32.mrb[0].mxu0
      %2848 = vdwg.mxu0
      %v2849 = vmax.f32 %v2841, 0.0
      %v2850 = vmax.f32 %v2846, 0.0
      %s2851 = scalar_lea.vmem %s6, 64
      %v2852 = vld [vmem:[%s2851] sm:$0xff]
      %v2853 = vld [vmem:[%s2851 + $0x8] sm:$0xff]
      %v2854 = vld [vmem:[%s2851 + $0x10] sm:$0xff]
      %v2855 = vld [vmem:[%s2851 + $0x18] sm:$0xff]
      %v2856 = vlaneseq
      %v2857 = vshrl.u32 %v2856, 7
      %v2858 = vsub.s32 5, %v2857
      %v2859 = vrot.slane %v683, %v2858
      %v2861 = vsel %vm1395, %v2849, 0
      %v2864 = vsel %vm1395, %v2850, 0
      %2866 = vmatprep.subr.mxu0 0.0
      %2867 = vmatpush1.msra.mxu0 %v2852
      %2868 = vmatprep.subr.mxu0 0.0
      %2869 = vmatpush1.msra.mxu0 %v2853
      %2870 = vmatprep.subr.mxu0 0.0
      %2871 = vmatpush1.msra.mxu0 %v2854
      %2872 = vmatprep.subr.mxu0 0.0
      %2873 = vmatpush1.msra.mxu0 %v2855
      %2874 = vmatprep.subr.mxu0 0.0
      %2875 = vmatpush1.msra.mxu0 0.0
      %2876 = vmatprep.subr.mxu0 0.0
      %2877 = vmatpush1.msra.mxu0 0.0
      %2878 = vmatprep.subr.mxu0 0.0
      %2879 = vmatpush1.msra.mxu0 0.0
      %2880 = vmatprep.subr.mxu0 0.0
      %2881 = vmatpush1.msra.mxu0 0.0
      %2882 = vmatprep.subr.mxu0 0.0
      %2883 = vmatpush1.msra.mxu0 0.0
      %2884 = vmatprep.subr.mxu0 0.0
      %2885 = vmatpush1.msra.mxu0 0.0
      %2886 = vmatprep.subr.mxu0 0.0
      %2887 = vmatpush1.msra.mxu0 0.0
      %2888 = vmatprep.subr.mxu0 0.0
      %2889 = vmatpush1.msra.mxu0 0.0
      %2890 = vmatprep.subr.mxu0 0.0
      %2891 = vmatpush1.msra.mxu0 0.0
      %2892 = vmatprep.subr.mxu0 0.0
      %2893 = vmatpush1.msra.mxu0 0.0
      %2894 = vmatprep.subr.mxu0 0.0
      %2895 = vmatpush1.msra.mxu0 0.0
      %2896 = vmatprep.subr.mxu0 0.0
      %2897 = vmatpush1.msra.mxu0 0.0
      %2898 = vmatprep.subr.mxu0 0.0
      %2899 = vmatpush1.msra.mxu0 0.0
      %2900 = vmatprep.subr.mxu0 0.0
      %2901 = vmatpush1.msra.mxu0 0.0
      %2902 = vmatprep.subr.mxu0 0.0
      %2903 = vmatpush1.msra.mxu0 0.0
      %2904 = vmatprep.subr.mxu0 0.0
      %2905 = vmatpush1.msra.mxu0 0.0
      %2906 = vmatprep.subr.mxu0 0.0
      %2907 = vmatpush1.msra.mxu0 0.0
      %2908 = vmatprep.subr.mxu0 0.0
      %2909 = vmatpush1.msra.mxu0 0.0
      %2910 = vmatprep.subr.mxu0 0.0
      %2911 = vmatpush1.msra.mxu0 0.0
      %2912 = vmatprep.subr.mxu0 0.0
      %2913 = vmatpush1.msra.mxu0 0.0
      %2914 = vmatprep.subr.mxu0 0.0
      %2915 = vmatpush1.msra.mxu0 0.0
      %2916 = vmatprep.subr.mxu0 0.0
      %2917 = vmatpush1.msra.mxu0 0.0
      %2918 = vmatprep.subr.mxu0 0.0
      %2919 = vmatpush1.msra.mxu0 0.0
      %2920 = vmatprep.subr.mxu0 0.0
      %2921 = vmatpush1.msra.mxu0 0.0
      %2922 = vmatprep.subr.mxu0 0.0
      %2923 = vmatpush1.msra.mxu0 0.0
      %2924 = vmatprep.subr.mxu0 0.0
      %2925 = vmatpush1.msra.mxu0 0.0
      %2926 = vmatprep.subr.mxu0 0.0
      %2927 = vmatpush1.msra.mxu0 0.0
      %2928 = vmatprep.subr.mxu0 0.0
      %2929 = vmatpush1.msra.mxu0 0.0
      %2930 = vmatprep.mubr.f32.mxu0 0.0
      %2931 = vmatmul.mubr.f32.gmra.mrb[0].mxu0 %v2861
      %v2932 = vpop.f32.mrb[0].mxu0
      %v2933 = vadd.f32 %v2859, %v2932
      %v2934 = vpop.f32.mrb[0].mxu0
      %2935 = vmatprep.mubr.f32.mxu0 0.0
      %2936 = vmatmul.mubr.f32.gmra.mrb[0].mxu0 %v2864
      %v2937 = vpop.f32.mrb[0].mxu0
      %v2938 = vadd.f32 %v2859, %v2937
      %v2939 = vpop.f32.mrb[0].mxu0
      %2940 = vdwg.mxu0
      %v2941 = vmax.f32 %v2933, 0.0
      %v2942 = vmax.f32 %v2938, 0.0
      %v2943 = vadd.f32 %v2941, %v2211
      %v2944 = vadd.f32 %v2942, %v2212
      %2945 = vst.msk [vmem:[%s305] sm:$0xff] %vm552, %v2943
      %2946 = vst.msk [vmem:[%s305 + $0x8] sm:$0xff] %vm552, %v2944
      %p2947 = scmp.lt.s32.totalorder %s19, 1
      %s2948 = scalar_select %p2947, %s19, 1
      %s2949 = smul.addr %s2948, 2
      %s2950 = smul.addr %s2949, 8
      %s2951 = scalar_lea.vmem %s8, %s2950
      // Predicated region
      $region53: #{tpu_custom_call.1} parent=51 // pred_check
        %p2952 = pneg %p210
      $region54: #{tpu_custom_call.1} parent=51 // pred_check_branch
        %2954 = sbr.rel (%p2952) target = $region56
      $region55: #{tpu_custom_call.1} parent=51 // pred_region
        _
      $region56: #{tpu_custom_call.1} parent=51 // pred_fallthru
        _
    $region52: #{tpu_custom_call.1} parent=5 // pred_fallthru
      _
    %p2955 = scmp.le.s32.totalorder 2, %s14
    // Predicated region
    $region57: #{tpu_custom_call.1} parent=5 // pred_check
      %p2956 = pneg %p2955
    $region58: #{tpu_custom_call.1} parent=5 // pred_check_branch
      %2958 = sbr.rel (%p2956) target = $region60
    $region59: #{tpu_custom_call.1} parent=5 // pred_region
      %s2959 = ssub.s32 %s14, 2
      // Predicated region
      $region61: #{tpu_custom_call.1} parent=59 // pred_check
        %p2960 = pneg %p216
      $region62: #{tpu_custom_call.1} parent=59 // pred_check_branch
        %2962 = sbr.rel (%p2960) target = $region64
      $region63: #{tpu_custom_call.1} parent=59 // pred_region
        %p2963 = scmp.lt.s32.totalorder %s20, 1
        %s2964 = scalar_select %p2963, %s20, 1
        %s2965 = smul.addr %s2964, 2
        %s2966 = smul.addr %s2965, 8
        %s2967 = scalar_lea.vmem %s8, %s2966
      $region64: #{tpu_custom_call.1} parent=59 // pred_fallthru
        _
    $region60: #{tpu_custom_call.1} parent=5 // pred_fallthru
      _
  $region6: #{tpu_custom_call.1} parent=0 // loop_footer
    %s18 = sadd.s32 1, %s14
  $region7: #{tpu_custom_call.1} parent=0 // loop_footer_branch
    %13 = sbr.rel target = $region3
  $region8: #{tpu_custom_call.1} parent=0 // loop_exit
    _

</llo_original>
